<compile_context>
chip_gen: v5e
topology: v5e:2x2
jax: 0.10.0
libtpu: 0.0.40
codegen_flags: <defaults>
</compile_context>

<pallas_src>
import functools

import jax
import jax.numpy as jnp
from jax import lax
from jax.experimental import pallas as pl
from jax.experimental.pallas import tpu as pltpu

F1 = 8          # first conv filters
D = 2           # depth multiplier
F2 = 16         # second stage filters
NUM_CLASSES = 40
BN_EPS = 1e-5


# ---------------------------------------------------------------------------
# Pallas kernel: out = pool_rows( act( (x @ w) * scale + shift ) )
# ---------------------------------------------------------------------------
def _mm_affine_pool_kernel(x_ref, w_ref, scale_ref, shift_ref, o_ref, *,
                           apply_elu, pool):
    # bf16 x bf16 -> f32 accumulation on the MXU.
    acc = jnp.dot(x_ref[...], w_ref[...], preferred_element_type=jnp.float32)
    y = acc * scale_ref[...] + shift_ref[...]
    if apply_elu:
        # ELU(alpha=1): y if y > 0 else exp(y) - 1.  (exp lowers to the EUP;
        # expm1 would be marginally more accurate near 0 but is not required.)
        y = jnp.where(y > 0, y, jnp.exp(jnp.minimum(y, 0.0)) - 1.0)
    if pool > 1:
        # Fused AvgPool over `pool` consecutive rows (consecutive time steps):
        # done as a tiny f32 matmul so it rides on the MXU, no sublane games.
        tm = y.shape[0]
        rows = lax.broadcasted_iota(jnp.int32, (tm // pool, tm), 0)
        cols = lax.broadcasted_iota(jnp.int32, (tm // pool, tm), 1)
        sel = (cols >= rows * pool) & (cols < (rows + 1) * pool)
        pmat = jnp.where(sel, 1.0 / pool, 0.0).astype(jnp.float32)
        y = jnp.dot(pmat, y, preferred_element_type=jnp.float32)
    o_ref[...] = y.astype(o_ref.dtype)


def _choose_tm(M, K, pool):
    """Row-tile size: output rows stay a multiple of 8, one bf16 LHS block stays
    <= ~4 MiB (v7x-safe even double-buffered), and we keep >=2 grid steps when
    M allows so the 'parallel' axis can be sharded across 2 TensorCores."""
    unit = 8 * pool                              # tm//pool must be a multiple of 8
    budget = 4 * 1024 * 1024                     # bytes for one (tm, K) bf16 block
    cap = (budget // (2 * K)) // unit * unit
    tm = min(512, max(unit, cap))
    half = (M // 2) // unit * unit               # aim for >= 2 grid steps
    if half >= unit:
        tm = min(tm, half)
    tm = min(tm, pl.cdiv(M, unit) * unit)        # never tile far past M
    return max(unit, tm)


def matmul_affine_pool(x, w, scale, shift, *, apply_elu=False, pool=1):
    """x:(M,K), w:(K,N) -> (M//pool, N) f32.

    Computes pool_rows(act((x @ w) * scale + shift)); scale/shift per output
    channel; pool averages groups of `pool` consecutive rows (exact fusion of
    the network's AvgPool over the time axis since rows are time-ordered)."""
    x = x.astype(jnp.bfloat16)
    w = w.astype(jnp.bfloat16)
    M, K = x.shape
    Kw, N = w.shape
    assert K == Kw and M % pool == 0 and K % 128 == 0

    tm = _choose_tm(M, K, pool)
    M_pad = pl.cdiv(M, tm) * tm
    if M_pad != M:
        x = jnp.pad(x, ((0, M_pad - M), (0, 0)))   # zero rows; pooled then sliced off

    kernel = functools.partial(_mm_affine_pool_kernel, apply_elu=apply_elu, pool=pool)
    out = pl.pallas_call(
        kernel,
        out_shape=jax.ShapeDtypeStruct((M_pad // pool, N), jnp.float32),
        grid=(M_pad // tm,),
        in_specs=[
            pl.BlockSpec((tm, K), lambda i: (i, 0)),
            pl.BlockSpec((K, N), lambda i: (0, 0)),
            pl.BlockSpec((1, N), lambda i: (0, 0)),
            pl.BlockSpec((1, N), lambda i: (0, 0)),
        ],
        out_specs=pl.BlockSpec((tm // pool, N), lambda i: (i, 0)),
        compiler_params=pltpu.CompilerParams(dimension_semantics=("parallel",)),
    )(x, w, scale.reshape(1, N).astype(jnp.float32),
      shift.reshape(1, N).astype(jnp.float32))
    return out[: M // pool]


# ---------------------------------------------------------------------------
# Parameters (deterministic synthetic init matching the PyTorch module shapes)
# ---------------------------------------------------------------------------
def init_params(key, spatial, temporal):
    ks = iter(jax.random.split(key, 40))

    def nrm(shape, scale=0.1):
        return scale * jax.random.normal(next(ks), shape, dtype=jnp.float32)

    def unif(shape):
        return 0.5 + jax.random.uniform(next(ks), shape, dtype=jnp.float32)

    C2 = D * F1
    p = {}
    # InceptionConv2d(1, F1): kernels (1,255), (1,127), (1,63)
    p["w_inc1"], p["b_inc1"] = nrm((F1, 255)), nrm((F1,), 0.05)
    p["w_inc2"], p["b_inc2"] = nrm((F1, 127)), nrm((F1,), 0.05)
    p["w_inc3"], p["b_inc3"] = nrm((F1, 63)), nrm((F1,), 0.05)
    # BatchNorm2d(F1)
    p["bn1_gamma"], p["bn1_beta"] = 1.0 + nrm((F1,)), nrm((F1,))
    p["bn1_mean"], p["bn1_var"] = nrm((F1,)), unif((F1,))
    # depthwise (spatial,1) conv, groups=F1  -> weight (F1, spatial)
    p["w_dw"], p["b_dw"] = nrm((F1, spatial)), nrm((F1,), 0.05)
    # pointwise conv F1 -> D*F1
    p["w_pw1"], p["b_pw1"] = nrm((C2, F1)), nrm((C2,), 0.05)
    # BatchNorm2d(D*F1)
    p["bn2_gamma"], p["bn2_beta"] = 1.0 + nrm((C2,)), nrm((C2,))
    p["bn2_mean"], p["bn2_var"] = nrm((C2,)), unif((C2,))
    # grouped (1,16) conv, groups=F1 -> weight (D*F1, 2, 16)
    p["w_g"], p["b_g"] = nrm((C2, 2, 16)), nrm((C2,), 0.05)
    # pointwise conv D*F1 -> F2
    p["w_pw2"], p["b_pw2"] = nrm((F2, C2)), nrm((F2,), 0.05)
    # BatchNorm2d(F2)
    p["bn3_gamma"], p["bn3_beta"] = 1.0 + nrm((F2,)), nrm((F2,))
    p["bn3_mean"], p["bn3_var"] = nrm((F2,)), unif((F2,))
    # fc
    p["w_fc"], p["b_fc"] = nrm((NUM_CLASSES, F2 * (temporal // 32))), nrm((NUM_CLASSES,), 0.05)
    return p


# ---------------------------------------------------------------------------
# One-time (inference-constant) weight folding — runs OUTSIDE the jitted forward
# ---------------------------------------------------------------------------
def fold_params(params, spatial):
    S = spatial
    C2 = D * F1
    f32 = jnp.float32

    # superpose the three "same" inception kernels into one centered (1,255) kernel
    wc = params["w_inc1"].astype(f32)
    wc = wc.at[:, 64:64 + 127].add(params["w_inc2"])
    wc = wc.at[:, 96:96 + 63].add(params["w_inc3"])
    bc = params["b_inc1"] + params["b_inc2"] + params["b_inc3"]

    # BN1 folded to a per-F1-channel affine applied to the (bias-free) conv
    s1 = params["bn1_gamma"] / jnp.sqrt(params["bn1_var"] + BN_EPS)
    sh1 = (bc - params["bn1_mean"]) * s1 + params["bn1_beta"]

    # ---- stage A: inception conv -> BN1 -> depthwise(S,1) -> pointwise(F1->C2)
    # Everything is linear, so compose into one (S*256, C2) weight:
    #   W_A[h,k,j] = sum_c w_pw1[j,c] * w_dw[c,h] * s1[c] * wc[c,k]
    wA = jnp.einsum("jc,ch,c,ck->hkj",
                    params["w_pw1"], params["w_dw"], s1, wc)       # (S, 255, C2)
    wA = jnp.pad(wA, ((0, 0), (0, 1), (0, 0)))                     # taps 255 -> 256 (aligned K)
    wA = wA.reshape(S * 256, C2)
    bias_A = (params["w_pw1"] @ (params["w_dw"].sum(axis=1) * sh1 + params["b_dw"])
              + params["b_pw1"])
    s2 = params["bn2_gamma"] / jnp.sqrt(params["bn2_var"] + BN_EPS)
    scale_A = s2
    shift_A = (bias_A - params["bn2_mean"]) * s2 + params["bn2_beta"]

    # ---- stage B: grouped (1,16) conv (groups=F1) -> pointwise(C2->F2), composed
    # Block-diagonal grouped weight Wg[c_in, k, oc] (out-channel oc, group oc//2,
    # input channels 2*(oc//2) and 2*(oc//2)+1), built without Python loops.
    oc = jnp.arange(C2)
    cin = jnp.arange(C2)
    sel0 = (cin[:, None] == (2 * (oc // 2))[None, :]).astype(f32)       # (C2_in, C2_out)
    sel1 = (cin[:, None] == (2 * (oc // 2) + 1)[None, :]).astype(f32)
    wg0 = params["w_g"][:, 0, :].T                                       # (16, C2_out)
    wg1 = params["w_g"][:, 1, :].T
    Wg = sel0[:, None, :] * wg0[None, :, :] + sel1[:, None, :] * wg1[None, :, :]  # (C2,16,C2)
    wB = jnp.einsum("cko,fo->ckf", Wg, params["w_pw2"]).reshape(C2 * 16, F2)
    bias_B = params["w_pw2"] @ params["b_g"] + params["b_pw2"]
    s3 = params["bn3_gamma"] / jnp.sqrt(params["bn3_var"] + BN_EPS)
    scale_B = s3
    shift_B = (bias_B - params["bn3_mean"]) * s3 + params["bn3_beta"]

    return {
        "wA": wA.astype(jnp.bfloat16), "scale_A": scale_A, "shift_A": shift_A,
        "wB": wB.astype(jnp.bfloat16), "scale_B": scale_B, "shift_B": shift_B,
        "w_fc": params["w_fc"], "b_fc": params["b_fc"],
    }


# ---------------------------------------------------------------------------
# Forward pass (2 pallas_calls + a tiny XLA dot)
# ---------------------------------------------------------------------------
def p5_forward(fp, x, *, spatial, temporal):
    # TODO(synk): BatchNorm2d uses eval-mode running statistics and Dropout is
    # identity (eval semantics); train-mode batch stats / dropout randomness
    # are not reproduced.
    B = x.shape[0]
    S, T = spatial, temporal
    C2 = D * F1
    assert x.shape == (B, 1, S, T) and T % 32 == 0

    # ---- stage A: inception + BN1 + depthwise + pointwise + BN2 + ELU + AvgPool(1,4)
    # im2col over (spatial, tap): rows=(b,t), cols=h*256+k; tap 255 has zero weight.
    # TODO(synk): at large B/T this 255x-replicated im2col is HBM-bound; replace with
    # a manual-DMA overlapping-window pipeline (memory_space=pl.ANY) that reads x once.
    x0 = x[:, 0].astype(jnp.bfloat16)                                  # (B, S, T)
    xpad = jnp.pad(x0, ((0, 0), (0, 0), (127, 128)))                   # (B, S, T+255)
    idx = jnp.arange(T)[:, None] + jnp.arange(256)[None, :]
    pmA = xpad[:, :, idx].transpose(0, 2, 1, 3).reshape(B * T, S * 256)
    zA = matmul_affine_pool(pmA, fp["wA"], fp["scale_A"], fp["shift_A"],
                            apply_elu=True, pool=4)                    # (B*T/4, C2)
    # Dropout -> identity (eval)

    # ---- stage B: ZeroPad(8,7) + grouped (1,16) + pointwise + BN3 + ELU + AvgPool(1,8)
    T4 = T // 4
    zA = zA.astype(jnp.bfloat16).reshape(B, T4, C2)
    zp = jnp.pad(zA, ((0, 0), (8, 7), (0, 0)))                         # (B, T4+15, C2)
    idx2 = jnp.arange(T4)[:, None] + jnp.arange(16)[None, :]
    pmB = zp[:, idx2, :].transpose(0, 1, 3, 2).reshape(B * T4, C2 * 16)
    zB = matmul_affine_pool(pmB, fp["wB"], fp["scale_B"], fp["shift_B"],
                            apply_elu=True, pool=8)                    # (B*T/32, F2)
    # Dropout -> identity (eval)

    # ---- flatten (PyTorch NCHW view order: channel-major) + fc (tiny -> plain dot)
    T32 = T4 // 8
    flat = zB.reshape(B, T32, F2).transpose(0, 2, 1).reshape(B, F2 * T32)
    logits = flat @ fp["w_fc"].T + fp["b_fc"]
    return logits, None


# ---------------------------------------------------------------------------
# Pure-JAX f32 reference (direct translation of the PyTorch graph, eval mode)
# ---------------------------------------------------------------------------
def p5_reference(params, x, *, spatial, temporal):
    B = x.shape[0]
    S, T = spatial, temporal
    C2 = D * F1
    x0 = x[:, 0].astype(jnp.float32)

    def conv_same(w, b, k):
        xp = jnp.pad(x0, ((0, 0), (0, 0), (k // 2, k // 2)))
        ix = jnp.arange(T)[:, None] + jnp.arange(k)[None, :]
        return jnp.einsum("bhtk,ck->bcht", xp[:, :, ix], w) + b[None, :, None, None]

    u = (conv_same(params["w_inc1"], params["b_inc1"], 255)
         + conv_same(params["w_inc2"], params["b_inc2"], 127)
         + conv_same(params["w_inc3"], params["b_inc3"], 63))          # (B, F1, S, T)
    s1 = params["bn1_gamma"] / jnp.sqrt(params["bn1_var"] + BN_EPS)
    u = (s1[None, :, None, None] * (u - params["bn1_mean"][None, :, None, None])
         + params["bn1_beta"][None, :, None, None])

    d = jnp.einsum("bcht,ch->bct", u, params["w_dw"]) + params["b_dw"][None, :, None]
    e = jnp.einsum("bct,jc->bjt", d, params["w_pw1"]) + params["b_pw1"][None, :, None]
    s2 = params["bn2_gamma"] / jnp.sqrt(params["bn2_var"] + BN_EPS)
    e = s2[None, :, None] * (e - params["bn2_mean"][None, :, None]) + params["bn2_beta"][None, :, None]
    e = jnp.where(e > 0, e, jnp.expm1(e))
    T4 = T // 4
    z = e.reshape(B, C2, T4, 4).mean(-1)

    zp = jnp.pad(z, ((0, 0), (0, 0), (8, 7)))
    ix2 = jnp.arange(T4)[:, None] + jnp.arange(16)[None, :]
    patches = zp[:, :, ix2]                                            # (B, C2_in, T4, 16)
    oc = jnp.arange(C2)
    y4 = (jnp.einsum("botk,ok->bot", patches[:, 2 * (oc // 2)], params["w_g"][:, 0, :])
          + jnp.einsum("botk,ok->bot", patches[:, 2 * (oc // 2) + 1], params["w_g"][:, 1, :])
          + params["b_g"][None, :, None])
    y5 = jnp.einsum("bct,fc->bft", y4, params["w_pw2"]) + params["b_pw2"][None, :, None]
    s3 = params["bn3_gamma"] / jnp.sqrt(params["bn3_var"] + BN_EPS)
    y5 = s3[None, :, None] * (y5 - params["bn3_mean"][None, :, None]) + params["bn3_beta"][None, :, None]
    y5 = jnp.where(y5 > 0, y5, jnp.expm1(y5))
    T32 = T4 // 8
    w_ = y5.reshape(B, F2, T32, 8).mean(-1)
    flat = w_.reshape(B, F2 * T32)
    return flat @ params["w_fc"].T + params["b_fc"]


if __name__ == "__main__":
    B, SPATIAL, TEMPORAL = 2, 16, 128   # small shapes; temporal % 32 == 0
    key = jax.random.PRNGKey(0)
    pkey, xkey = jax.random.split(key)
    params = init_params(pkey, SPATIAL, TEMPORAL)
    x = jax.random.normal(xkey, (B, 1, SPATIAL, TEMPORAL), dtype=jnp.float32)

    folded = fold_params(params, SPATIAL)   # inference-constant folding, once
    fwd = jax.jit(functools.partial(p5_forward, spatial=SPATIAL, temporal=TEMPORAL))
    logits, aux = fwd(folded, x)
    jax.block_until_ready(logits)
    assert logits.shape == (B, NUM_CLASSES) and aux is None
    assert bool(jnp.all(jnp.isfinite(logits)))

    # cross-check the fused bf16 Pallas path against the plain-JAX f32 reference
    ref = jax.jit(functools.partial(p5_reference, spatial=SPATIAL, temporal=TEMPORAL))(params, x)
    err = float(jnp.max(jnp.abs(logits - ref)))
    assert err < 5e-2, f"mismatch vs reference: {err}"
    print("KERNEL_OK")
</pallas_src>

<mosaic_0001>
module attributes {stable_mosaic.version = 11 : i64} {
  func.func @_mm_affine_pool_kernel(%arg0: i32, %arg1: memref<128x4096xbf16, #tpu.memory_space<vmem>>, %arg2: memref<4096x16xbf16, #tpu.memory_space<vmem>>, %arg3: memref<1x16xf32, #tpu.memory_space<vmem>>, %arg4: memref<1x16xf32, #tpu.memory_space<vmem>>, %arg5: memref<32x16xf32, #tpu.memory_space<vmem>>) attributes {dimension_semantics = [#tpu.dimension_semantics<parallel>], iteration_bounds = array<i64: 2>, scalar_prefetch = 0 : i64, scratch_operands = 0 : i64, tpu.core_type = #tpu.core_type<tc>, window_params = [{transform_indices = @transform_0, window_bounds = array<i64: 128, 4096>}, {pipeline_mode = #tpu.pipeline_mode<synchronous>, transform_indices = @transform_1, window_bounds = array<i64: 4096, 16>}, {pipeline_mode = #tpu.pipeline_mode<synchronous>, transform_indices = @transform_2, window_bounds = array<i64: 1, 16>}, {pipeline_mode = #tpu.pipeline_mode<synchronous>, transform_indices = @transform_3, window_bounds = array<i64: 1, 16>}, {transform_indices = @transform_4, window_bounds = array<i64: 32, 16>}]} {
    %c0 = arith.constant 0 : index
    %c0_0 = arith.constant 0 : index
    %0 = vector.load %arg1[%c0, %c0_0] : memref<128x4096xbf16, #tpu.memory_space<vmem>>, vector<128x4096xbf16>
    %c0_1 = arith.constant 0 : index
    %c0_2 = arith.constant 0 : index
    %1 = vector.load %arg2[%c0_1, %c0_2] : memref<4096x16xbf16, #tpu.memory_space<vmem>>, vector<4096x16xbf16>
    %cst = arith.constant dense<0.000000e+00> : vector<128x16xf32>
    %2 = tpu.matmul %0, %1, %cst {dimension_numbers = #tpu.dot_dimension_numbers<[1], [0], [0], [1], [0, 0, 1, 1], [], []>} : vector<128x4096xbf16>, vector<4096x16xbf16>, vector<128x16xf32> -> vector<128x16xf32>
    %c0_3 = arith.constant 0 : index
    %c0_4 = arith.constant 0 : index
    %3 = vector.load %arg3[%c0_3, %c0_4] : memref<1x16xf32, #tpu.memory_space<vmem>>, vector<1x16xf32>
    %4 = vector.broadcast %3 : vector<1x16xf32> to vector<128x16xf32>
    %5 = arith.mulf %2, %4 : vector<128x16xf32>
    %c0_5 = arith.constant 0 : index
    %c0_6 = arith.constant 0 : index
    %6 = vector.load %arg4[%c0_5, %c0_6] : memref<1x16xf32, #tpu.memory_space<vmem>>, vector<1x16xf32>
    %7 = vector.broadcast %6 : vector<1x16xf32> to vector<128x16xf32>
    %8 = arith.addf %5, %7 : vector<128x16xf32>
    %cst_7 = arith.constant 0.000000e+00 : f32
    %9 = vector.broadcast %cst_7 : f32 to vector<128x16xf32>
    %10 = arith.cmpf ogt, %8, %9 : vector<128x16xf32>
    %cst_8 = arith.constant 0.000000e+00 : f32
    %11 = vector.broadcast %cst_8 : f32 to vector<128x16xf32>
    %12 = arith.minimumf %8, %11 : vector<128x16xf32>
    %13 = math.exp %12 : vector<128x16xf32>
    %cst_9 = arith.constant 1.000000e+00 : f32
    %14 = vector.broadcast %cst_9 : f32 to vector<128x16xf32>
    %15 = arith.subf %13, %14 : vector<128x16xf32>
    %16 = arith.select %10, %8, %15 : vector<128x16xi1>, vector<128x16xf32>
    %17 = tpu.iota {dimensions = array<i32: 0>} : vector<32x128xi32>
    %18 = tpu.iota {dimensions = array<i32: 1>} : vector<32x128xi32>
    %c4_i32 = arith.constant 4 : i32
    %19 = vector.broadcast %c4_i32 : i32 to vector<32x128xi32>
    %20 = arith.muli %17, %19 : vector<32x128xi32>
    %21 = arith.cmpi sge, %18, %20 : vector<32x128xi32>
    %c1_i32 = arith.constant 1 : i32
    %22 = vector.broadcast %c1_i32 : i32 to vector<32x128xi32>
    %23 = arith.addi %17, %22 : vector<32x128xi32>
    %c4_i32_10 = arith.constant 4 : i32
    %24 = vector.broadcast %c4_i32_10 : i32 to vector<32x128xi32>
    %25 = arith.muli %23, %24 : vector<32x128xi32>
    %26 = arith.cmpi slt, %18, %25 : vector<32x128xi32>
    %27 = arith.andi %21, %26 : vector<32x128xi1>
    %cst_11 = arith.constant 2.500000e-01 : f32
    %cst_12 = arith.constant 0.000000e+00 : f32
    %28 = vector.broadcast %cst_11 : f32 to vector<32x128xf32>
    %29 = vector.broadcast %cst_12 : f32 to vector<32x128xf32>
    %30 = arith.select %27, %28, %29 : vector<32x128xi1>, vector<32x128xf32>
    %cst_13 = arith.constant dense<0.000000e+00> : vector<32x16xf32>
    %31 = tpu.matmul %30, %16, %cst_13 {dimension_numbers = #tpu.dot_dimension_numbers<[1], [0], [0], [1], [0, 0, 1, 1], [], []>} : vector<32x128xf32>, vector<128x16xf32>, vector<32x16xf32> -> vector<32x16xf32>
    %c0_14 = arith.constant 0 : index
    %c0_15 = arith.constant 0 : index
    %32 = vector.load %arg5[%c0_14, %c0_15] : memref<32x16xf32, #tpu.memory_space<vmem>>, vector<32x16xf32>
    tpu.vector_store %arg5[%c0_14, %c0_15], %31 {strides = array<i32>} : memref<32x16xf32, #tpu.memory_space<vmem>>, vector<32x16xf32>,
    return
  }
  func.func @transform_0(%arg0: i32) -> (i32, i32) {
    %c0_i32 = arith.constant 0 : i32
    %c0_i32_0 = arith.constant 0 : i32
    return %arg0, %c0_i32 : i32, i32
  }
  func.func @transform_1(%arg0: i32) -> (i32, i32) {
    %c0_i32 = arith.constant 0 : i32
    %c0_i32_0 = arith.constant 0 : i32
    %c0_i32_1 = arith.constant 0 : i32
    return %c0_i32, %c0_i32_0 : i32, i32
  }
  func.func @transform_2(%arg0: i32) -> (i32, i32) {
    %c0_i32 = arith.constant 0 : i32
    %c0_i32_0 = arith.constant 0 : i32
    %c0_i32_1 = arith.constant 0 : i32
    return %c0_i32, %c0_i32_0 : i32, i32
  }
  func.func @transform_3(%arg0: i32) -> (i32, i32) {
    %c0_i32 = arith.constant 0 : i32
    %c0_i32_0 = arith.constant 0 : i32
    %c0_i32_1 = arith.constant 0 : i32
    return %c0_i32, %c0_i32_0 : i32, i32
  }
  func.func @transform_4(%arg0: i32) -> (i32, i32) {
    %c0_i32 = arith.constant 0 : i32
    %c0_i32_0 = arith.constant 0 : i32
    return %arg0, %c0_i32 : i32, i32
  }
}

module attributes {stable_mosaic.version = 11 : i64} {
  func.func @_mm_affine_pool_kernel(%arg0: i32, %arg1: memref<64x256xbf16, #tpu.memory_space<vmem>>, %arg2: memref<256x16xbf16, #tpu.memory_space<vmem>>, %arg3: memref<1x16xf32, #tpu.memory_space<vmem>>, %arg4: memref<1x16xf32, #tpu.memory_space<vmem>>, %arg5: memref<8x16xf32, #tpu.memory_space<vmem>>) attributes {dimension_semantics = [#tpu.dimension_semantics<parallel>], iteration_bounds = array<i64: 1>, scalar_prefetch = 0 : i64, scratch_operands = 0 : i64, tpu.core_type = #tpu.core_type<tc>, window_params = [{transform_indices = @transform_0, window_bounds = array<i64: 64, 256>}, {pipeline_mode = #tpu.pipeline_mode<synchronous>, transform_indices = @transform_1, window_bounds = array<i64: 256, 16>}, {pipeline_mode = #tpu.pipeline_mode<synchronous>, transform_indices = @transform_2, window_bounds = array<i64: 1, 16>}, {pipeline_mode = #tpu.pipeline_mode<synchronous>, transform_indices = @transform_3, window_bounds = array<i64: 1, 16>}, {transform_indices = @transform_4, window_bounds = array<i64: 8, 16>}]} {
    %c0 = arith.constant 0 : index
    %c0_0 = arith.constant 0 : index
    %0 = vector.load %arg1[%c0, %c0_0] : memref<64x256xbf16, #tpu.memory_space<vmem>>, vector<64x256xbf16>
    %c0_1 = arith.constant 0 : index
    %c0_2 = arith.constant 0 : index
    %1 = vector.load %arg2[%c0_1, %c0_2] : memref<256x16xbf16, #tpu.memory_space<vmem>>, vector<256x16xbf16>
    %cst = arith.constant dense<0.000000e+00> : vector<64x16xf32>
    %2 = tpu.matmul %0, %1, %cst {dimension_numbers = #tpu.dot_dimension_numbers<[1], [0], [0], [1], [0, 0, 1, 1], [], []>} : vector<64x256xbf16>, vector<256x16xbf16>, vector<64x16xf32> -> vector<64x16xf32>
    %c0_3 = arith.constant 0 : index
    %c0_4 = arith.constant 0 : index
    %3 = vector.load %arg3[%c0_3, %c0_4] : memref<1x16xf32, #tpu.memory_space<vmem>>, vector<1x16xf32>
    %4 = vector.broadcast %3 : vector<1x16xf32> to vector<64x16xf32>
    %5 = arith.mulf %2, %4 : vector<64x16xf32>
    %c0_5 = arith.constant 0 : index
    %c0_6 = arith.constant 0 : index
    %6 = vector.load %arg4[%c0_5, %c0_6] : memref<1x16xf32, #tpu.memory_space<vmem>>, vector<1x16xf32>
    %7 = vector.broadcast %6 : vector<1x16xf32> to vector<64x16xf32>
    %8 = arith.addf %5, %7 : vector<64x16xf32>
    %cst_7 = arith.constant 0.000000e+00 : f32
    %9 = vector.broadcast %cst_7 : f32 to vector<64x16xf32>
    %10 = arith.cmpf ogt, %8, %9 : vector<64x16xf32>
    %cst_8 = arith.constant 0.000000e+00 : f32
    %11 = vector.broadcast %cst_8 : f32 to vector<64x16xf32>
    %12 = arith.minimumf %8, %11 : vector<64x16xf32>
    %13 = math.exp %12 : vector<64x16xf32>
    %cst_9 = arith.constant 1.000000e+00 : f32
    %14 = vector.broadcast %cst_9 : f32 to vector<64x16xf32>
    %15 = arith.subf %13, %14 : vector<64x16xf32>
    %16 = arith.select %10, %8, %15 : vector<64x16xi1>, vector<64x16xf32>
    %17 = tpu.iota {dimensions = array<i32: 0>} : vector<8x64xi32>
    %18 = tpu.iota {dimensions = array<i32: 1>} : vector<8x64xi32>
    %c8_i32 = arith.constant 8 : i32
    %19 = vector.broadcast %c8_i32 : i32 to vector<8x64xi32>
    %20 = arith.muli %17, %19 : vector<8x64xi32>
    %21 = arith.cmpi sge, %18, %20 : vector<8x64xi32>
    %c1_i32 = arith.constant 1 : i32
    %22 = vector.broadcast %c1_i32 : i32 to vector<8x64xi32>
    %23 = arith.addi %17, %22 : vector<8x64xi32>
    %c8_i32_10 = arith.constant 8 : i32
    %24 = vector.broadcast %c8_i32_10 : i32 to vector<8x64xi32>
    %25 = arith.muli %23, %24 : vector<8x64xi32>
    %26 = arith.cmpi slt, %18, %25 : vector<8x64xi32>
    %27 = arith.andi %21, %26 : vector<8x64xi1>
    %cst_11 = arith.constant 1.250000e-01 : f32
    %cst_12 = arith.constant 0.000000e+00 : f32
    %28 = vector.broadcast %cst_11 : f32 to vector<8x64xf32>
    %29 = vector.broadcast %cst_12 : f32 to vector<8x64xf32>
    %30 = arith.select %27, %28, %29 : vector<8x64xi1>, vector<8x64xf32>
    %cst_13 = arith.constant dense<0.000000e+00> : vector<8x16xf32>
    %31 = tpu.matmul %30, %16, %cst_13 {dimension_numbers = #tpu.dot_dimension_numbers<[1], [0], [0], [1], [0, 0, 1, 1], [], []>} : vector<8x64xf32>, vector<64x16xf32>, vector<8x16xf32> -> vector<8x16xf32>
    %c0_14 = arith.constant 0 : index
    %c0_15 = arith.constant 0 : index
    %32 = vector.load %arg5[%c0_14, %c0_15] : memref<8x16xf32, #tpu.memory_space<vmem>>, vector<8x16xf32>
    tpu.vector_store %arg5[%c0_14, %c0_15], %31 {strides = array<i32>} : memref<8x16xf32, #tpu.memory_space<vmem>>, vector<8x16xf32>,
    return
  }
  func.func @transform_0(%arg0: i32) -> (i32, i32) {
    %c0_i32 = arith.constant 0 : i32
    %c0_i32_0 = arith.constant 0 : i32
    return %arg0, %c0_i32 : i32, i32
  }
  func.func @transform_1(%arg0: i32) -> (i32, i32) {
    %c0_i32 = arith.constant 0 : i32
    %c0_i32_0 = arith.constant 0 : i32
    %c0_i32_1 = arith.constant 0 : i32
    return %c0_i32, %c0_i32_0 : i32, i32
  }
  func.func @transform_2(%arg0: i32) -> (i32, i32) {
    %c0_i32 = arith.constant 0 : i32
    %c0_i32_0 = arith.constant 0 : i32
    %c0_i32_1 = arith.constant 0 : i32
    return %c0_i32, %c0_i32_0 : i32, i32
  }
  func.func @transform_3(%arg0: i32) -> (i32, i32) {
    %c0_i32 = arith.constant 0 : i32
    %c0_i32_0 = arith.constant 0 : i32
    %c0_i32_1 = arith.constant 0 : i32
    return %c0_i32, %c0_i32_0 : i32, i32
  }
  func.func @transform_4(%arg0: i32) -> (i32, i32) {
    %c0_i32 = arith.constant 0 : i32
    %c0_i32_0 = arith.constant 0 : i32
    return %arg0, %c0_i32 : i32, i32
  }
}

</mosaic_0001>

<llo_original>
// kernel: p5_forward.2
$region0: #{p5_forward.2}
  #allocation0 [shape = 'u32[]', space=smem, size = 0x4, offset = 0x4, fixed_abs, tag = 'smem constant byte address 0x4 - core index']
  #allocation1 [shape = 'u32[72,128]{1,0:T(1,128)}', space=vmem, size = 0x9000, scoped, tag = 'internal scratch']
  %s0 = inlined_call_operand.vmem [shape: bf16[256,4096], index: 0, kind: input, shape index: {}]
  %s1 = inlined_call_operand.vmem [shape: bf16[4096,16], index: 1, kind: input, shape index: {}]
  %s2 = inlined_call_operand.vmem [shape: f32[1,16], index: 2, kind: input, shape index: {}]
  %s3 = inlined_call_operand.vmem [shape: f32[1,16], index: 3, kind: input, shape index: {}]
  %s4 = inlined_call_operand.vmem [shape: f32[64,16], index: 4, kind: output, shape index: {}]
  %s5 = sld [smem:[#allocation0]]
  $region49: #{p5_forward.2} parent=0
    _
  %s7 = ssub.s32 1, %s5
  %s8 = scalar_select 0, %s7, %s5
  loop: start=0, step=1, limit=4
  $region2: #{p5_forward.2} parent=0 // loop_pre_header
    _
  $region3: #{p5_forward.2} parent=0 // loop_header
    %s10 = sphi 0, %s14
    %p11 = scmp.ge.s32.totalorder %s10, 4
    %s20 = sphi 0, %s22
    %s23 = sphi 0, %s20
    %s24 = sphi 0, %s23
    %s40 = sphi 0, %s24
    %s44 = sphi 0, %s44
    %s46 = sphi 0, %s44
    %s47 = sphi 0, %s46
    %s61 = sphi 0, %s47
    %s65 = sphi 0, %s65
    %s67 = sphi 0, %s65
    %s68 = sphi 0, %s67
    %s82 = sphi 0, %s68
    %s86 = sphi 0, %s86
    %s88 = sphi 0, %s86
    %s89 = sphi 0, %s88
    %s103 = sphi 0, %s89
    %s109 = sphi 0, %s111
    %s112 = sphi 0, %s109
    %s113 = sphi 0, %s112
    %s129 = sphi 0, %s113
  $region4: #{p5_forward.2} parent=0 // loop_header_branch
    %13 = sbr.rel (%p11) target = $region8
  $region5: #{p5_forward.2} parent=0 // loop_body
    %s15 = ssub.s32 %s10, 1
    %s16 = ssub.s32 %s10, 2
    %s17 = sadd.s32 %s10, 1
    %s18 = ssub.s32 %s10, %s17
    %p19 = scmp.eq.s32.totalorder %s18, 0
    %s21 = sadd.s32 %s20, 1
    %s22 = scalar_select %p19, %s20, %s21
    %p25 = pneg %p19
    %p26 = scmp.eq.s32.totalorder %s10, 1
    %p27 = por %p25, %p26
    %p28 = scmp.ne.s32.totalorder %s20, %s23
    %p29 = scmp.eq.s32.totalorder %s10, 0
    %p30 = por %p28, %p29
    %p31 = scmp.ne.s32.totalorder %s20, %s23
    %p32 = scmp.eq.s32.totalorder %s15, 1
    %p33 = por %p31, %p32
    %p34 = scmp.ne.s32.totalorder %s23, %s24
    %p35 = scmp.eq.s32.totalorder %s15, 0
    %p36 = por %p34, %p35
    %p37 = scmp.ne.s32.totalorder %s23, %s24
    %p38 = scmp.eq.s32.totalorder %s16, 1
    %p39 = por %p37, %p38
    %p41 = scmp.ne.s32.totalorder %s24, %s40
    %p42 = scmp.eq.s32.totalorder %s16, 0
    %p43 = por %p41, %p42
    %s45 = sadd.s32 %s44, 1
    %p48 = scmp.eq.s32.totalorder %s10, 1
    %p49 = scmp.ne.s32.totalorder %s44, %s46
    %p50 = scmp.eq.s32.totalorder %s10, 0
    %p51 = por %p49, %p50
    %p52 = scmp.ne.s32.totalorder %s44, %s46
    %p53 = scmp.eq.s32.totalorder %s15, 1
    %p54 = por %p52, %p53
    %p55 = scmp.ne.s32.totalorder %s46, %s47
    %p56 = scmp.eq.s32.totalorder %s15, 0
    %p57 = por %p55, %p56
    %p58 = scmp.ne.s32.totalorder %s46, %s47
    %p59 = scmp.eq.s32.totalorder %s16, 1
    %p60 = por %p58, %p59
    %p62 = scmp.ne.s32.totalorder %s47, %s61
    %p63 = scmp.eq.s32.totalorder %s16, 0
    %p64 = por %p62, %p63
    %s66 = sadd.s32 %s65, 1
    %p69 = scmp.eq.s32.totalorder %s10, 1
    %p70 = scmp.ne.s32.totalorder %s65, %s67
    %p71 = scmp.eq.s32.totalorder %s10, 0
    %p72 = por %p70, %p71
    %p73 = scmp.ne.s32.totalorder %s65, %s67
    %p74 = scmp.eq.s32.totalorder %s15, 1
    %p75 = por %p73, %p74
    %p76 = scmp.ne.s32.totalorder %s67, %s68
    %p77 = scmp.eq.s32.totalorder %s15, 0
    %p78 = por %p76, %p77
    %p79 = scmp.ne.s32.totalorder %s67, %s68
    %p80 = scmp.eq.s32.totalorder %s16, 1
    %p81 = por %p79, %p80
    %p83 = scmp.ne.s32.totalorder %s68, %s82
    %p84 = scmp.eq.s32.totalorder %s16, 0
    %p85 = por %p83, %p84
    %s87 = sadd.s32 %s86, 1
    %p90 = scmp.eq.s32.totalorder %s10, 1
    %p91 = scmp.ne.s32.totalorder %s86, %s88
    %p92 = scmp.eq.s32.totalorder %s10, 0
    %p93 = por %p91, %p92
    %p94 = scmp.ne.s32.totalorder %s86, %s88
    %p95 = scmp.eq.s32.totalorder %s15, 1
    %p96 = por %p94, %p95
    %p97 = scmp.ne.s32.totalorder %s88, %s89
    %p98 = scmp.eq.s32.totalorder %s15, 0
    %p99 = por %p97, %p98
    %p100 = scmp.ne.s32.totalorder %s88, %s89
    %p101 = scmp.eq.s32.totalorder %s16, 1
    %p102 = por %p100, %p101
    %p104 = scmp.ne.s32.totalorder %s89, %s103
    %p105 = scmp.eq.s32.totalorder %s16, 0
    %p106 = por %p104, %p105
    %s107 = ssub.s32 %s10, %s17
    %p108 = scmp.eq.s32.totalorder %s107, 0
    %s110 = sadd.s32 %s109, 1
    %s111 = scalar_select %p108, %s109, %s110
    %p114 = pneg %p108
    %p115 = scmp.eq.s32.totalorder %s10, 1
    %p116 = por %p114, %p115
    %p117 = scmp.ne.s32.totalorder %s109, %s112
    %p118 = scmp.eq.s32.totalorder %s10, 0
    %p119 = por %p117, %p118
    %p120 = scmp.ne.s32.totalorder %s109, %s112
    %p121 = scmp.eq.s32.totalorder %s15, 1
    %p122 = por %p120, %p121
    %p123 = scmp.ne.s32.totalorder %s112, %s113
    %p124 = scmp.eq.s32.totalorder %s15, 0
    %p125 = por %p123, %p124
    %p126 = scmp.ne.s32.totalorder %s112, %s113
    %p127 = scmp.eq.s32.totalorder %s16, 1
    %p128 = por %p126, %p127
    %p130 = scmp.ne.s32.totalorder %s113, %s129
    %p131 = scmp.eq.s32.totalorder %s16, 0
    %p132 = por %p130, %p131
    %p133 = scmp.le.s32.totalorder 1, %s10
    %p134 = scmp.lt.s32.totalorder %s10, 3
    %p135 = pnand %p133, %p134
    %p136 = pneg %p135
    // Predicated region
    $region9: #{p5_forward.2} parent=5 // pred_check
      _
    $region10: #{p5_forward.2} parent=5 // pred_check_branch
      %138 = sbr.rel (%p135) target = $region12
    $region11: #{p5_forward.2} parent=5 // pred_region
      %s139 = ssub.s32 %s10, 1
      // Predicated region
      $region13: #{p5_forward.2} parent=11 // pred_check
        %p140 = pneg %p57
      $region14: #{p5_forward.2} parent=11 // pred_check_branch
        %142 = sbr.rel (%p140) target = $region16
      $region15: #{p5_forward.2} parent=11 // pred_region
        _
      $region16: #{p5_forward.2} parent=11 // pred_fallthru
        _
      // Predicated region
      $region17: #{p5_forward.2} parent=11 // pred_check
        %p143 = pneg %p78
      $region18: #{p5_forward.2} parent=11 // pred_check_branch
        %145 = sbr.rel (%p143) target = $region20
      $region19: #{p5_forward.2} parent=11 // pred_region
        _
      $region20: #{p5_forward.2} parent=11 // pred_fallthru
        _
      // Predicated region
      $region21: #{p5_forward.2} parent=11 // pred_check
        %p146 = pneg %p99
      $region22: #{p5_forward.2} parent=11 // pred_check_branch
        %148 = sbr.rel (%p146) target = $region24
      $region23: #{p5_forward.2} parent=11 // pred_region
        _
      $region24: #{p5_forward.2} parent=11 // pred_fallthru
        _
    $region12: #{p5_forward.2} parent=5 // pred_fallthru
      _
    %p149 = scmp.lt.s32.totalorder %s10, 2
    // Predicated region
    $region25: #{p5_forward.2} parent=5 // pred_check
      %p150 = pneg %p149
    $region26: #{p5_forward.2} parent=5 // pred_check_branch
      %152 = sbr.rel (%p150) target = $region28
    $region27: #{p5_forward.2} parent=5 // pred_region
      // Predicated region
      $region29: #{p5_forward.2} parent=27 // pred_check
        %p153 = pneg %p30
      $region30: #{p5_forward.2} parent=27 // pred_check_branch
        %155 = sbr.rel (%p153) target = $region32
      $region31: #{p5_forward.2} parent=27 // pred_region
        %s156 = smul.u32 16, %s10
        %p157 = scmp.lt.s32.totalorder %s156, 31
        %s158 = scalar_select %p157, %s156, 31
        %s159 = smul.addr %s158, 32
        %s160 = smul.addr %s159, 4
        %s161 = scalar_lea.vmem %s0, %s160
        %s162 = smul.u32 16, %s10
      $region32: #{p5_forward.2} parent=27 // pred_fallthru
        _
    $region28: #{p5_forward.2} parent=5 // pred_fallthru
      _
    %p163 = scmp.le.s32.totalorder 1, %s10
    %p164 = scmp.lt.s32.totalorder %s10, 3
    %p165 = pnand %p163, %p164
    %p166 = pneg %p165
    // Predicated region
    $region33: #{p5_forward.2} parent=5 // pred_check
      _
    $region34: #{p5_forward.2} parent=5 // pred_check_branch
      %168 = sbr.rel (%p165) target = $region36
    $region35: #{p5_forward.2} parent=5 // pred_region
      %s169 = ssub.s32 %s10, 1
      %s170 = smul.u32 16, %s15
      %p171 = scmp.lt.s32.totalorder %s170, 31
      %s172 = scalar_select %p171, %s170, 31
      %s173 = smul.addr %s172, 32
      %s174 = smul.addr %s173, 4
      %s175 = scalar_lea.vmem %s0, %s174
      %p176 = pneg %p36
      %p177 = pneg %p33
      %p178 = pneg %p57
      %p179 = pneg %p54
      %p180 = pneg %p78
      %p181 = pneg %p75
      %p182 = pneg %p99
      %p183 = pneg %p96
      %p184 = pneg %p125
      %p185 = pneg %p122
      %s186 = smul.u32 4, %s15
      %p187 = scmp.lt.s32.totalorder %s186, 7
      %s188 = scalar_select %p187, %s186, 7
      %s189 = smul.addr %s188, 8
      %s190 = scalar_lea.vmem %s4, %s189
      %s191 = smul.u32 16, %s15
      %p192 = scmp.lt.s32.totalorder %s191, 31
      %s193 = scalar_select %p192, %s191, 31
      %s194 = smul.addr %s193, 32
      %s195 = smul.addr %s194, 4
      %s196 = scalar_lea.vmem %s0, %s195
      %s197 = smul.u32 16, %s15
      %s198 = smul.u32 4, %s15
      %p199 = scmp.lt.s32.totalorder %s198, 7
      %s200 = scalar_select %p199, %s198, 7
      %s201 = smul.addr %s200, 8
      %s202 = scalar_lea.vmem %s4, %s201
      %s203 = smul.u32 4, %s15
      %v204 = vld [vmem:[%s196] sm:$0xff]
      %v205 = vld [vmem:[%s196 + $0x8] sm:$0xff]
      %v206 = vld [vmem:[%s196 + $0x10] sm:$0xff]
      %v207 = vld [vmem:[%s196 + $0x18] sm:$0xff]
      %v208 = vld [vmem:[%s196 + $0x20] sm:$0xff]
      %v209 = vld [vmem:[%s196 + $0x28] sm:$0xff]
      %v210 = vld [vmem:[%s196 + $0x30] sm:$0xff]
      %v211 = vld [vmem:[%s196 + $0x38] sm:$0xff]
      %v212 = vld [vmem:[%s196 + $0x40] sm:$0xff]
      %v213 = vld [vmem:[%s196 + $0x48] sm:$0xff]
      %v214 = vld [vmem:[%s196 + $0x50] sm:$0xff]
      %v215 = vld [vmem:[%s196 + $0x58] sm:$0xff]
      %v216 = vld [vmem:[%s196 + $0x60] sm:$0xff]
      %v217 = vld [vmem:[%s196 + $0x68] sm:$0xff]
      %v218 = vld [vmem:[%s196 + $0x70] sm:$0xff]
      %v219 = vld [vmem:[%s196 + $0x78] sm:$0xff]
      %v220 = vld [vmem:[%s196 + $0x80] sm:$0xff]
      %v221 = vld [vmem:[%s196 + $0x88] sm:$0xff]
      %v222 = vld [vmem:[%s196 + $0x90] sm:$0xff]
      %v223 = vld [vmem:[%s196 + $0x98] sm:$0xff]
      %v224 = vld [vmem:[%s196 + $0xa0] sm:$0xff]
      %v225 = vld [vmem:[%s196 + $0xa8] sm:$0xff]
      %v226 = vld [vmem:[%s196 + $0xb0] sm:$0xff]
      %v227 = vld [vmem:[%s196 + $0xb8] sm:$0xff]
      %v228 = vld [vmem:[%s196 + $0xc0] sm:$0xff]
      %v229 = vld [vmem:[%s196 + $0xc8] sm:$0xff]
      %v230 = vld [vmem:[%s196 + $0xd0] sm:$0xff]
      %v231 = vld [vmem:[%s196 + $0xd8] sm:$0xff]
      %v232 = vld [vmem:[%s196 + $0xe0] sm:$0xff]
      %v233 = vld [vmem:[%s196 + $0xe8] sm:$0xff]
      %v234 = vld [vmem:[%s196 + $0xf0] sm:$0xff]
      %v235 = vld [vmem:[%s196 + $0xf8] sm:$0xff]
      %v236 = vld [vmem:[%s196 + $0x100] sm:$0xff]
      %v237 = vld [vmem:[%s196 + $0x108] sm:$0xff]
      %v238 = vld [vmem:[%s196 + $0x110] sm:$0xff]
      %v239 = vld [vmem:[%s196 + $0x118] sm:$0xff]
      %v240 = vld [vmem:[%s196 + $0x120] sm:$0xff]
      %v241 = vld [vmem:[%s196 + $0x128] sm:$0xff]
      %v242 = vld [vmem:[%s196 + $0x130] sm:$0xff]
      %v243 = vld [vmem:[%s196 + $0x138] sm:$0xff]
      %v244 = vld [vmem:[%s196 + $0x140] sm:$0xff]
      %v245 = vld [vmem:[%s196 + $0x148] sm:$0xff]
      %v246 = vld [vmem:[%s196 + $0x150] sm:$0xff]
      %v247 = vld [vmem:[%s196 + $0x158] sm:$0xff]
      %v248 = vld [vmem:[%s196 + $0x160] sm:$0xff]
      %v249 = vld [vmem:[%s196 + $0x168] sm:$0xff]
      %v250 = vld [vmem:[%s196 + $0x170] sm:$0xff]
      %v251 = vld [vmem:[%s196 + $0x178] sm:$0xff]
      %v252 = vld [vmem:[%s196 + $0x180] sm:$0xff]
      %v253 = vld [vmem:[%s196 + $0x188] sm:$0xff]
      %v254 = vld [vmem:[%s196 + $0x190] sm:$0xff]
      %v255 = vld [vmem:[%s196 + $0x198] sm:$0xff]
      %v256 = vld [vmem:[%s196 + $0x1a0] sm:$0xff]
      %v257 = vld [vmem:[%s196 + $0x1a8] sm:$0xff]
      %v258 = vld [vmem:[%s196 + $0x1b0] sm:$0xff]
      %v259 = vld [vmem:[%s196 + $0x1b8] sm:$0xff]
      %v260 = vld [vmem:[%s196 + $0x1c0] sm:$0xff]
      %v261 = vld [vmem:[%s196 + $0x1c8] sm:$0xff]
      %v262 = vld [vmem:[%s196 + $0x1d0] sm:$0xff]
      %v263 = vld [vmem:[%s196 + $0x1d8] sm:$0xff]
      %v264 = vld [vmem:[%s196 + $0x1e0] sm:$0xff]
      %v265 = vld [vmem:[%s196 + $0x1e8] sm:$0xff]
      %v266 = vld [vmem:[%s196 + $0x1f0] sm:$0xff]
      %v267 = vld [vmem:[%s196 + $0x1f8] sm:$0xff]
      %v268 = vld [vmem:[%s196 + $0x200] sm:$0xff]
      %v269 = vld [vmem:[%s196 + $0x208] sm:$0xff]
      %v270 = vld [vmem:[%s196 + $0x210] sm:$0xff]
      %v271 = vld [vmem:[%s196 + $0x218] sm:$0xff]
      %v272 = vld [vmem:[%s196 + $0x220] sm:$0xff]
      %v273 = vld [vmem:[%s196 + $0x228] sm:$0xff]
      %v274 = vld [vmem:[%s196 + $0x230] sm:$0xff]
      %v275 = vld [vmem:[%s196 + $0x238] sm:$0xff]
      %v276 = vld [vmem:[%s196 + $0x240] sm:$0xff]
      %v277 = vld [vmem:[%s196 + $0x248] sm:$0xff]
      %v278 = vld [vmem:[%s196 + $0x250] sm:$0xff]
      %v279 = vld [vmem:[%s196 + $0x258] sm:$0xff]
      %v280 = vld [vmem:[%s196 + $0x260] sm:$0xff]
      %v281 = vld [vmem:[%s196 + $0x268] sm:$0xff]
      %v282 = vld [vmem:[%s196 + $0x270] sm:$0xff]
      %v283 = vld [vmem:[%s196 + $0x278] sm:$0xff]
      %v284 = vld [vmem:[%s196 + $0x280] sm:$0xff]
      %v285 = vld [vmem:[%s196 + $0x288] sm:$0xff]
      %v286 = vld [vmem:[%s196 + $0x290] sm:$0xff]
      %v287 = vld [vmem:[%s196 + $0x298] sm:$0xff]
      %v288 = vld [vmem:[%s196 + $0x2a0] sm:$0xff]
      %v289 = vld [vmem:[%s196 + $0x2a8] sm:$0xff]
      %v290 = vld [vmem:[%s196 + $0x2b0] sm:$0xff]
      %v291 = vld [vmem:[%s196 + $0x2b8] sm:$0xff]
      %v292 = vld [vmem:[%s196 + $0x2c0] sm:$0xff]
      %v293 = vld [vmem:[%s196 + $0x2c8] sm:$0xff]
      %v294 = vld [vmem:[%s196 + $0x2d0] sm:$0xff]
      %v295 = vld [vmem:[%s196 + $0x2d8] sm:$0xff]
      %v296 = vld [vmem:[%s196 + $0x2e0] sm:$0xff]
      %v297 = vld [vmem:[%s196 + $0x2e8] sm:$0xff]
      %v298 = vld [vmem:[%s196 + $0x2f0] sm:$0xff]
      %v299 = vld [vmem:[%s196 + $0x2f8] sm:$0xff]
      %v300 = vld [vmem:[%s196 + $0x300] sm:$0xff]
      %v301 = vld [vmem:[%s196 + $0x308] sm:$0xff]
      %v302 = vld [vmem:[%s196 + $0x310] sm:$0xff]
      %v303 = vld [vmem:[%s196 + $0x318] sm:$0xff]
      %v304 = vld [vmem:[%s196 + $0x320] sm:$0xff]
      %v305 = vld [vmem:[%s196 + $0x328] sm:$0xff]
      %v306 = vld [vmem:[%s196 + $0x330] sm:$0xff]
      %v307 = vld [vmem:[%s196 + $0x338] sm:$0xff]
      %v308 = vld [vmem:[%s196 + $0x340] sm:$0xff]
      %v309 = vld [vmem:[%s196 + $0x348] sm:$0xff]
      %v310 = vld [vmem:[%s196 + $0x350] sm:$0xff]
      %v311 = vld [vmem:[%s196 + $0x358] sm:$0xff]
      %v312 = vld [vmem:[%s196 + $0x360] sm:$0xff]
      %v313 = vld [vmem:[%s196 + $0x368] sm:$0xff]
      %v314 = vld [vmem:[%s196 + $0x370] sm:$0xff]
      %v315 = vld [vmem:[%s196 + $0x378] sm:$0xff]
      %v316 = vld [vmem:[%s196 + $0x380] sm:$0xff]
      %v317 = vld [vmem:[%s196 + $0x388] sm:$0xff]
      %v318 = vld [vmem:[%s196 + $0x390] sm:$0xff]
      %v319 = vld [vmem:[%s196 + $0x398] sm:$0xff]
      %v320 = vld [vmem:[%s196 + $0x3a0] sm:$0xff]
      %v321 = vld [vmem:[%s196 + $0x3a8] sm:$0xff]
      %v322 = vld [vmem:[%s196 + $0x3b0] sm:$0xff]
      %v323 = vld [vmem:[%s196 + $0x3b8] sm:$0xff]
      %v324 = vld [vmem:[%s196 + $0x3c0] sm:$0xff]
      %v325 = vld [vmem:[%s196 + $0x3c8] sm:$0xff]
      %v326 = vld [vmem:[%s196 + $0x3d0] sm:$0xff]
      %v327 = vld [vmem:[%s196 + $0x3d8] sm:$0xff]
      %v328 = vld [vmem:[%s196 + $0x3e0] sm:$0xff]
      %v329 = vld [vmem:[%s196 + $0x3e8] sm:$0xff]
      %v330 = vld [vmem:[%s196 + $0x3f0] sm:$0xff]
      %v331 = vld [vmem:[%s196 + $0x3f8] sm:$0xff]
      %v332 = vld [vmem:[%s196 + $0x400] sm:$0xff]
      %v333 = vld [vmem:[%s196 + $0x408] sm:$0xff]
      %v334 = vld [vmem:[%s196 + $0x410] sm:$0xff]
      %v335 = vld [vmem:[%s196 + $0x418] sm:$0xff]
      %v336 = vld [vmem:[%s196 + $0x420] sm:$0xff]
      %v337 = vld [vmem:[%s196 + $0x428] sm:$0xff]
      %v338 = vld [vmem:[%s196 + $0x430] sm:$0xff]
      %v339 = vld [vmem:[%s196 + $0x438] sm:$0xff]
      %v340 = vld [vmem:[%s196 + $0x440] sm:$0xff]
      %v341 = vld [vmem:[%s196 + $0x448] sm:$0xff]
      %v342 = vld [vmem:[%s196 + $0x450] sm:$0xff]
      %v343 = vld [vmem:[%s196 + $0x458] sm:$0xff]
      %v344 = vld [vmem:[%s196 + $0x460] sm:$0xff]
      %v345 = vld [vmem:[%s196 + $0x468] sm:$0xff]
      %v346 = vld [vmem:[%s196 + $0x470] sm:$0xff]
      %v347 = vld [vmem:[%s196 + $0x478] sm:$0xff]
      %v348 = vld [vmem:[%s196 + $0x480] sm:$0xff]
      %v349 = vld [vmem:[%s196 + $0x488] sm:$0xff]
      %v350 = vld [vmem:[%s196 + $0x490] sm:$0xff]
      %v351 = vld [vmem:[%s196 + $0x498] sm:$0xff]
      %v352 = vld [vmem:[%s196 + $0x4a0] sm:$0xff]
      %v353 = vld [vmem:[%s196 + $0x4a8] sm:$0xff]
      %v354 = vld [vmem:[%s196 + $0x4b0] sm:$0xff]
      %v355 = vld [vmem:[%s196 + $0x4b8] sm:$0xff]
      %v356 = vld [vmem:[%s196 + $0x4c0] sm:$0xff]
      %v357 = vld [vmem:[%s196 + $0x4c8] sm:$0xff]
      %v358 = vld [vmem:[%s196 + $0x4d0] sm:$0xff]
      %v359 = vld [vmem:[%s196 + $0x4d8] sm:$0xff]
      %v360 = vld [vmem:[%s196 + $0x4e0] sm:$0xff]
      %v361 = vld [vmem:[%s196 + $0x4e8] sm:$0xff]
      %v362 = vld [vmem:[%s196 + $0x4f0] sm:$0xff]
      %v363 = vld [vmem:[%s196 + $0x4f8] sm:$0xff]
      %v364 = vld [vmem:[%s196 + $0x500] sm:$0xff]
      %v365 = vld [vmem:[%s196 + $0x508] sm:$0xff]
      %v366 = vld [vmem:[%s196 + $0x510] sm:$0xff]
      %v367 = vld [vmem:[%s196 + $0x518] sm:$0xff]
      %v368 = vld [vmem:[%s196 + $0x520] sm:$0xff]
      %v369 = vld [vmem:[%s196 + $0x528] sm:$0xff]
      %v370 = vld [vmem:[%s196 + $0x530] sm:$0xff]
      %v371 = vld [vmem:[%s196 + $0x538] sm:$0xff]
      %v372 = vld [vmem:[%s196 + $0x540] sm:$0xff]
      %v373 = vld [vmem:[%s196 + $0x548] sm:$0xff]
      %v374 = vld [vmem:[%s196 + $0x550] sm:$0xff]
      %v375 = vld [vmem:[%s196 + $0x558] sm:$0xff]
      %v376 = vld [vmem:[%s196 + $0x560] sm:$0xff]
      %v377 = vld [vmem:[%s196 + $0x568] sm:$0xff]
      %v378 = vld [vmem:[%s196 + $0x570] sm:$0xff]
      %v379 = vld [vmem:[%s196 + $0x578] sm:$0xff]
      %v380 = vld [vmem:[%s196 + $0x580] sm:$0xff]
      %v381 = vld [vmem:[%s196 + $0x588] sm:$0xff]
      %v382 = vld [vmem:[%s196 + $0x590] sm:$0xff]
      %v383 = vld [vmem:[%s196 + $0x598] sm:$0xff]
      %v384 = vld [vmem:[%s196 + $0x5a0] sm:$0xff]
      %v385 = vld [vmem:[%s196 + $0x5a8] sm:$0xff]
      %v386 = vld [vmem:[%s196 + $0x5b0] sm:$0xff]
      %v387 = vld [vmem:[%s196 + $0x5b8] sm:$0xff]
      %v388 = vld [vmem:[%s196 + $0x5c0] sm:$0xff]
      %v389 = vld [vmem:[%s196 + $0x5c8] sm:$0xff]
      %v390 = vld [vmem:[%s196 + $0x5d0] sm:$0xff]
      %v391 = vld [vmem:[%s196 + $0x5d8] sm:$0xff]
      %v392 = vld [vmem:[%s196 + $0x5e0] sm:$0xff]
      %v393 = vld [vmem:[%s196 + $0x5e8] sm:$0xff]
      %v394 = vld [vmem:[%s196 + $0x5f0] sm:$0xff]
      %v395 = vld [vmem:[%s196 + $0x5f8] sm:$0xff]
      %v396 = vld [vmem:[%s196 + $0x600] sm:$0xff]
      %v397 = vld [vmem:[%s196 + $0x608] sm:$0xff]
      %v398 = vld [vmem:[%s196 + $0x610] sm:$0xff]
      %v399 = vld [vmem:[%s196 + $0x618] sm:$0xff]
      %v400 = vld [vmem:[%s196 + $0x620] sm:$0xff]
      %v401 = vld [vmem:[%s196 + $0x628] sm:$0xff]
      %v402 = vld [vmem:[%s196 + $0x630] sm:$0xff]
      %v403 = vld [vmem:[%s196 + $0x638] sm:$0xff]
      %v404 = vld [vmem:[%s196 + $0x640] sm:$0xff]
      %v405 = vld [vmem:[%s196 + $0x648] sm:$0xff]
      %v406 = vld [vmem:[%s196 + $0x650] sm:$0xff]
      %v407 = vld [vmem:[%s196 + $0x658] sm:$0xff]
      %v408 = vld [vmem:[%s196 + $0x660] sm:$0xff]
      %v409 = vld [vmem:[%s196 + $0x668] sm:$0xff]
      %v410 = vld [vmem:[%s196 + $0x670] sm:$0xff]
      %v411 = vld [vmem:[%s196 + $0x678] sm:$0xff]
      %v412 = vld [vmem:[%s196 + $0x680] sm:$0xff]
      %v413 = vld [vmem:[%s196 + $0x688] sm:$0xff]
      %v414 = vld [vmem:[%s196 + $0x690] sm:$0xff]
      %v415 = vld [vmem:[%s196 + $0x698] sm:$0xff]
      %v416 = vld [vmem:[%s196 + $0x6a0] sm:$0xff]
      %v417 = vld [vmem:[%s196 + $0x6a8] sm:$0xff]
      %v418 = vld [vmem:[%s196 + $0x6b0] sm:$0xff]
      %v419 = vld [vmem:[%s196 + $0x6b8] sm:$0xff]
      %v420 = vld [vmem:[%s196 + $0x6c0] sm:$0xff]
      %v421 = vld [vmem:[%s196 + $0x6c8] sm:$0xff]
      %v422 = vld [vmem:[%s196 + $0x6d0] sm:$0xff]
      %v423 = vld [vmem:[%s196 + $0x6d8] sm:$0xff]
      %v424 = vld [vmem:[%s196 + $0x6e0] sm:$0xff]
      %v425 = vld [vmem:[%s196 + $0x6e8] sm:$0xff]
      %v426 = vld [vmem:[%s196 + $0x6f0] sm:$0xff]
      %v427 = vld [vmem:[%s196 + $0x6f8] sm:$0xff]
      %v428 = vld [vmem:[%s196 + $0x700] sm:$0xff]
      %v429 = vld [vmem:[%s196 + $0x708] sm:$0xff]
      %v430 = vld [vmem:[%s196 + $0x710] sm:$0xff]
      %v431 = vld [vmem:[%s196 + $0x718] sm:$0xff]
      %v432 = vld [vmem:[%s196 + $0x720] sm:$0xff]
      %v433 = vld [vmem:[%s196 + $0x728] sm:$0xff]
      %v434 = vld [vmem:[%s196 + $0x730] sm:$0xff]
      %v435 = vld [vmem:[%s196 + $0x738] sm:$0xff]
      %v436 = vld [vmem:[%s196 + $0x740] sm:$0xff]
      %v437 = vld [vmem:[%s196 + $0x748] sm:$0xff]
      %v438 = vld [vmem:[%s196 + $0x750] sm:$0xff]
      %v439 = vld [vmem:[%s196 + $0x758] sm:$0xff]
      %v440 = vld [vmem:[%s196 + $0x760] sm:$0xff]
      %v441 = vld [vmem:[%s196 + $0x768] sm:$0xff]
      %v442 = vld [vmem:[%s196 + $0x770] sm:$0xff]
      %v443 = vld [vmem:[%s196 + $0x778] sm:$0xff]
      %v444 = vld [vmem:[%s196 + $0x780] sm:$0xff]
      %v445 = vld [vmem:[%s196 + $0x788] sm:$0xff]
      %v446 = vld [vmem:[%s196 + $0x790] sm:$0xff]
      %v447 = vld [vmem:[%s196 + $0x798] sm:$0xff]
      %v448 = vld [vmem:[%s196 + $0x7a0] sm:$0xff]
      %v449 = vld [vmem:[%s196 + $0x7a8] sm:$0xff]
      %v450 = vld [vmem:[%s196 + $0x7b0] sm:$0xff]
      %v451 = vld [vmem:[%s196 + $0x7b8] sm:$0xff]
      %v452 = vld [vmem:[%s196 + $0x7c0] sm:$0xff]
      %v453 = vld [vmem:[%s196 + $0x7c8] sm:$0xff]
      %v454 = vld [vmem:[%s196 + $0x7d0] sm:$0xff]
      %v455 = vld [vmem:[%s196 + $0x7d8] sm:$0xff]
      %v456 = vld [vmem:[%s196 + $0x7e0] sm:$0xff]
      %v457 = vld [vmem:[%s196 + $0x7e8] sm:$0xff]
      %v458 = vld [vmem:[%s196 + $0x7f0] sm:$0xff]
      %v459 = vld [vmem:[%s196 + $0x7f8] sm:$0xff]
      %v460 = vld [vmem:[%s1] sm:$0xf]
      %v461 = vld [vmem:[%s1 + $0x4] sm:$0xf]
      %v462 = vld [vmem:[%s1 + $0x8] sm:$0xf]
      %v463 = vld [vmem:[%s1 + $0xc] sm:$0xf]
      %v464 = vld [vmem:[%s1 + $0x10] sm:$0xf]
      %v465 = vld [vmem:[%s1 + $0x14] sm:$0xf]
      %v466 = vld [vmem:[%s1 + $0x18] sm:$0xf]
      %v467 = vld [vmem:[%s1 + $0x1c] sm:$0xf]
      %v468 = vld [vmem:[%s1 + $0x20] sm:$0xf]
      %v469 = vld [vmem:[%s1 + $0x24] sm:$0xf]
      %v470 = vld [vmem:[%s1 + $0x28] sm:$0xf]
      %v471 = vld [vmem:[%s1 + $0x2c] sm:$0xf]
      %v472 = vld [vmem:[%s1 + $0x30] sm:$0xf]
      %v473 = vld [vmem:[%s1 + $0x34] sm:$0xf]
      %v474 = vld [vmem:[%s1 + $0x38] sm:$0xf]
      %v475 = vld [vmem:[%s1 + $0x3c] sm:$0xf]
      %v476 = vld [vmem:[%s1 + $0x40] sm:$0xf]
      %v477 = vld [vmem:[%s1 + $0x44] sm:$0xf]
      %v478 = vld [vmem:[%s1 + $0x48] sm:$0xf]
      %v479 = vld [vmem:[%s1 + $0x4c] sm:$0xf]
      %v480 = vld [vmem:[%s1 + $0x50] sm:$0xf]
      %v481 = vld [vmem:[%s1 + $0x54] sm:$0xf]
      %v482 = vld [vmem:[%s1 + $0x58] sm:$0xf]
      %v483 = vld [vmem:[%s1 + $0x5c] sm:$0xf]
      %v484 = vld [vmem:[%s1 + $0x60] sm:$0xf]
      %v485 = vld [vmem:[%s1 + $0x64] sm:$0xf]
      %v486 = vld [vmem:[%s1 + $0x68] sm:$0xf]
      %v487 = vld [vmem:[%s1 + $0x6c] sm:$0xf]
      %v488 = vld [vmem:[%s1 + $0x70] sm:$0xf]
      %v489 = vld [vmem:[%s1 + $0x74] sm:$0xf]
      %v490 = vld [vmem:[%s1 + $0x78] sm:$0xf]
      %v491 = vld [vmem:[%s1 + $0x7c] sm:$0xf]
      %v492 = vld [vmem:[%s1 + $0x80] sm:$0xf]
      %v493 = vld [vmem:[%s1 + $0x84] sm:$0xf]
      %v494 = vld [vmem:[%s1 + $0x88] sm:$0xf]
      %v495 = vld [vmem:[%s1 + $0x8c] sm:$0xf]
      %v496 = vld [vmem:[%s1 + $0x90] sm:$0xf]
      %v497 = vld [vmem:[%s1 + $0x94] sm:$0xf]
      %v498 = vld [vmem:[%s1 + $0x98] sm:$0xf]
      %v499 = vld [vmem:[%s1 + $0x9c] sm:$0xf]
      %v500 = vld [vmem:[%s1 + $0xa0] sm:$0xf]
      %v501 = vld [vmem:[%s1 + $0xa4] sm:$0xf]
      %v502 = vld [vmem:[%s1 + $0xa8] sm:$0xf]
      %v503 = vld [vmem:[%s1 + $0xac] sm:$0xf]
      %v504 = vld [vmem:[%s1 + $0xb0] sm:$0xf]
      %v505 = vld [vmem:[%s1 + $0xb4] sm:$0xf]
      %v506 = vld [vmem:[%s1 + $0xb8] sm:$0xf]
      %v507 = vld [vmem:[%s1 + $0xbc] sm:$0xf]
      %v508 = vld [vmem:[%s1 + $0xc0] sm:$0xf]
      %v509 = vld [vmem:[%s1 + $0xc4] sm:$0xf]
      %v510 = vld [vmem:[%s1 + $0xc8] sm:$0xf]
      %v511 = vld [vmem:[%s1 + $0xcc] sm:$0xf]
      %v512 = vld [vmem:[%s1 + $0xd0] sm:$0xf]
      %v513 = vld [vmem:[%s1 + $0xd4] sm:$0xf]
      %v514 = vld [vmem:[%s1 + $0xd8] sm:$0xf]
      %v515 = vld [vmem:[%s1 + $0xdc] sm:$0xf]
      %v516 = vld [vmem:[%s1 + $0xe0] sm:$0xf]
      %v517 = vld [vmem:[%s1 + $0xe4] sm:$0xf]
      %v518 = vld [vmem:[%s1 + $0xe8] sm:$0xf]
      %v519 = vld [vmem:[%s1 + $0xec] sm:$0xf]
      %v520 = vld [vmem:[%s1 + $0xf0] sm:$0xf]
      %v521 = vld [vmem:[%s1 + $0xf4] sm:$0xf]
      %v522 = vld [vmem:[%s1 + $0xf8] sm:$0xf]
      %v523 = vld [vmem:[%s1 + $0xfc] sm:$0xf]
      %v524 = vld [vmem:[%s1 + $0x100] sm:$0xf]
      %v525 = vld [vmem:[%s1 + $0x104] sm:$0xf]
      %v526 = vld [vmem:[%s1 + $0x108] sm:$0xf]
      %v527 = vld [vmem:[%s1 + $0x10c] sm:$0xf]
      %v528 = vld [vmem:[%s1 + $0x110] sm:$0xf]
      %v529 = vld [vmem:[%s1 + $0x114] sm:$0xf]
      %v530 = vld [vmem:[%s1 + $0x118] sm:$0xf]
      %v531 = vld [vmem:[%s1 + $0x11c] sm:$0xf]
      %v532 = vld [vmem:[%s1 + $0x120] sm:$0xf]
      %v533 = vld [vmem:[%s1 + $0x124] sm:$0xf]
      %v534 = vld [vmem:[%s1 + $0x128] sm:$0xf]
      %v535 = vld [vmem:[%s1 + $0x12c] sm:$0xf]
      %v536 = vld [vmem:[%s1 + $0x130] sm:$0xf]
      %v537 = vld [vmem:[%s1 + $0x134] sm:$0xf]
      %v538 = vld [vmem:[%s1 + $0x138] sm:$0xf]
      %v539 = vld [vmem:[%s1 + $0x13c] sm:$0xf]
      %v540 = vld [vmem:[%s1 + $0x140] sm:$0xf]
      %v541 = vld [vmem:[%s1 + $0x144] sm:$0xf]
      %v542 = vld [vmem:[%s1 + $0x148] sm:$0xf]
      %v543 = vld [vmem:[%s1 + $0x14c] sm:$0xf]
      %v544 = vld [vmem:[%s1 + $0x150] sm:$0xf]
      %v545 = vld [vmem:[%s1 + $0x154] sm:$0xf]
      %v546 = vld [vmem:[%s1 + $0x158] sm:$0xf]
      %v547 = vld [vmem:[%s1 + $0x15c] sm:$0xf]
      %v548 = vld [vmem:[%s1 + $0x160] sm:$0xf]
      %v549 = vld [vmem:[%s1 + $0x164] sm:$0xf]
      %v550 = vld [vmem:[%s1 + $0x168] sm:$0xf]
      %v551 = vld [vmem:[%s1 + $0x16c] sm:$0xf]
      %v552 = vld [vmem:[%s1 + $0x170] sm:$0xf]
      %v553 = vld [vmem:[%s1 + $0x174] sm:$0xf]
      %v554 = vld [vmem:[%s1 + $0x178] sm:$0xf]
      %v555 = vld [vmem:[%s1 + $0x17c] sm:$0xf]
      %v556 = vld [vmem:[%s1 + $0x180] sm:$0xf]
      %v557 = vld [vmem:[%s1 + $0x184] sm:$0xf]
      %v558 = vld [vmem:[%s1 + $0x188] sm:$0xf]
      %v559 = vld [vmem:[%s1 + $0x18c] sm:$0xf]
      %v560 = vld [vmem:[%s1 + $0x190] sm:$0xf]
      %v561 = vld [vmem:[%s1 + $0x194] sm:$0xf]
      %v562 = vld [vmem:[%s1 + $0x198] sm:$0xf]
      %v563 = vld [vmem:[%s1 + $0x19c] sm:$0xf]
      %v564 = vld [vmem:[%s1 + $0x1a0] sm:$0xf]
      %v565 = vld [vmem:[%s1 + $0x1a4] sm:$0xf]
      %v566 = vld [vmem:[%s1 + $0x1a8] sm:$0xf]
      %v567 = vld [vmem:[%s1 + $0x1ac] sm:$0xf]
      %v568 = vld [vmem:[%s1 + $0x1b0] sm:$0xf]
      %v569 = vld [vmem:[%s1 + $0x1b4] sm:$0xf]
      %v570 = vld [vmem:[%s1 + $0x1b8] sm:$0xf]
      %v571 = vld [vmem:[%s1 + $0x1bc] sm:$0xf]
      %v572 = vld [vmem:[%s1 + $0x1c0] sm:$0xf]
      %v573 = vld [vmem:[%s1 + $0x1c4] sm:$0xf]
      %v574 = vld [vmem:[%s1 + $0x1c8] sm:$0xf]
      %v575 = vld [vmem:[%s1 + $0x1cc] sm:$0xf]
      %v576 = vld [vmem:[%s1 + $0x1d0] sm:$0xf]
      %v577 = vld [vmem:[%s1 + $0x1d4] sm:$0xf]
      %v578 = vld [vmem:[%s1 + $0x1d8] sm:$0xf]
      %v579 = vld [vmem:[%s1 + $0x1dc] sm:$0xf]
      %v580 = vld [vmem:[%s1 + $0x1e0] sm:$0xf]
      %v581 = vld [vmem:[%s1 + $0x1e4] sm:$0xf]
      %v582 = vld [vmem:[%s1 + $0x1e8] sm:$0xf]
      %v583 = vld [vmem:[%s1 + $0x1ec] sm:$0xf]
      %v584 = vld [vmem:[%s1 + $0x1f0] sm:$0xf]
      %v585 = vld [vmem:[%s1 + $0x1f4] sm:$0xf]
      %v586 = vld [vmem:[%s1 + $0x1f8] sm:$0xf]
      %v587 = vld [vmem:[%s1 + $0x1fc] sm:$0xf]
      %v588 = vld [vmem:[%s1 + $0x200] sm:$0xf]
      %v589 = vld [vmem:[%s1 + $0x204] sm:$0xf]
      %v590 = vld [vmem:[%s1 + $0x208] sm:$0xf]
      %v591 = vld [vmem:[%s1 + $0x20c] sm:$0xf]
      %v592 = vld [vmem:[%s1 + $0x210] sm:$0xf]
      %v593 = vld [vmem:[%s1 + $0x214] sm:$0xf]
      %v594 = vld [vmem:[%s1 + $0x218] sm:$0xf]
      %v595 = vld [vmem:[%s1 + $0x21c] sm:$0xf]
      %v596 = vld [vmem:[%s1 + $0x220] sm:$0xf]
      %v597 = vld [vmem:[%s1 + $0x224] sm:$0xf]
      %v598 = vld [vmem:[%s1 + $0x228] sm:$0xf]
      %v599 = vld [vmem:[%s1 + $0x22c] sm:$0xf]
      %v600 = vld [vmem:[%s1 + $0x230] sm:$0xf]
      %v601 = vld [vmem:[%s1 + $0x234] sm:$0xf]
      %v602 = vld [vmem:[%s1 + $0x238] sm:$0xf]
      %v603 = vld [vmem:[%s1 + $0x23c] sm:$0xf]
      %v604 = vld [vmem:[%s1 + $0x240] sm:$0xf]
      %v605 = vld [vmem:[%s1 + $0x244] sm:$0xf]
      %v606 = vld [vmem:[%s1 + $0x248] sm:$0xf]
      %v607 = vld [vmem:[%s1 + $0x24c] sm:$0xf]
      %v608 = vld [vmem:[%s1 + $0x250] sm:$0xf]
      %v609 = vld [vmem:[%s1 + $0x254] sm:$0xf]
      %v610 = vld [vmem:[%s1 + $0x258] sm:$0xf]
      %v611 = vld [vmem:[%s1 + $0x25c] sm:$0xf]
      %v612 = vld [vmem:[%s1 + $0x260] sm:$0xf]
      %v613 = vld [vmem:[%s1 + $0x264] sm:$0xf]
      %v614 = vld [vmem:[%s1 + $0x268] sm:$0xf]
      %v615 = vld [vmem:[%s1 + $0x26c] sm:$0xf]
      %v616 = vld [vmem:[%s1 + $0x270] sm:$0xf]
      %v617 = vld [vmem:[%s1 + $0x274] sm:$0xf]
      %v618 = vld [vmem:[%s1 + $0x278] sm:$0xf]
      %v619 = vld [vmem:[%s1 + $0x27c] sm:$0xf]
      %v620 = vld [vmem:[%s1 + $0x280] sm:$0xf]
      %v621 = vld [vmem:[%s1 + $0x284] sm:$0xf]
      %v622 = vld [vmem:[%s1 + $0x288] sm:$0xf]
      %v623 = vld [vmem:[%s1 + $0x28c] sm:$0xf]
      %v624 = vld [vmem:[%s1 + $0x290] sm:$0xf]
      %v625 = vld [vmem:[%s1 + $0x294] sm:$0xf]
      %v626 = vld [vmem:[%s1 + $0x298] sm:$0xf]
      %v627 = vld [vmem:[%s1 + $0x29c] sm:$0xf]
      %v628 = vld [vmem:[%s1 + $0x2a0] sm:$0xf]
      %v629 = vld [vmem:[%s1 + $0x2a4] sm:$0xf]
      %v630 = vld [vmem:[%s1 + $0x2a8] sm:$0xf]
      %v631 = vld [vmem:[%s1 + $0x2ac] sm:$0xf]
      %v632 = vld [vmem:[%s1 + $0x2b0] sm:$0xf]
      %v633 = vld [vmem:[%s1 + $0x2b4] sm:$0xf]
      %v634 = vld [vmem:[%s1 + $0x2b8] sm:$0xf]
      %v635 = vld [vmem:[%s1 + $0x2bc] sm:$0xf]
      %v636 = vld [vmem:[%s1 + $0x2c0] sm:$0xf]
      %v637 = vld [vmem:[%s1 + $0x2c4] sm:$0xf]
      %v638 = vld [vmem:[%s1 + $0x2c8] sm:$0xf]
      %v639 = vld [vmem:[%s1 + $0x2cc] sm:$0xf]
      %v640 = vld [vmem:[%s1 + $0x2d0] sm:$0xf]
      %v641 = vld [vmem:[%s1 + $0x2d4] sm:$0xf]
      %v642 = vld [vmem:[%s1 + $0x2d8] sm:$0xf]
      %v643 = vld [vmem:[%s1 + $0x2dc] sm:$0xf]
      %v644 = vld [vmem:[%s1 + $0x2e0] sm:$0xf]
      %v645 = vld [vmem:[%s1 + $0x2e4] sm:$0xf]
      %v646 = vld [vmem:[%s1 + $0x2e8] sm:$0xf]
      %v647 = vld [vmem:[%s1 + $0x2ec] sm:$0xf]
      %v648 = vld [vmem:[%s1 + $0x2f0] sm:$0xf]
      %v649 = vld [vmem:[%s1 + $0x2f4] sm:$0xf]
      %v650 = vld [vmem:[%s1 + $0x2f8] sm:$0xf]
      %v651 = vld [vmem:[%s1 + $0x2fc] sm:$0xf]
      %v652 = vld [vmem:[%s1 + $0x300] sm:$0xf]
      %v653 = vld [vmem:[%s1 + $0x304] sm:$0xf]
      %v654 = vld [vmem:[%s1 + $0x308] sm:$0xf]
      %v655 = vld [vmem:[%s1 + $0x30c] sm:$0xf]
      %v656 = vld [vmem:[%s1 + $0x310] sm:$0xf]
      %v657 = vld [vmem:[%s1 + $0x314] sm:$0xf]
      %v658 = vld [vmem:[%s1 + $0x318] sm:$0xf]
      %v659 = vld [vmem:[%s1 + $0x31c] sm:$0xf]
      %v660 = vld [vmem:[%s1 + $0x320] sm:$0xf]
      %v661 = vld [vmem:[%s1 + $0x324] sm:$0xf]
      %v662 = vld [vmem:[%s1 + $0x328] sm:$0xf]
      %v663 = vld [vmem:[%s1 + $0x32c] sm:$0xf]
      %v664 = vld [vmem:[%s1 + $0x330] sm:$0xf]
      %v665 = vld [vmem:[%s1 + $0x334] sm:$0xf]
      %v666 = vld [vmem:[%s1 + $0x338] sm:$0xf]
      %v667 = vld [vmem:[%s1 + $0x33c] sm:$0xf]
      %v668 = vld [vmem:[%s1 + $0x340] sm:$0xf]
      %v669 = vld [vmem:[%s1 + $0x344] sm:$0xf]
      %v670 = vld [vmem:[%s1 + $0x348] sm:$0xf]
      %v671 = vld [vmem:[%s1 + $0x34c] sm:$0xf]
      %v672 = vld [vmem:[%s1 + $0x350] sm:$0xf]
      %v673 = vld [vmem:[%s1 + $0x354] sm:$0xf]
      %v674 = vld [vmem:[%s1 + $0x358] sm:$0xf]
      %v675 = vld [vmem:[%s1 + $0x35c] sm:$0xf]
      %v676 = vld [vmem:[%s1 + $0x360] sm:$0xf]
      %v677 = vld [vmem:[%s1 + $0x364] sm:$0xf]
      %v678 = vld [vmem:[%s1 + $0x368] sm:$0xf]
      %v679 = vld [vmem:[%s1 + $0x36c] sm:$0xf]
      %v680 = vld [vmem:[%s1 + $0x370] sm:$0xf]
      %v681 = vld [vmem:[%s1 + $0x374] sm:$0xf]
      %v682 = vld [vmem:[%s1 + $0x378] sm:$0xf]
      %v683 = vld [vmem:[%s1 + $0x37c] sm:$0xf]
      %v684 = vld [vmem:[%s1 + $0x380] sm:$0xf]
      %v685 = vld [vmem:[%s1 + $0x384] sm:$0xf]
      %v686 = vld [vmem:[%s1 + $0x388] sm:$0xf]
      %v687 = vld [vmem:[%s1 + $0x38c] sm:$0xf]
      %v688 = vld [vmem:[%s1 + $0x390] sm:$0xf]
      %v689 = vld [vmem:[%s1 + $0x394] sm:$0xf]
      %v690 = vld [vmem:[%s1 + $0x398] sm:$0xf]
      %v691 = vld [vmem:[%s1 + $0x39c] sm:$0xf]
      %v692 = vld [vmem:[%s1 + $0x3a0] sm:$0xf]
      %v693 = vld [vmem:[%s1 + $0x3a4] sm:$0xf]
      %v694 = vld [vmem:[%s1 + $0x3a8] sm:$0xf]
      %v695 = vld [vmem:[%s1 + $0x3ac] sm:$0xf]
      %v696 = vld [vmem:[%s1 + $0x3b0] sm:$0xf]
      %v697 = vld [vmem:[%s1 + $0x3b4] sm:$0xf]
      %v698 = vld [vmem:[%s1 + $0x3b8] sm:$0xf]
      %v699 = vld [vmem:[%s1 + $0x3bc] sm:$0xf]
      %v700 = vld [vmem:[%s1 + $0x3c0] sm:$0xf]
      %v701 = vld [vmem:[%s1 + $0x3c4] sm:$0xf]
      %v702 = vld [vmem:[%s1 + $0x3c8] sm:$0xf]
      %v703 = vld [vmem:[%s1 + $0x3cc] sm:$0xf]
      %v704 = vld [vmem:[%s1 + $0x3d0] sm:$0xf]
      %v705 = vld [vmem:[%s1 + $0x3d4] sm:$0xf]
      %v706 = vld [vmem:[%s1 + $0x3d8] sm:$0xf]
      %v707 = vld [vmem:[%s1 + $0x3dc] sm:$0xf]
      %v708 = vld [vmem:[%s1 + $0x3e0] sm:$0xf]
      %v709 = vld [vmem:[%s1 + $0x3e4] sm:$0xf]
      %v710 = vld [vmem:[%s1 + $0x3e8] sm:$0xf]
      %v711 = vld [vmem:[%s1 + $0x3ec] sm:$0xf]
      %v712 = vld [vmem:[%s1 + $0x3f0] sm:$0xf]
      %v713 = vld [vmem:[%s1 + $0x3f4] sm:$0xf]
      %v714 = vld [vmem:[%s1 + $0x3f8] sm:$0xf]
      %v715 = vld [vmem:[%s1 + $0x3fc] sm:$0xf]
      %v716 = vld [vmem:[%s1 + $0x400] sm:$0xf]
      %v717 = vld [vmem:[%s1 + $0x404] sm:$0xf]
      %v718 = vld [vmem:[%s1 + $0x408] sm:$0xf]
      %v719 = vld [vmem:[%s1 + $0x40c] sm:$0xf]
      %v720 = vld [vmem:[%s1 + $0x410] sm:$0xf]
      %v721 = vld [vmem:[%s1 + $0x414] sm:$0xf]
      %v722 = vld [vmem:[%s1 + $0x418] sm:$0xf]
      %v723 = vld [vmem:[%s1 + $0x41c] sm:$0xf]
      %v724 = vld [vmem:[%s1 + $0x420] sm:$0xf]
      %v725 = vld [vmem:[%s1 + $0x424] sm:$0xf]
      %v726 = vld [vmem:[%s1 + $0x428] sm:$0xf]
      %v727 = vld [vmem:[%s1 + $0x42c] sm:$0xf]
      %v728 = vld [vmem:[%s1 + $0x430] sm:$0xf]
      %v729 = vld [vmem:[%s1 + $0x434] sm:$0xf]
      %v730 = vld [vmem:[%s1 + $0x438] sm:$0xf]
      %v731 = vld [vmem:[%s1 + $0x43c] sm:$0xf]
      %v732 = vld [vmem:[%s1 + $0x440] sm:$0xf]
      %v733 = vld [vmem:[%s1 + $0x444] sm:$0xf]
      %v734 = vld [vmem:[%s1 + $0x448] sm:$0xf]
      %v735 = vld [vmem:[%s1 + $0x44c] sm:$0xf]
      %v736 = vld [vmem:[%s1 + $0x450] sm:$0xf]
      %v737 = vld [vmem:[%s1 + $0x454] sm:$0xf]
      %v738 = vld [vmem:[%s1 + $0x458] sm:$0xf]
      %v739 = vld [vmem:[%s1 + $0x45c] sm:$0xf]
      %v740 = vld [vmem:[%s1 + $0x460] sm:$0xf]
      %v741 = vld [vmem:[%s1 + $0x464] sm:$0xf]
      %v742 = vld [vmem:[%s1 + $0x468] sm:$0xf]
      %v743 = vld [vmem:[%s1 + $0x46c] sm:$0xf]
      %v744 = vld [vmem:[%s1 + $0x470] sm:$0xf]
      %v745 = vld [vmem:[%s1 + $0x474] sm:$0xf]
      %v746 = vld [vmem:[%s1 + $0x478] sm:$0xf]
      %v747 = vld [vmem:[%s1 + $0x47c] sm:$0xf]
      %v748 = vld [vmem:[%s1 + $0x480] sm:$0xf]
      %v749 = vld [vmem:[%s1 + $0x484] sm:$0xf]
      %v750 = vld [vmem:[%s1 + $0x488] sm:$0xf]
      %v751 = vld [vmem:[%s1 + $0x48c] sm:$0xf]
      %v752 = vld [vmem:[%s1 + $0x490] sm:$0xf]
      %v753 = vld [vmem:[%s1 + $0x494] sm:$0xf]
      %v754 = vld [vmem:[%s1 + $0x498] sm:$0xf]
      %v755 = vld [vmem:[%s1 + $0x49c] sm:$0xf]
      %v756 = vld [vmem:[%s1 + $0x4a0] sm:$0xf]
      %v757 = vld [vmem:[%s1 + $0x4a4] sm:$0xf]
      %v758 = vld [vmem:[%s1 + $0x4a8] sm:$0xf]
      %v759 = vld [vmem:[%s1 + $0x4ac] sm:$0xf]
      %v760 = vld [vmem:[%s1 + $0x4b0] sm:$0xf]
      %v761 = vld [vmem:[%s1 + $0x4b4] sm:$0xf]
      %v762 = vld [vmem:[%s1 + $0x4b8] sm:$0xf]
      %v763 = vld [vmem:[%s1 + $0x4bc] sm:$0xf]
      %v764 = vld [vmem:[%s1 + $0x4c0] sm:$0xf]
      %v765 = vld [vmem:[%s1 + $0x4c4] sm:$0xf]
      %v766 = vld [vmem:[%s1 + $0x4c8] sm:$0xf]
      %v767 = vld [vmem:[%s1 + $0x4cc] sm:$0xf]
      %v768 = vld [vmem:[%s1 + $0x4d0] sm:$0xf]
      %v769 = vld [vmem:[%s1 + $0x4d4] sm:$0xf]
      %v770 = vld [vmem:[%s1 + $0x4d8] sm:$0xf]
      %v771 = vld [vmem:[%s1 + $0x4dc] sm:$0xf]
      %v772 = vld [vmem:[%s1 + $0x4e0] sm:$0xf]
      %v773 = vld [vmem:[%s1 + $0x4e4] sm:$0xf]
      %v774 = vld [vmem:[%s1 + $0x4e8] sm:$0xf]
      %v775 = vld [vmem:[%s1 + $0x4ec] sm:$0xf]
      %v776 = vld [vmem:[%s1 + $0x4f0] sm:$0xf]
      %v777 = vld [vmem:[%s1 + $0x4f4] sm:$0xf]
      %v778 = vld [vmem:[%s1 + $0x4f8] sm:$0xf]
      %v779 = vld [vmem:[%s1 + $0x4fc] sm:$0xf]
      %v780 = vld [vmem:[%s1 + $0x500] sm:$0xf]
      %v781 = vld [vmem:[%s1 + $0x504] sm:$0xf]
      %v782 = vld [vmem:[%s1 + $0x508] sm:$0xf]
      %v783 = vld [vmem:[%s1 + $0x50c] sm:$0xf]
      %v784 = vld [vmem:[%s1 + $0x510] sm:$0xf]
      %v785 = vld [vmem:[%s1 + $0x514] sm:$0xf]
      %v786 = vld [vmem:[%s1 + $0x518] sm:$0xf]
      %v787 = vld [vmem:[%s1 + $0x51c] sm:$0xf]
      %v788 = vld [vmem:[%s1 + $0x520] sm:$0xf]
      %v789 = vld [vmem:[%s1 + $0x524] sm:$0xf]
      %v790 = vld [vmem:[%s1 + $0x528] sm:$0xf]
      %v791 = vld [vmem:[%s1 + $0x52c] sm:$0xf]
      %v792 = vld [vmem:[%s1 + $0x530] sm:$0xf]
      %v793 = vld [vmem:[%s1 + $0x534] sm:$0xf]
      %v794 = vld [vmem:[%s1 + $0x538] sm:$0xf]
      %v795 = vld [vmem:[%s1 + $0x53c] sm:$0xf]
      %v796 = vld [vmem:[%s1 + $0x540] sm:$0xf]
      %v797 = vld [vmem:[%s1 + $0x544] sm:$0xf]
      %v798 = vld [vmem:[%s1 + $0x548] sm:$0xf]
      %v799 = vld [vmem:[%s1 + $0x54c] sm:$0xf]
      %v800 = vld [vmem:[%s1 + $0x550] sm:$0xf]
      %v801 = vld [vmem:[%s1 + $0x554] sm:$0xf]
      %v802 = vld [vmem:[%s1 + $0x558] sm:$0xf]
      %v803 = vld [vmem:[%s1 + $0x55c] sm:$0xf]
      %v804 = vld [vmem:[%s1 + $0x560] sm:$0xf]
      %v805 = vld [vmem:[%s1 + $0x564] sm:$0xf]
      %v806 = vld [vmem:[%s1 + $0x568] sm:$0xf]
      %v807 = vld [vmem:[%s1 + $0x56c] sm:$0xf]
      %v808 = vld [vmem:[%s1 + $0x570] sm:$0xf]
      %v809 = vld [vmem:[%s1 + $0x574] sm:$0xf]
      %v810 = vld [vmem:[%s1 + $0x578] sm:$0xf]
      %v811 = vld [vmem:[%s1 + $0x57c] sm:$0xf]
      %v812 = vld [vmem:[%s1 + $0x580] sm:$0xf]
      %v813 = vld [vmem:[%s1 + $0x584] sm:$0xf]
      %v814 = vld [vmem:[%s1 + $0x588] sm:$0xf]
      %v815 = vld [vmem:[%s1 + $0x58c] sm:$0xf]
      %v816 = vld [vmem:[%s1 + $0x590] sm:$0xf]
      %v817 = vld [vmem:[%s1 + $0x594] sm:$0xf]
      %v818 = vld [vmem:[%s1 + $0x598] sm:$0xf]
      %v819 = vld [vmem:[%s1 + $0x59c] sm:$0xf]
      %v820 = vld [vmem:[%s1 + $0x5a0] sm:$0xf]
      %v821 = vld [vmem:[%s1 + $0x5a4] sm:$0xf]
      %v822 = vld [vmem:[%s1 + $0x5a8] sm:$0xf]
      %v823 = vld [vmem:[%s1 + $0x5ac] sm:$0xf]
      %v824 = vld [vmem:[%s1 + $0x5b0] sm:$0xf]
      %v825 = vld [vmem:[%s1 + $0x5b4] sm:$0xf]
      %v826 = vld [vmem:[%s1 + $0x5b8] sm:$0xf]
      %v827 = vld [vmem:[%s1 + $0x5bc] sm:$0xf]
      %v828 = vld [vmem:[%s1 + $0x5c0] sm:$0xf]
      %v829 = vld [vmem:[%s1 + $0x5c4] sm:$0xf]
      %v830 = vld [vmem:[%s1 + $0x5c8] sm:$0xf]
      %v831 = vld [vmem:[%s1 + $0x5cc] sm:$0xf]
      %v832 = vld [vmem:[%s1 + $0x5d0] sm:$0xf]
      %v833 = vld [vmem:[%s1 + $0x5d4] sm:$0xf]
      %v834 = vld [vmem:[%s1 + $0x5d8] sm:$0xf]
      %v835 = vld [vmem:[%s1 + $0x5dc] sm:$0xf]
      %v836 = vld [vmem:[%s1 + $0x5e0] sm:$0xf]
      %v837 = vld [vmem:[%s1 + $0x5e4] sm:$0xf]
      %v838 = vld [vmem:[%s1 + $0x5e8] sm:$0xf]
      %v839 = vld [vmem:[%s1 + $0x5ec] sm:$0xf]
      %v840 = vld [vmem:[%s1 + $0x5f0] sm:$0xf]
      %v841 = vld [vmem:[%s1 + $0x5f4] sm:$0xf]
      %v842 = vld [vmem:[%s1 + $0x5f8] sm:$0xf]
      %v843 = vld [vmem:[%s1 + $0x5fc] sm:$0xf]
      %v844 = vld [vmem:[%s1 + $0x600] sm:$0xf]
      %v845 = vld [vmem:[%s1 + $0x604] sm:$0xf]
      %v846 = vld [vmem:[%s1 + $0x608] sm:$0xf]
      %v847 = vld [vmem:[%s1 + $0x60c] sm:$0xf]
      %v848 = vld [vmem:[%s1 + $0x610] sm:$0xf]
      %v849 = vld [vmem:[%s1 + $0x614] sm:$0xf]
      %v850 = vld [vmem:[%s1 + $0x618] sm:$0xf]
      %v851 = vld [vmem:[%s1 + $0x61c] sm:$0xf]
      %v852 = vld [vmem:[%s1 + $0x620] sm:$0xf]
      %v853 = vld [vmem:[%s1 + $0x624] sm:$0xf]
      %v854 = vld [vmem:[%s1 + $0x628] sm:$0xf]
      %v855 = vld [vmem:[%s1 + $0x62c] sm:$0xf]
      %v856 = vld [vmem:[%s1 + $0x630] sm:$0xf]
      %v857 = vld [vmem:[%s1 + $0x634] sm:$0xf]
      %v858 = vld [vmem:[%s1 + $0x638] sm:$0xf]
      %v859 = vld [vmem:[%s1 + $0x63c] sm:$0xf]
      %v860 = vld [vmem:[%s1 + $0x640] sm:$0xf]
      %v861 = vld [vmem:[%s1 + $0x644] sm:$0xf]
      %v862 = vld [vmem:[%s1 + $0x648] sm:$0xf]
      %v863 = vld [vmem:[%s1 + $0x64c] sm:$0xf]
      %v864 = vld [vmem:[%s1 + $0x650] sm:$0xf]
      %v865 = vld [vmem:[%s1 + $0x654] sm:$0xf]
      %v866 = vld [vmem:[%s1 + $0x658] sm:$0xf]
      %v867 = vld [vmem:[%s1 + $0x65c] sm:$0xf]
      %v868 = vld [vmem:[%s1 + $0x660] sm:$0xf]
      %v869 = vld [vmem:[%s1 + $0x664] sm:$0xf]
      %v870 = vld [vmem:[%s1 + $0x668] sm:$0xf]
      %v871 = vld [vmem:[%s1 + $0x66c] sm:$0xf]
      %v872 = vld [vmem:[%s1 + $0x670] sm:$0xf]
      %v873 = vld [vmem:[%s1 + $0x674] sm:$0xf]
      %v874 = vld [vmem:[%s1 + $0x678] sm:$0xf]
      %v875 = vld [vmem:[%s1 + $0x67c] sm:$0xf]
      %v876 = vld [vmem:[%s1 + $0x680] sm:$0xf]
      %v877 = vld [vmem:[%s1 + $0x684] sm:$0xf]
      %v878 = vld [vmem:[%s1 + $0x688] sm:$0xf]
      %v879 = vld [vmem:[%s1 + $0x68c] sm:$0xf]
      %v880 = vld [vmem:[%s1 + $0x690] sm:$0xf]
      %v881 = vld [vmem:[%s1 + $0x694] sm:$0xf]
      %v882 = vld [vmem:[%s1 + $0x698] sm:$0xf]
      %v883 = vld [vmem:[%s1 + $0x69c] sm:$0xf]
      %v884 = vld [vmem:[%s1 + $0x6a0] sm:$0xf]
      %v885 = vld [vmem:[%s1 + $0x6a4] sm:$0xf]
      %v886 = vld [vmem:[%s1 + $0x6a8] sm:$0xf]
      %v887 = vld [vmem:[%s1 + $0x6ac] sm:$0xf]
      %v888 = vld [vmem:[%s1 + $0x6b0] sm:$0xf]
      %v889 = vld [vmem:[%s1 + $0x6b4] sm:$0xf]
      %v890 = vld [vmem:[%s1 + $0x6b8] sm:$0xf]
      %v891 = vld [vmem:[%s1 + $0x6bc] sm:$0xf]
      %v892 = vld [vmem:[%s1 + $0x6c0] sm:$0xf]
      %v893 = vld [vmem:[%s1 + $0x6c4] sm:$0xf]
      %v894 = vld [vmem:[%s1 + $0x6c8] sm:$0xf]
      %v895 = vld [vmem:[%s1 + $0x6cc] sm:$0xf]
      %v896 = vld [vmem:[%s1 + $0x6d0] sm:$0xf]
      %v897 = vld [vmem:[%s1 + $0x6d4] sm:$0xf]
      %v898 = vld [vmem:[%s1 + $0x6d8] sm:$0xf]
      %v899 = vld [vmem:[%s1 + $0x6dc] sm:$0xf]
      %v900 = vld [vmem:[%s1 + $0x6e0] sm:$0xf]
      %v901 = vld [vmem:[%s1 + $0x6e4] sm:$0xf]
      %v902 = vld [vmem:[%s1 + $0x6e8] sm:$0xf]
      %v903 = vld [vmem:[%s1 + $0x6ec] sm:$0xf]
      %v904 = vld [vmem:[%s1 + $0x6f0] sm:$0xf]
      %v905 = vld [vmem:[%s1 + $0x6f4] sm:$0xf]
      %v906 = vld [vmem:[%s1 + $0x6f8] sm:$0xf]
      %v907 = vld [vmem:[%s1 + $0x6fc] sm:$0xf]
      %v908 = vld [vmem:[%s1 + $0x700] sm:$0xf]
      %v909 = vld [vmem:[%s1 + $0x704] sm:$0xf]
      %v910 = vld [vmem:[%s1 + $0x708] sm:$0xf]
      %v911 = vld [vmem:[%s1 + $0x70c] sm:$0xf]
      %v912 = vld [vmem:[%s1 + $0x710] sm:$0xf]
      %v913 = vld [vmem:[%s1 + $0x714] sm:$0xf]
      %v914 = vld [vmem:[%s1 + $0x718] sm:$0xf]
      %v915 = vld [vmem:[%s1 + $0x71c] sm:$0xf]
      %v916 = vld [vmem:[%s1 + $0x720] sm:$0xf]
      %v917 = vld [vmem:[%s1 + $0x724] sm:$0xf]
      %v918 = vld [vmem:[%s1 + $0x728] sm:$0xf]
      %v919 = vld [vmem:[%s1 + $0x72c] sm:$0xf]
      %v920 = vld [vmem:[%s1 + $0x730] sm:$0xf]
      %v921 = vld [vmem:[%s1 + $0x734] sm:$0xf]
      %v922 = vld [vmem:[%s1 + $0x738] sm:$0xf]
      %v923 = vld [vmem:[%s1 + $0x73c] sm:$0xf]
      %v924 = vld [vmem:[%s1 + $0x740] sm:$0xf]
      %v925 = vld [vmem:[%s1 + $0x744] sm:$0xf]
      %v926 = vld [vmem:[%s1 + $0x748] sm:$0xf]
      %v927 = vld [vmem:[%s1 + $0x74c] sm:$0xf]
      %v928 = vld [vmem:[%s1 + $0x750] sm:$0xf]
      %v929 = vld [vmem:[%s1 + $0x754] sm:$0xf]
      %v930 = vld [vmem:[%s1 + $0x758] sm:$0xf]
      %v931 = vld [vmem:[%s1 + $0x75c] sm:$0xf]
      %v932 = vld [vmem:[%s1 + $0x760] sm:$0xf]
      %v933 = vld [vmem:[%s1 + $0x764] sm:$0xf]
      %v934 = vld [vmem:[%s1 + $0x768] sm:$0xf]
      %v935 = vld [vmem:[%s1 + $0x76c] sm:$0xf]
      %v936 = vld [vmem:[%s1 + $0x770] sm:$0xf]
      %v937 = vld [vmem:[%s1 + $0x774] sm:$0xf]
      %v938 = vld [vmem:[%s1 + $0x778] sm:$0xf]
      %v939 = vld [vmem:[%s1 + $0x77c] sm:$0xf]
      %v940 = vld [vmem:[%s1 + $0x780] sm:$0xf]
      %v941 = vld [vmem:[%s1 + $0x784] sm:$0xf]
      %v942 = vld [vmem:[%s1 + $0x788] sm:$0xf]
      %v943 = vld [vmem:[%s1 + $0x78c] sm:$0xf]
      %v944 = vld [vmem:[%s1 + $0x790] sm:$0xf]
      %v945 = vld [vmem:[%s1 + $0x794] sm:$0xf]
      %v946 = vld [vmem:[%s1 + $0x798] sm:$0xf]
      %v947 = vld [vmem:[%s1 + $0x79c] sm:$0xf]
      %v948 = vld [vmem:[%s1 + $0x7a0] sm:$0xf]
      %v949 = vld [vmem:[%s1 + $0x7a4] sm:$0xf]
      %v950 = vld [vmem:[%s1 + $0x7a8] sm:$0xf]
      %v951 = vld [vmem:[%s1 + $0x7ac] sm:$0xf]
      %v952 = vld [vmem:[%s1 + $0x7b0] sm:$0xf]
      %v953 = vld [vmem:[%s1 + $0x7b4] sm:$0xf]
      %v954 = vld [vmem:[%s1 + $0x7b8] sm:$0xf]
      %v955 = vld [vmem:[%s1 + $0x7bc] sm:$0xf]
      %v956 = vld [vmem:[%s1 + $0x7c0] sm:$0xf]
      %v957 = vld [vmem:[%s1 + $0x7c4] sm:$0xf]
      %v958 = vld [vmem:[%s1 + $0x7c8] sm:$0xf]
      %v959 = vld [vmem:[%s1 + $0x7cc] sm:$0xf]
      %v960 = vld [vmem:[%s1 + $0x7d0] sm:$0xf]
      %v961 = vld [vmem:[%s1 + $0x7d4] sm:$0xf]
      %v962 = vld [vmem:[%s1 + $0x7d8] sm:$0xf]
      %v963 = vld [vmem:[%s1 + $0x7dc] sm:$0xf]
      %v964 = vld [vmem:[%s1 + $0x7e0] sm:$0xf]
      %v965 = vld [vmem:[%s1 + $0x7e4] sm:$0xf]
      %v966 = vld [vmem:[%s1 + $0x7e8] sm:$0xf]
      %v967 = vld [vmem:[%s1 + $0x7ec] sm:$0xf]
      %v968 = vld [vmem:[%s1 + $0x7f0] sm:$0xf]
      %v969 = vld [vmem:[%s1 + $0x7f4] sm:$0xf]
      %v970 = vld [vmem:[%s1 + $0x7f8] sm:$0xf]
      %v971 = vld [vmem:[%s1 + $0x7fc] sm:$0xf]
      %v1228 = vunpack.c.l.b16 %v204
      %v1229 = vunpack.c.h.b16 %v204
      %v1230 = vunpack.c.l.b16 %v205
      %v1231 = vunpack.c.h.b16 %v205
      %v1232 = vunpack.c.l.b16 %v206
      %v1233 = vunpack.c.h.b16 %v206
      %v1234 = vunpack.c.l.b16 %v207
      %v1235 = vunpack.c.h.b16 %v207
      %v1236 = vunpack.c.l.b16 %v208
      %v1237 = vunpack.c.h.b16 %v208
      %v1238 = vunpack.c.l.b16 %v209
      %v1239 = vunpack.c.h.b16 %v209
      %v1240 = vunpack.c.l.b16 %v210
      %v1241 = vunpack.c.h.b16 %v210
      %v1242 = vunpack.c.l.b16 %v211
      %v1243 = vunpack.c.h.b16 %v211
      %v1244 = vunpack.c.l.b16 %v212
      %v1245 = vunpack.c.h.b16 %v212
      %v1246 = vunpack.c.l.b16 %v213
      %v1247 = vunpack.c.h.b16 %v213
      %v1248 = vunpack.c.l.b16 %v214
      %v1249 = vunpack.c.h.b16 %v214
      %v1250 = vunpack.c.l.b16 %v215
      %v1251 = vunpack.c.h.b16 %v215
      %v1252 = vunpack.c.l.b16 %v216
      %v1253 = vunpack.c.h.b16 %v216
      %v1254 = vunpack.c.l.b16 %v217
      %v1255 = vunpack.c.h.b16 %v217
      %v1256 = vunpack.c.l.b16 %v218
      %v1257 = vunpack.c.h.b16 %v218
      %v1258 = vunpack.c.l.b16 %v219
      %v1259 = vunpack.c.h.b16 %v219
      %v1260 = vunpack.c.l.b16 %v220
      %v1261 = vunpack.c.h.b16 %v220
      %v1262 = vunpack.c.l.b16 %v221
      %v1263 = vunpack.c.h.b16 %v221
      %v1264 = vunpack.c.l.b16 %v222
      %v1265 = vunpack.c.h.b16 %v222
      %v1266 = vunpack.c.l.b16 %v223
      %v1267 = vunpack.c.h.b16 %v223
      %v1268 = vunpack.c.l.b16 %v224
      %v1269 = vunpack.c.h.b16 %v224
      %v1270 = vunpack.c.l.b16 %v225
      %v1271 = vunpack.c.h.b16 %v225
      %v1272 = vunpack.c.l.b16 %v226
      %v1273 = vunpack.c.h.b16 %v226
      %v1274 = vunpack.c.l.b16 %v227
      %v1275 = vunpack.c.h.b16 %v227
      %v1276 = vunpack.c.l.b16 %v228
      %v1277 = vunpack.c.h.b16 %v228
      %v1278 = vunpack.c.l.b16 %v229
      %v1279 = vunpack.c.h.b16 %v229
      %v1280 = vunpack.c.l.b16 %v230
      %v1281 = vunpack.c.h.b16 %v230
      %v1282 = vunpack.c.l.b16 %v231
      %v1283 = vunpack.c.h.b16 %v231
      %v1284 = vunpack.c.l.b16 %v232
      %v1285 = vunpack.c.h.b16 %v232
      %v1286 = vunpack.c.l.b16 %v233
      %v1287 = vunpack.c.h.b16 %v233
      %v1288 = vunpack.c.l.b16 %v234
      %v1289 = vunpack.c.h.b16 %v234
      %v1290 = vunpack.c.l.b16 %v235
      %v1291 = vunpack.c.h.b16 %v235
      %v1292 = vunpack.c.l.b16 %v236
      %v1293 = vunpack.c.h.b16 %v236
      %v1294 = vunpack.c.l.b16 %v237
      %v1295 = vunpack.c.h.b16 %v237
      %v1296 = vunpack.c.l.b16 %v238
      %v1297 = vunpack.c.h.b16 %v238
      %v1298 = vunpack.c.l.b16 %v239
      %v1299 = vunpack.c.h.b16 %v239
      %v1300 = vunpack.c.l.b16 %v240
      %v1301 = vunpack.c.h.b16 %v240
      %v1302 = vunpack.c.l.b16 %v241
      %v1303 = vunpack.c.h.b16 %v241
      %v1304 = vunpack.c.l.b16 %v242
      %v1305 = vunpack.c.h.b16 %v242
      %v1306 = vunpack.c.l.b16 %v243
      %v1307 = vunpack.c.h.b16 %v243
      %v1308 = vunpack.c.l.b16 %v244
      %v1309 = vunpack.c.h.b16 %v244
      %v1310 = vunpack.c.l.b16 %v245
      %v1311 = vunpack.c.h.b16 %v245
      %v1312 = vunpack.c.l.b16 %v246
      %v1313 = vunpack.c.h.b16 %v246
      %v1314 = vunpack.c.l.b16 %v247
      %v1315 = vunpack.c.h.b16 %v247
      %v1316 = vunpack.c.l.b16 %v248
      %v1317 = vunpack.c.h.b16 %v248
      %v1318 = vunpack.c.l.b16 %v249
      %v1319 = vunpack.c.h.b16 %v249
      %v1320 = vunpack.c.l.b16 %v250
      %v1321 = vunpack.c.h.b16 %v250
      %v1322 = vunpack.c.l.b16 %v251
      %v1323 = vunpack.c.h.b16 %v251
      %v1324 = vunpack.c.l.b16 %v252
      %v1325 = vunpack.c.h.b16 %v252
      %v1326 = vunpack.c.l.b16 %v253
      %v1327 = vunpack.c.h.b16 %v253
      %v1328 = vunpack.c.l.b16 %v254
      %v1329 = vunpack.c.h.b16 %v254
      %v1330 = vunpack.c.l.b16 %v255
      %v1331 = vunpack.c.h.b16 %v255
      %v1332 = vunpack.c.l.b16 %v256
      %v1333 = vunpack.c.h.b16 %v256
      %v1334 = vunpack.c.l.b16 %v257
      %v1335 = vunpack.c.h.b16 %v257
      %v1336 = vunpack.c.l.b16 %v258
      %v1337 = vunpack.c.h.b16 %v258
      %v1338 = vunpack.c.l.b16 %v259
      %v1339 = vunpack.c.h.b16 %v259
      %v1340 = vunpack.c.l.b16 %v260
      %v1341 = vunpack.c.h.b16 %v260
      %v1342 = vunpack.c.l.b16 %v261
      %v1343 = vunpack.c.h.b16 %v261
      %v1344 = vunpack.c.l.b16 %v262
      %v1345 = vunpack.c.h.b16 %v262
      %v1346 = vunpack.c.l.b16 %v263
      %v1347 = vunpack.c.h.b16 %v263
      %v1348 = vunpack.c.l.b16 %v264
      %v1349 = vunpack.c.h.b16 %v264
      %v1350 = vunpack.c.l.b16 %v265
      %v1351 = vunpack.c.h.b16 %v265
      %v1352 = vunpack.c.l.b16 %v266
      %v1353 = vunpack.c.h.b16 %v266
      %v1354 = vunpack.c.l.b16 %v267
      %v1355 = vunpack.c.h.b16 %v267
      %v1356 = vunpack.c.l.b16 %v268
      %v1357 = vunpack.c.h.b16 %v268
      %v1358 = vunpack.c.l.b16 %v269
      %v1359 = vunpack.c.h.b16 %v269
      %v1360 = vunpack.c.l.b16 %v270
      %v1361 = vunpack.c.h.b16 %v270
      %v1362 = vunpack.c.l.b16 %v271
      %v1363 = vunpack.c.h.b16 %v271
      %v1364 = vunpack.c.l.b16 %v272
      %v1365 = vunpack.c.h.b16 %v272
      %v1366 = vunpack.c.l.b16 %v273
      %v1367 = vunpack.c.h.b16 %v273
      %v1368 = vunpack.c.l.b16 %v274
      %v1369 = vunpack.c.h.b16 %v274
      %v1370 = vunpack.c.l.b16 %v275
      %v1371 = vunpack.c.h.b16 %v275
      %v1372 = vunpack.c.l.b16 %v276
      %v1373 = vunpack.c.h.b16 %v276
      %v1374 = vunpack.c.l.b16 %v277
      %v1375 = vunpack.c.h.b16 %v277
      %v1376 = vunpack.c.l.b16 %v278
      %v1377 = vunpack.c.h.b16 %v278
      %v1378 = vunpack.c.l.b16 %v279
      %v1379 = vunpack.c.h.b16 %v279
      %v1380 = vunpack.c.l.b16 %v280
      %v1381 = vunpack.c.h.b16 %v280
      %v1382 = vunpack.c.l.b16 %v281
      %v1383 = vunpack.c.h.b16 %v281
      %v1384 = vunpack.c.l.b16 %v282
      %v1385 = vunpack.c.h.b16 %v282
      %v1386 = vunpack.c.l.b16 %v283
      %v1387 = vunpack.c.h.b16 %v283
      %v1388 = vunpack.c.l.b16 %v284
      %v1389 = vunpack.c.h.b16 %v284
      %v1390 = vunpack.c.l.b16 %v285
      %v1391 = vunpack.c.h.b16 %v285
      %v1392 = vunpack.c.l.b16 %v286
      %v1393 = vunpack.c.h.b16 %v286
      %v1394 = vunpack.c.l.b16 %v287
      %v1395 = vunpack.c.h.b16 %v287
      %v1396 = vunpack.c.l.b16 %v288
      %v1397 = vunpack.c.h.b16 %v288
      %v1398 = vunpack.c.l.b16 %v289
      %v1399 = vunpack.c.h.b16 %v289
      %v1400 = vunpack.c.l.b16 %v290
      %v1401 = vunpack.c.h.b16 %v290
      %v1402 = vunpack.c.l.b16 %v291
      %v1403 = vunpack.c.h.b16 %v291
      %v1404 = vunpack.c.l.b16 %v292
      %v1405 = vunpack.c.h.b16 %v292
      %v1406 = vunpack.c.l.b16 %v293
      %v1407 = vunpack.c.h.b16 %v293
      %v1408 = vunpack.c.l.b16 %v294
      %v1409 = vunpack.c.h.b16 %v294
      %v1410 = vunpack.c.l.b16 %v295
      %v1411 = vunpack.c.h.b16 %v295
      %v1412 = vunpack.c.l.b16 %v296
      %v1413 = vunpack.c.h.b16 %v296
      %v1414 = vunpack.c.l.b16 %v297
      %v1415 = vunpack.c.h.b16 %v297
      %v1416 = vunpack.c.l.b16 %v298
      %v1417 = vunpack.c.h.b16 %v298
      %v1418 = vunpack.c.l.b16 %v299
      %v1419 = vunpack.c.h.b16 %v299
      %v1420 = vunpack.c.l.b16 %v300
      %v1421 = vunpack.c.h.b16 %v300
      %v1422 = vunpack.c.l.b16 %v301
      %v1423 = vunpack.c.h.b16 %v301
      %v1424 = vunpack.c.l.b16 %v302
      %v1425 = vunpack.c.h.b16 %v302
      %v1426 = vunpack.c.l.b16 %v303
      %v1427 = vunpack.c.h.b16 %v303
      %v1428 = vunpack.c.l.b16 %v304
      %v1429 = vunpack.c.h.b16 %v304
      %v1430 = vunpack.c.l.b16 %v305
      %v1431 = vunpack.c.h.b16 %v305
      %v1432 = vunpack.c.l.b16 %v306
      %v1433 = vunpack.c.h.b16 %v306
      %v1434 = vunpack.c.l.b16 %v307
      %v1435 = vunpack.c.h.b16 %v307
      %v1436 = vunpack.c.l.b16 %v308
      %v1437 = vunpack.c.h.b16 %v308
      %v1438 = vunpack.c.l.b16 %v309
      %v1439 = vunpack.c.h.b16 %v309
      %v1440 = vunpack.c.l.b16 %v310
      %v1441 = vunpack.c.h.b16 %v310
      %v1442 = vunpack.c.l.b16 %v311
      %v1443 = vunpack.c.h.b16 %v311
      %v1444 = vunpack.c.l.b16 %v312
      %v1445 = vunpack.c.h.b16 %v312
      %v1446 = vunpack.c.l.b16 %v313
      %v1447 = vunpack.c.h.b16 %v313
      %v1448 = vunpack.c.l.b16 %v314
      %v1449 = vunpack.c.h.b16 %v314
      %v1450 = vunpack.c.l.b16 %v315
      %v1451 = vunpack.c.h.b16 %v315
      %v1452 = vunpack.c.l.b16 %v316
      %v1453 = vunpack.c.h.b16 %v316
      %v1454 = vunpack.c.l.b16 %v317
      %v1455 = vunpack.c.h.b16 %v317
      %v1456 = vunpack.c.l.b16 %v318
      %v1457 = vunpack.c.h.b16 %v318
      %v1458 = vunpack.c.l.b16 %v319
      %v1459 = vunpack.c.h.b16 %v319
      %v1460 = vunpack.c.l.b16 %v320
      %v1461 = vunpack.c.h.b16 %v320
      %v1462 = vunpack.c.l.b16 %v321
      %v1463 = vunpack.c.h.b16 %v321
      %v1464 = vunpack.c.l.b16 %v322
      %v1465 = vunpack.c.h.b16 %v322
      %v1466 = vunpack.c.l.b16 %v323
      %v1467 = vunpack.c.h.b16 %v323
      %v1468 = vunpack.c.l.b16 %v324
      %v1469 = vunpack.c.h.b16 %v324
      %v1470 = vunpack.c.l.b16 %v325
      %v1471 = vunpack.c.h.b16 %v325
      %v1472 = vunpack.c.l.b16 %v326
      %v1473 = vunpack.c.h.b16 %v326
      %v1474 = vunpack.c.l.b16 %v327
      %v1475 = vunpack.c.h.b16 %v327
      %v1476 = vunpack.c.l.b16 %v328
      %v1477 = vunpack.c.h.b16 %v328
      %v1478 = vunpack.c.l.b16 %v329
      %v1479 = vunpack.c.h.b16 %v329
      %v1480 = vunpack.c.l.b16 %v330
      %v1481 = vunpack.c.h.b16 %v330
      %v1482 = vunpack.c.l.b16 %v331
      %v1483 = vunpack.c.h.b16 %v331
      %v1484 = vunpack.c.l.b16 %v332
      %v1485 = vunpack.c.h.b16 %v332
      %v1486 = vunpack.c.l.b16 %v333
      %v1487 = vunpack.c.h.b16 %v333
      %v1488 = vunpack.c.l.b16 %v334
      %v1489 = vunpack.c.h.b16 %v334
      %v1490 = vunpack.c.l.b16 %v335
      %v1491 = vunpack.c.h.b16 %v335
      %v1492 = vunpack.c.l.b16 %v336
      %v1493 = vunpack.c.h.b16 %v336
      %v1494 = vunpack.c.l.b16 %v337
      %v1495 = vunpack.c.h.b16 %v337
      %v1496 = vunpack.c.l.b16 %v338
      %v1497 = vunpack.c.h.b16 %v338
      %v1498 = vunpack.c.l.b16 %v339
      %v1499 = vunpack.c.h.b16 %v339
      %v1500 = vunpack.c.l.b16 %v340
      %v1501 = vunpack.c.h.b16 %v340
      %v1502 = vunpack.c.l.b16 %v341
      %v1503 = vunpack.c.h.b16 %v341
      %v1504 = vunpack.c.l.b16 %v342
      %v1505 = vunpack.c.h.b16 %v342
      %v1506 = vunpack.c.l.b16 %v343
      %v1507 = vunpack.c.h.b16 %v343
      %v1508 = vunpack.c.l.b16 %v344
      %v1509 = vunpack.c.h.b16 %v344
      %v1510 = vunpack.c.l.b16 %v345
      %v1511 = vunpack.c.h.b16 %v345
      %v1512 = vunpack.c.l.b16 %v346
      %v1513 = vunpack.c.h.b16 %v346
      %v1514 = vunpack.c.l.b16 %v347
      %v1515 = vunpack.c.h.b16 %v347
      %v1516 = vunpack.c.l.b16 %v348
      %v1517 = vunpack.c.h.b16 %v348
      %v1518 = vunpack.c.l.b16 %v349
      %v1519 = vunpack.c.h.b16 %v349
      %v1520 = vunpack.c.l.b16 %v350
      %v1521 = vunpack.c.h.b16 %v350
      %v1522 = vunpack.c.l.b16 %v351
      %v1523 = vunpack.c.h.b16 %v351
      %v1524 = vunpack.c.l.b16 %v352
      %v1525 = vunpack.c.h.b16 %v352
      %v1526 = vunpack.c.l.b16 %v353
      %v1527 = vunpack.c.h.b16 %v353
      %v1528 = vunpack.c.l.b16 %v354
      %v1529 = vunpack.c.h.b16 %v354
      %v1530 = vunpack.c.l.b16 %v355
      %v1531 = vunpack.c.h.b16 %v355
      %v1532 = vunpack.c.l.b16 %v356
      %v1533 = vunpack.c.h.b16 %v356
      %v1534 = vunpack.c.l.b16 %v357
      %v1535 = vunpack.c.h.b16 %v357
      %v1536 = vunpack.c.l.b16 %v358
      %v1537 = vunpack.c.h.b16 %v358
      %v1538 = vunpack.c.l.b16 %v359
      %v1539 = vunpack.c.h.b16 %v359
      %v1540 = vunpack.c.l.b16 %v360
      %v1541 = vunpack.c.h.b16 %v360
      %v1542 = vunpack.c.l.b16 %v361
      %v1543 = vunpack.c.h.b16 %v361
      %v1544 = vunpack.c.l.b16 %v362
      %v1545 = vunpack.c.h.b16 %v362
      %v1546 = vunpack.c.l.b16 %v363
      %v1547 = vunpack.c.h.b16 %v363
      %v1548 = vunpack.c.l.b16 %v364
      %v1549 = vunpack.c.h.b16 %v364
      %v1550 = vunpack.c.l.b16 %v365
      %v1551 = vunpack.c.h.b16 %v365
      %v1552 = vunpack.c.l.b16 %v366
      %v1553 = vunpack.c.h.b16 %v366
      %v1554 = vunpack.c.l.b16 %v367
      %v1555 = vunpack.c.h.b16 %v367
      %v1556 = vunpack.c.l.b16 %v368
      %v1557 = vunpack.c.h.b16 %v368
      %v1558 = vunpack.c.l.b16 %v369
      %v1559 = vunpack.c.h.b16 %v369
      %v1560 = vunpack.c.l.b16 %v370
      %v1561 = vunpack.c.h.b16 %v370
      %v1562 = vunpack.c.l.b16 %v371
      %v1563 = vunpack.c.h.b16 %v371
      %v1564 = vunpack.c.l.b16 %v372
      %v1565 = vunpack.c.h.b16 %v372
      %v1566 = vunpack.c.l.b16 %v373
      %v1567 = vunpack.c.h.b16 %v373
      %v1568 = vunpack.c.l.b16 %v374
      %v1569 = vunpack.c.h.b16 %v374
      %v1570 = vunpack.c.l.b16 %v375
      %v1571 = vunpack.c.h.b16 %v375
      %v1572 = vunpack.c.l.b16 %v376
      %v1573 = vunpack.c.h.b16 %v376
      %v1574 = vunpack.c.l.b16 %v377
      %v1575 = vunpack.c.h.b16 %v377
      %v1576 = vunpack.c.l.b16 %v378
      %v1577 = vunpack.c.h.b16 %v378
      %v1578 = vunpack.c.l.b16 %v379
      %v1579 = vunpack.c.h.b16 %v379
      %v1580 = vunpack.c.l.b16 %v380
      %v1581 = vunpack.c.h.b16 %v380
      %v1582 = vunpack.c.l.b16 %v381
      %v1583 = vunpack.c.h.b16 %v381
      %v1584 = vunpack.c.l.b16 %v382
      %v1585 = vunpack.c.h.b16 %v382
      %v1586 = vunpack.c.l.b16 %v383
      %v1587 = vunpack.c.h.b16 %v383
      %v1588 = vunpack.c.l.b16 %v384
      %v1589 = vunpack.c.h.b16 %v384
      %v1590 = vunpack.c.l.b16 %v385
      %v1591 = vunpack.c.h.b16 %v385
      %v1592 = vunpack.c.l.b16 %v386
      %v1593 = vunpack.c.h.b16 %v386
      %v1594 = vunpack.c.l.b16 %v387
      %v1595 = vunpack.c.h.b16 %v387
      %v1596 = vunpack.c.l.b16 %v388
      %v1597 = vunpack.c.h.b16 %v388
      %v1598 = vunpack.c.l.b16 %v389
      %v1599 = vunpack.c.h.b16 %v389
      %v1600 = vunpack.c.l.b16 %v390
      %v1601 = vunpack.c.h.b16 %v390
      %v1602 = vunpack.c.l.b16 %v391
      %v1603 = vunpack.c.h.b16 %v391
      %v1604 = vunpack.c.l.b16 %v392
      %v1605 = vunpack.c.h.b16 %v392
      %v1606 = vunpack.c.l.b16 %v393
      %v1607 = vunpack.c.h.b16 %v393
      %v1608 = vunpack.c.l.b16 %v394
      %v1609 = vunpack.c.h.b16 %v394
      %v1610 = vunpack.c.l.b16 %v395
      %v1611 = vunpack.c.h.b16 %v395
      %v1612 = vunpack.c.l.b16 %v396
      %v1613 = vunpack.c.h.b16 %v396
      %v1614 = vunpack.c.l.b16 %v397
      %v1615 = vunpack.c.h.b16 %v397
      %v1616 = vunpack.c.l.b16 %v398
      %v1617 = vunpack.c.h.b16 %v398
      %v1618 = vunpack.c.l.b16 %v399
      %v1619 = vunpack.c.h.b16 %v399
      %v1620 = vunpack.c.l.b16 %v400
      %v1621 = vunpack.c.h.b16 %v400
      %v1622 = vunpack.c.l.b16 %v401
      %v1623 = vunpack.c.h.b16 %v401
      %v1624 = vunpack.c.l.b16 %v402
      %v1625 = vunpack.c.h.b16 %v402
      %v1626 = vunpack.c.l.b16 %v403
      %v1627 = vunpack.c.h.b16 %v403
      %v1628 = vunpack.c.l.b16 %v404
      %v1629 = vunpack.c.h.b16 %v404
      %v1630 = vunpack.c.l.b16 %v405
      %v1631 = vunpack.c.h.b16 %v405
      %v1632 = vunpack.c.l.b16 %v406
      %v1633 = vunpack.c.h.b16 %v406
      %v1634 = vunpack.c.l.b16 %v407
      %v1635 = vunpack.c.h.b16 %v407
      %v1636 = vunpack.c.l.b16 %v408
      %v1637 = vunpack.c.h.b16 %v408
      %v1638 = vunpack.c.l.b16 %v409
      %v1639 = vunpack.c.h.b16 %v409
      %v1640 = vunpack.c.l.b16 %v410
      %v1641 = vunpack.c.h.b16 %v410
      %v1642 = vunpack.c.l.b16 %v411
      %v1643 = vunpack.c.h.b16 %v411
      %v1644 = vunpack.c.l.b16 %v412
      %v1645 = vunpack.c.h.b16 %v412
      %v1646 = vunpack.c.l.b16 %v413
      %v1647 = vunpack.c.h.b16 %v413
      %v1648 = vunpack.c.l.b16 %v414
      %v1649 = vunpack.c.h.b16 %v414
      %v1650 = vunpack.c.l.b16 %v415
      %v1651 = vunpack.c.h.b16 %v415
      %v1652 = vunpack.c.l.b16 %v416
      %v1653 = vunpack.c.h.b16 %v416
      %v1654 = vunpack.c.l.b16 %v417
      %v1655 = vunpack.c.h.b16 %v417
      %v1656 = vunpack.c.l.b16 %v418
      %v1657 = vunpack.c.h.b16 %v418
      %v1658 = vunpack.c.l.b16 %v419
      %v1659 = vunpack.c.h.b16 %v419
      %v1660 = vunpack.c.l.b16 %v420
      %v1661 = vunpack.c.h.b16 %v420
      %v1662 = vunpack.c.l.b16 %v421
      %v1663 = vunpack.c.h.b16 %v421
      %v1664 = vunpack.c.l.b16 %v422
      %v1665 = vunpack.c.h.b16 %v422
      %v1666 = vunpack.c.l.b16 %v423
      %v1667 = vunpack.c.h.b16 %v423
      %v1668 = vunpack.c.l.b16 %v424
      %v1669 = vunpack.c.h.b16 %v424
      %v1670 = vunpack.c.l.b16 %v425
      %v1671 = vunpack.c.h.b16 %v425
      %v1672 = vunpack.c.l.b16 %v426
      %v1673 = vunpack.c.h.b16 %v426
      %v1674 = vunpack.c.l.b16 %v427
      %v1675 = vunpack.c.h.b16 %v427
      %v1676 = vunpack.c.l.b16 %v428
      %v1677 = vunpack.c.h.b16 %v428
      %v1678 = vunpack.c.l.b16 %v429
      %v1679 = vunpack.c.h.b16 %v429
      %v1680 = vunpack.c.l.b16 %v430
      %v1681 = vunpack.c.h.b16 %v430
      %v1682 = vunpack.c.l.b16 %v431
      %v1683 = vunpack.c.h.b16 %v431
      %v1684 = vunpack.c.l.b16 %v432
      %v1685 = vunpack.c.h.b16 %v432
      %v1686 = vunpack.c.l.b16 %v433
      %v1687 = vunpack.c.h.b16 %v433
      %v1688 = vunpack.c.l.b16 %v434
      %v1689 = vunpack.c.h.b16 %v434
      %v1690 = vunpack.c.l.b16 %v435
      %v1691 = vunpack.c.h.b16 %v435
      %v1692 = vunpack.c.l.b16 %v436
      %v1693 = vunpack.c.h.b16 %v436
      %v1694 = vunpack.c.l.b16 %v437
      %v1695 = vunpack.c.h.b16 %v437
      %v1696 = vunpack.c.l.b16 %v438
      %v1697 = vunpack.c.h.b16 %v438
      %v1698 = vunpack.c.l.b16 %v439
      %v1699 = vunpack.c.h.b16 %v439
      %v1700 = vunpack.c.l.b16 %v440
      %v1701 = vunpack.c.h.b16 %v440
      %v1702 = vunpack.c.l.b16 %v441
      %v1703 = vunpack.c.h.b16 %v441
      %v1704 = vunpack.c.l.b16 %v442
      %v1705 = vunpack.c.h.b16 %v442
      %v1706 = vunpack.c.l.b16 %v443
      %v1707 = vunpack.c.h.b16 %v443
      %v1708 = vunpack.c.l.b16 %v444
      %v1709 = vunpack.c.h.b16 %v444
      %v1710 = vunpack.c.l.b16 %v445
      %v1711 = vunpack.c.h.b16 %v445
      %v1712 = vunpack.c.l.b16 %v446
      %v1713 = vunpack.c.h.b16 %v446
      %v1714 = vunpack.c.l.b16 %v447
      %v1715 = vunpack.c.h.b16 %v447
      %v1716 = vunpack.c.l.b16 %v448
      %v1717 = vunpack.c.h.b16 %v448
      %v1718 = vunpack.c.l.b16 %v449
      %v1719 = vunpack.c.h.b16 %v449
      %v1720 = vunpack.c.l.b16 %v450
      %v1721 = vunpack.c.h.b16 %v450
      %v1722 = vunpack.c.l.b16 %v451
      %v1723 = vunpack.c.h.b16 %v451
      %v1724 = vunpack.c.l.b16 %v452
      %v1725 = vunpack.c.h.b16 %v452
      %v1726 = vunpack.c.l.b16 %v453
      %v1727 = vunpack.c.h.b16 %v453
      %v1728 = vunpack.c.l.b16 %v454
      %v1729 = vunpack.c.h.b16 %v454
      %v1730 = vunpack.c.l.b16 %v455
      %v1731 = vunpack.c.h.b16 %v455
      %v1732 = vunpack.c.l.b16 %v456
      %v1733 = vunpack.c.h.b16 %v456
      %v1734 = vunpack.c.l.b16 %v457
      %v1735 = vunpack.c.h.b16 %v457
      %v1736 = vunpack.c.l.b16 %v458
      %v1737 = vunpack.c.h.b16 %v458
      %v1738 = vunpack.c.l.b16 %v459
      %v1739 = vunpack.c.h.b16 %v459
      %v1740 = vpack.c.b16 %v1260, %v1228
      %v1741 = vpack.c.b16 %v1261, %v1229
      %v1742 = vpack.c.b16 %v1262, %v1230
      %v1743 = vpack.c.b16 %v1263, %v1231
      %v1744 = vpack.c.b16 %v1264, %v1232
      %v1745 = vpack.c.b16 %v1265, %v1233
      %v1746 = vpack.c.b16 %v1266, %v1234
      %v1747 = vpack.c.b16 %v1267, %v1235
      %v1748 = vpack.c.b16 %v1268, %v1236
      %v1749 = vpack.c.b16 %v1269, %v1237
      %v1750 = vpack.c.b16 %v1270, %v1238
      %v1751 = vpack.c.b16 %v1271, %v1239
      %v1752 = vpack.c.b16 %v1272, %v1240
      %v1753 = vpack.c.b16 %v1273, %v1241
      %v1754 = vpack.c.b16 %v1274, %v1242
      %v1755 = vpack.c.b16 %v1275, %v1243
      %v1756 = vpack.c.b16 %v1276, %v1244
      %v1757 = vpack.c.b16 %v1277, %v1245
      %v1758 = vpack.c.b16 %v1278, %v1246
      %v1759 = vpack.c.b16 %v1279, %v1247
      %v1760 = vpack.c.b16 %v1280, %v1248
      %v1761 = vpack.c.b16 %v1281, %v1249
      %v1762 = vpack.c.b16 %v1282, %v1250
      %v1763 = vpack.c.b16 %v1283, %v1251
      %v1764 = vpack.c.b16 %v1284, %v1252
      %v1765 = vpack.c.b16 %v1285, %v1253
      %v1766 = vpack.c.b16 %v1286, %v1254
      %v1767 = vpack.c.b16 %v1287, %v1255
      %v1768 = vpack.c.b16 %v1288, %v1256
      %v1769 = vpack.c.b16 %v1289, %v1257
      %v1770 = vpack.c.b16 %v1290, %v1258
      %v1771 = vpack.c.b16 %v1291, %v1259
      %v1772 = vpack.c.b16 %v1324, %v1292
      %v1773 = vpack.c.b16 %v1325, %v1293
      %v1774 = vpack.c.b16 %v1326, %v1294
      %v1775 = vpack.c.b16 %v1327, %v1295
      %v1776 = vpack.c.b16 %v1328, %v1296
      %v1777 = vpack.c.b16 %v1329, %v1297
      %v1778 = vpack.c.b16 %v1330, %v1298
      %v1779 = vpack.c.b16 %v1331, %v1299
      %v1780 = vpack.c.b16 %v1332, %v1300
      %v1781 = vpack.c.b16 %v1333, %v1301
      %v1782 = vpack.c.b16 %v1334, %v1302
      %v1783 = vpack.c.b16 %v1335, %v1303
      %v1784 = vpack.c.b16 %v1336, %v1304
      %v1785 = vpack.c.b16 %v1337, %v1305
      %v1786 = vpack.c.b16 %v1338, %v1306
      %v1787 = vpack.c.b16 %v1339, %v1307
      %v1788 = vpack.c.b16 %v1340, %v1308
      %v1789 = vpack.c.b16 %v1341, %v1309
      %v1790 = vpack.c.b16 %v1342, %v1310
      %v1791 = vpack.c.b16 %v1343, %v1311
      %v1792 = vpack.c.b16 %v1344, %v1312
      %v1793 = vpack.c.b16 %v1345, %v1313
      %v1794 = vpack.c.b16 %v1346, %v1314
      %v1795 = vpack.c.b16 %v1347, %v1315
      %v1796 = vpack.c.b16 %v1348, %v1316
      %v1797 = vpack.c.b16 %v1349, %v1317
      %v1798 = vpack.c.b16 %v1350, %v1318
      %v1799 = vpack.c.b16 %v1351, %v1319
      %v1800 = vpack.c.b16 %v1352, %v1320
      %v1801 = vpack.c.b16 %v1353, %v1321
      %v1802 = vpack.c.b16 %v1354, %v1322
      %v1803 = vpack.c.b16 %v1355, %v1323
      %v1804 = vpack.c.b16 %v1388, %v1356
      %v1805 = vpack.c.b16 %v1389, %v1357
      %v1806 = vpack.c.b16 %v1390, %v1358
      %v1807 = vpack.c.b16 %v1391, %v1359
      %v1808 = vpack.c.b16 %v1392, %v1360
      %v1809 = vpack.c.b16 %v1393, %v1361
      %v1810 = vpack.c.b16 %v1394, %v1362
      %v1811 = vpack.c.b16 %v1395, %v1363
      %v1812 = vpack.c.b16 %v1396, %v1364
      %v1813 = vpack.c.b16 %v1397, %v1365
      %v1814 = vpack.c.b16 %v1398, %v1366
      %v1815 = vpack.c.b16 %v1399, %v1367
      %v1816 = vpack.c.b16 %v1400, %v1368
      %v1817 = vpack.c.b16 %v1401, %v1369
      %v1818 = vpack.c.b16 %v1402, %v1370
      %v1819 = vpack.c.b16 %v1403, %v1371
      %v1820 = vpack.c.b16 %v1404, %v1372
      %v1821 = vpack.c.b16 %v1405, %v1373
      %v1822 = vpack.c.b16 %v1406, %v1374
      %v1823 = vpack.c.b16 %v1407, %v1375
      %v1824 = vpack.c.b16 %v1408, %v1376
      %v1825 = vpack.c.b16 %v1409, %v1377
      %v1826 = vpack.c.b16 %v1410, %v1378
      %v1827 = vpack.c.b16 %v1411, %v1379
      %v1828 = vpack.c.b16 %v1412, %v1380
      %v1829 = vpack.c.b16 %v1413, %v1381
      %v1830 = vpack.c.b16 %v1414, %v1382
      %v1831 = vpack.c.b16 %v1415, %v1383
      %v1832 = vpack.c.b16 %v1416, %v1384
      %v1833 = vpack.c.b16 %v1417, %v1385
      %v1834 = vpack.c.b16 %v1418, %v1386
      %v1835 = vpack.c.b16 %v1419, %v1387
      %v1836 = vpack.c.b16 %v1452, %v1420
      %v1837 = vpack.c.b16 %v1453, %v1421
      %v1838 = vpack.c.b16 %v1454, %v1422
      %v1839 = vpack.c.b16 %v1455, %v1423
      %v1840 = vpack.c.b16 %v1456, %v1424
      %v1841 = vpack.c.b16 %v1457, %v1425
      %v1842 = vpack.c.b16 %v1458, %v1426
      %v1843 = vpack.c.b16 %v1459, %v1427
      %v1844 = vpack.c.b16 %v1460, %v1428
      %v1845 = vpack.c.b16 %v1461, %v1429
      %v1846 = vpack.c.b16 %v1462, %v1430
      %v1847 = vpack.c.b16 %v1463, %v1431
      %v1848 = vpack.c.b16 %v1464, %v1432
      %v1849 = vpack.c.b16 %v1465, %v1433
      %v1850 = vpack.c.b16 %v1466, %v1434
      %v1851 = vpack.c.b16 %v1467, %v1435
      %v1852 = vpack.c.b16 %v1468, %v1436
      %v1853 = vpack.c.b16 %v1469, %v1437
      %v1854 = vpack.c.b16 %v1470, %v1438
      %v1855 = vpack.c.b16 %v1471, %v1439
      %v1856 = vpack.c.b16 %v1472, %v1440
      %v1857 = vpack.c.b16 %v1473, %v1441
      %v1858 = vpack.c.b16 %v1474, %v1442
      %v1859 = vpack.c.b16 %v1475, %v1443
      %v1860 = vpack.c.b16 %v1476, %v1444
      %v1861 = vpack.c.b16 %v1477, %v1445
      %v1862 = vpack.c.b16 %v1478, %v1446
      %v1863 = vpack.c.b16 %v1479, %v1447
      %v1864 = vpack.c.b16 %v1480, %v1448
      %v1865 = vpack.c.b16 %v1481, %v1449
      %v1866 = vpack.c.b16 %v1482, %v1450
      %v1867 = vpack.c.b16 %v1483, %v1451
      %v1868 = vpack.c.b16 %v1516, %v1484
      %v1869 = vpack.c.b16 %v1517, %v1485
      %v1870 = vpack.c.b16 %v1518, %v1486
      %v1871 = vpack.c.b16 %v1519, %v1487
      %v1872 = vpack.c.b16 %v1520, %v1488
      %v1873 = vpack.c.b16 %v1521, %v1489
      %v1874 = vpack.c.b16 %v1522, %v1490
      %v1875 = vpack.c.b16 %v1523, %v1491
      %v1876 = vpack.c.b16 %v1524, %v1492
      %v1877 = vpack.c.b16 %v1525, %v1493
      %v1878 = vpack.c.b16 %v1526, %v1494
      %v1879 = vpack.c.b16 %v1527, %v1495
      %v1880 = vpack.c.b16 %v1528, %v1496
      %v1881 = vpack.c.b16 %v1529, %v1497
      %v1882 = vpack.c.b16 %v1530, %v1498
      %v1883 = vpack.c.b16 %v1531, %v1499
      %v1884 = vpack.c.b16 %v1532, %v1500
      %v1885 = vpack.c.b16 %v1533, %v1501
      %v1886 = vpack.c.b16 %v1534, %v1502
      %v1887 = vpack.c.b16 %v1535, %v1503
      %v1888 = vpack.c.b16 %v1536, %v1504
      %v1889 = vpack.c.b16 %v1537, %v1505
      %v1890 = vpack.c.b16 %v1538, %v1506
      %v1891 = vpack.c.b16 %v1539, %v1507
      %v1892 = vpack.c.b16 %v1540, %v1508
      %v1893 = vpack.c.b16 %v1541, %v1509
      %v1894 = vpack.c.b16 %v1542, %v1510
      %v1895 = vpack.c.b16 %v1543, %v1511
      %v1896 = vpack.c.b16 %v1544, %v1512
      %v1897 = vpack.c.b16 %v1545, %v1513
      %v1898 = vpack.c.b16 %v1546, %v1514
      %v1899 = vpack.c.b16 %v1547, %v1515
      %v1900 = vpack.c.b16 %v1580, %v1548
      %v1901 = vpack.c.b16 %v1581, %v1549
      %v1902 = vpack.c.b16 %v1582, %v1550
      %v1903 = vpack.c.b16 %v1583, %v1551
      %v1904 = vpack.c.b16 %v1584, %v1552
      %v1905 = vpack.c.b16 %v1585, %v1553
      %v1906 = vpack.c.b16 %v1586, %v1554
      %v1907 = vpack.c.b16 %v1587, %v1555
      %v1908 = vpack.c.b16 %v1588, %v1556
      %v1909 = vpack.c.b16 %v1589, %v1557
      %v1910 = vpack.c.b16 %v1590, %v1558
      %v1911 = vpack.c.b16 %v1591, %v1559
      %v1912 = vpack.c.b16 %v1592, %v1560
      %v1913 = vpack.c.b16 %v1593, %v1561
      %v1914 = vpack.c.b16 %v1594, %v1562
      %v1915 = vpack.c.b16 %v1595, %v1563
      %v1916 = vpack.c.b16 %v1596, %v1564
      %v1917 = vpack.c.b16 %v1597, %v1565
      %v1918 = vpack.c.b16 %v1598, %v1566
      %v1919 = vpack.c.b16 %v1599, %v1567
      %v1920 = vpack.c.b16 %v1600, %v1568
      %v1921 = vpack.c.b16 %v1601, %v1569
      %v1922 = vpack.c.b16 %v1602, %v1570
      %v1923 = vpack.c.b16 %v1603, %v1571
      %v1924 = vpack.c.b16 %v1604, %v1572
      %v1925 = vpack.c.b16 %v1605, %v1573
      %v1926 = vpack.c.b16 %v1606, %v1574
      %v1927 = vpack.c.b16 %v1607, %v1575
      %v1928 = vpack.c.b16 %v1608, %v1576
      %v1929 = vpack.c.b16 %v1609, %v1577
      %v1930 = vpack.c.b16 %v1610, %v1578
      %v1931 = vpack.c.b16 %v1611, %v1579
      %v1932 = vpack.c.b16 %v1644, %v1612
      %v1933 = vpack.c.b16 %v1645, %v1613
      %v1934 = vpack.c.b16 %v1646, %v1614
      %v1935 = vpack.c.b16 %v1647, %v1615
      %v1936 = vpack.c.b16 %v1648, %v1616
      %v1937 = vpack.c.b16 %v1649, %v1617
      %v1938 = vpack.c.b16 %v1650, %v1618
      %v1939 = vpack.c.b16 %v1651, %v1619
      %v1940 = vpack.c.b16 %v1652, %v1620
      %v1941 = vpack.c.b16 %v1653, %v1621
      %v1942 = vpack.c.b16 %v1654, %v1622
      %v1943 = vpack.c.b16 %v1655, %v1623
      %v1944 = vpack.c.b16 %v1656, %v1624
      %v1945 = vpack.c.b16 %v1657, %v1625
      %v1946 = vpack.c.b16 %v1658, %v1626
      %v1947 = vpack.c.b16 %v1659, %v1627
      %v1948 = vpack.c.b16 %v1660, %v1628
      %v1949 = vpack.c.b16 %v1661, %v1629
      %v1950 = vpack.c.b16 %v1662, %v1630
      %v1951 = vpack.c.b16 %v1663, %v1631
      %v1952 = vpack.c.b16 %v1664, %v1632
      %v1953 = vpack.c.b16 %v1665, %v1633
      %v1954 = vpack.c.b16 %v1666, %v1634
      %v1955 = vpack.c.b16 %v1667, %v1635
      %v1956 = vpack.c.b16 %v1668, %v1636
      %v1957 = vpack.c.b16 %v1669, %v1637
      %v1958 = vpack.c.b16 %v1670, %v1638
      %v1959 = vpack.c.b16 %v1671, %v1639
      %v1960 = vpack.c.b16 %v1672, %v1640
      %v1961 = vpack.c.b16 %v1673, %v1641
      %v1962 = vpack.c.b16 %v1674, %v1642
      %v1963 = vpack.c.b16 %v1675, %v1643
      %v1964 = vpack.c.b16 %v1708, %v1676
      %v1965 = vpack.c.b16 %v1709, %v1677
      %v1966 = vpack.c.b16 %v1710, %v1678
      %v1967 = vpack.c.b16 %v1711, %v1679
      %v1968 = vpack.c.b16 %v1712, %v1680
      %v1969 = vpack.c.b16 %v1713, %v1681
      %v1970 = vpack.c.b16 %v1714, %v1682
      %v1971 = vpack.c.b16 %v1715, %v1683
      %v1972 = vpack.c.b16 %v1716, %v1684
      %v1973 = vpack.c.b16 %v1717, %v1685
      %v1974 = vpack.c.b16 %v1718, %v1686
      %v1975 = vpack.c.b16 %v1719, %v1687
      %v1976 = vpack.c.b16 %v1720, %v1688
      %v1977 = vpack.c.b16 %v1721, %v1689
      %v1978 = vpack.c.b16 %v1722, %v1690
      %v1979 = vpack.c.b16 %v1723, %v1691
      %v1980 = vpack.c.b16 %v1724, %v1692
      %v1981 = vpack.c.b16 %v1725, %v1693
      %v1982 = vpack.c.b16 %v1726, %v1694
      %v1983 = vpack.c.b16 %v1727, %v1695
      %v1984 = vpack.c.b16 %v1728, %v1696
      %v1985 = vpack.c.b16 %v1729, %v1697
      %v1986 = vpack.c.b16 %v1730, %v1698
      %v1987 = vpack.c.b16 %v1731, %v1699
      %v1988 = vpack.c.b16 %v1732, %v1700
      %v1989 = vpack.c.b16 %v1733, %v1701
      %v1990 = vpack.c.b16 %v1734, %v1702
      %v1991 = vpack.c.b16 %v1735, %v1703
      %v1992 = vpack.c.b16 %v1736, %v1704
      %v1993 = vpack.c.b16 %v1737, %v1705
      %v1994 = vpack.c.b16 %v1738, %v1706
      %v1995 = vpack.c.b16 %v1739, %v1707
      %v2764 = vunpack.c.l.b16 %v460
      %v2765 = vunpack.c.l.b16 %v461
      %v2766 = vunpack.c.l.b16 %v462
      %v2767 = vunpack.c.l.b16 %v463
      %v2768 = vunpack.c.l.b16 %v464
      %v2769 = vunpack.c.l.b16 %v465
      %v2770 = vunpack.c.l.b16 %v466
      %v2771 = vunpack.c.l.b16 %v467
      %v2772 = vunpack.c.l.b16 %v468
      %v2773 = vunpack.c.l.b16 %v469
      %v2774 = vunpack.c.l.b16 %v470
      %v2775 = vunpack.c.l.b16 %v471
      %v2776 = vunpack.c.l.b16 %v472
      %v2777 = vunpack.c.l.b16 %v473
      %v2778 = vunpack.c.l.b16 %v474
      %v2779 = vunpack.c.l.b16 %v475
      %v2780 = vunpack.c.l.b16 %v476
      %v2781 = vunpack.c.l.b16 %v477
      %v2782 = vunpack.c.l.b16 %v478
      %v2783 = vunpack.c.l.b16 %v479
      %v2784 = vunpack.c.l.b16 %v480
      %v2785 = vunpack.c.l.b16 %v481
      %v2786 = vunpack.c.l.b16 %v482
      %v2787 = vunpack.c.l.b16 %v483
      %v2788 = vunpack.c.l.b16 %v484
      %v2789 = vunpack.c.l.b16 %v485
      %v2790 = vunpack.c.l.b16 %v486
      %v2791 = vunpack.c.l.b16 %v487
      %v2792 = vunpack.c.l.b16 %v488
      %v2793 = vunpack.c.l.b16 %v489
      %v2794 = vunpack.c.l.b16 %v490
      %v2795 = vunpack.c.l.b16 %v491
      %v2796 = vunpack.c.l.b16 %v492
      %v2797 = vunpack.c.l.b16 %v493
      %v2798 = vunpack.c.l.b16 %v494
      %v2799 = vunpack.c.l.b16 %v495
      %v2800 = vunpack.c.l.b16 %v496
      %v2801 = vunpack.c.l.b16 %v497
      %v2802 = vunpack.c.l.b16 %v498
      %v2803 = vunpack.c.l.b16 %v499
      %v2804 = vunpack.c.l.b16 %v500
      %v2805 = vunpack.c.l.b16 %v501
      %v2806 = vunpack.c.l.b16 %v502
      %v2807 = vunpack.c.l.b16 %v503
      %v2808 = vunpack.c.l.b16 %v504
      %v2809 = vunpack.c.l.b16 %v505
      %v2810 = vunpack.c.l.b16 %v506
      %v2811 = vunpack.c.l.b16 %v507
      %v2812 = vunpack.c.l.b16 %v508
      %v2813 = vunpack.c.l.b16 %v509
      %v2814 = vunpack.c.l.b16 %v510
      %v2815 = vunpack.c.l.b16 %v511
      %v2816 = vunpack.c.l.b16 %v512
      %v2817 = vunpack.c.l.b16 %v513
      %v2818 = vunpack.c.l.b16 %v514
      %v2819 = vunpack.c.l.b16 %v515
      %v2820 = vunpack.c.l.b16 %v516
      %v2821 = vunpack.c.l.b16 %v517
      %v2822 = vunpack.c.l.b16 %v518
      %v2823 = vunpack.c.l.b16 %v519
      %v2824 = vunpack.c.l.b16 %v520
      %v2825 = vunpack.c.l.b16 %v521
      %v2826 = vunpack.c.l.b16 %v522
      %v2827 = vunpack.c.l.b16 %v523
      %v2828 = vunpack.c.l.b16 %v524
      %v2829 = vunpack.c.l.b16 %v525
      %v2830 = vunpack.c.l.b16 %v526
      %v2831 = vunpack.c.l.b16 %v527
      %v2832 = vunpack.c.l.b16 %v528
      %v2833 = vunpack.c.l.b16 %v529
      %v2834 = vunpack.c.l.b16 %v530
      %v2835 = vunpack.c.l.b16 %v531
      %v2836 = vunpack.c.l.b16 %v532
      %v2837 = vunpack.c.l.b16 %v533
      %v2838 = vunpack.c.l.b16 %v534
      %v2839 = vunpack.c.l.b16 %v535
      %v2840 = vunpack.c.l.b16 %v536
      %v2841 = vunpack.c.l.b16 %v537
      %v2842 = vunpack.c.l.b16 %v538
      %v2843 = vunpack.c.l.b16 %v539
      %v2844 = vunpack.c.l.b16 %v540
      %v2845 = vunpack.c.l.b16 %v541
      %v2846 = vunpack.c.l.b16 %v542
      %v2847 = vunpack.c.l.b16 %v543
      %v2848 = vunpack.c.l.b16 %v544
      %v2849 = vunpack.c.l.b16 %v545
      %v2850 = vunpack.c.l.b16 %v546
      %v2851 = vunpack.c.l.b16 %v547
      %v2852 = vunpack.c.l.b16 %v548
      %v2853 = vunpack.c.l.b16 %v549
      %v2854 = vunpack.c.l.b16 %v550
      %v2855 = vunpack.c.l.b16 %v551
      %v2856 = vunpack.c.l.b16 %v552
      %v2857 = vunpack.c.l.b16 %v553
      %v2858 = vunpack.c.l.b16 %v554
      %v2859 = vunpack.c.l.b16 %v555
      %v2860 = vunpack.c.l.b16 %v556
      %v2861 = vunpack.c.l.b16 %v557
      %v2862 = vunpack.c.l.b16 %v558
      %v2863 = vunpack.c.l.b16 %v559
      %v2864 = vunpack.c.l.b16 %v560
      %v2865 = vunpack.c.l.b16 %v561
      %v2866 = vunpack.c.l.b16 %v562
      %v2867 = vunpack.c.l.b16 %v563
      %v2868 = vunpack.c.l.b16 %v564
      %v2869 = vunpack.c.l.b16 %v565
      %v2870 = vunpack.c.l.b16 %v566
      %v2871 = vunpack.c.l.b16 %v567
      %v2872 = vunpack.c.l.b16 %v568
      %v2873 = vunpack.c.l.b16 %v569
      %v2874 = vunpack.c.l.b16 %v570
      %v2875 = vunpack.c.l.b16 %v571
      %v2876 = vunpack.c.l.b16 %v572
      %v2877 = vunpack.c.l.b16 %v573
      %v2878 = vunpack.c.l.b16 %v574
      %v2879 = vunpack.c.l.b16 %v575
      %v2880 = vunpack.c.l.b16 %v576
      %v2881 = vunpack.c.l.b16 %v577
      %v2882 = vunpack.c.l.b16 %v578
      %v2883 = vunpack.c.l.b16 %v579
      %v2884 = vunpack.c.l.b16 %v580
      %v2885 = vunpack.c.l.b16 %v581
      %v2886 = vunpack.c.l.b16 %v582
      %v2887 = vunpack.c.l.b16 %v583
      %v2888 = vunpack.c.l.b16 %v584
      %v2889 = vunpack.c.l.b16 %v585
      %v2890 = vunpack.c.l.b16 %v586
      %v2891 = vunpack.c.l.b16 %v587
      %v2892 = vunpack.c.l.b16 %v588
      %v2893 = vunpack.c.l.b16 %v589
      %v2894 = vunpack.c.l.b16 %v590
      %v2895 = vunpack.c.l.b16 %v591
      %v2896 = vunpack.c.l.b16 %v592
      %v2897 = vunpack.c.l.b16 %v593
      %v2898 = vunpack.c.l.b16 %v594
      %v2899 = vunpack.c.l.b16 %v595
      %v2900 = vunpack.c.l.b16 %v596
      %v2901 = vunpack.c.l.b16 %v597
      %v2902 = vunpack.c.l.b16 %v598
      %v2903 = vunpack.c.l.b16 %v599
      %v2904 = vunpack.c.l.b16 %v600
      %v2905 = vunpack.c.l.b16 %v601
      %v2906 = vunpack.c.l.b16 %v602
      %v2907 = vunpack.c.l.b16 %v603
      %v2908 = vunpack.c.l.b16 %v604
      %v2909 = vunpack.c.l.b16 %v605
      %v2910 = vunpack.c.l.b16 %v606
      %v2911 = vunpack.c.l.b16 %v607
      %v2912 = vunpack.c.l.b16 %v608
      %v2913 = vunpack.c.l.b16 %v609
      %v2914 = vunpack.c.l.b16 %v610
      %v2915 = vunpack.c.l.b16 %v611
      %v2916 = vunpack.c.l.b16 %v612
      %v2917 = vunpack.c.l.b16 %v613
      %v2918 = vunpack.c.l.b16 %v614
      %v2919 = vunpack.c.l.b16 %v615
      %v2920 = vunpack.c.l.b16 %v616
      %v2921 = vunpack.c.l.b16 %v617
      %v2922 = vunpack.c.l.b16 %v618
      %v2923 = vunpack.c.l.b16 %v619
      %v2924 = vunpack.c.l.b16 %v620
      %v2925 = vunpack.c.l.b16 %v621
      %v2926 = vunpack.c.l.b16 %v622
      %v2927 = vunpack.c.l.b16 %v623
      %v2928 = vunpack.c.l.b16 %v624
      %v2929 = vunpack.c.l.b16 %v625
      %v2930 = vunpack.c.l.b16 %v626
      %v2931 = vunpack.c.l.b16 %v627
      %v2932 = vunpack.c.l.b16 %v628
      %v2933 = vunpack.c.l.b16 %v629
      %v2934 = vunpack.c.l.b16 %v630
      %v2935 = vunpack.c.l.b16 %v631
      %v2936 = vunpack.c.l.b16 %v632
      %v2937 = vunpack.c.l.b16 %v633
      %v2938 = vunpack.c.l.b16 %v634
      %v2939 = vunpack.c.l.b16 %v635
      %v2940 = vunpack.c.l.b16 %v636
      %v2941 = vunpack.c.l.b16 %v637
      %v2942 = vunpack.c.l.b16 %v638
      %v2943 = vunpack.c.l.b16 %v639
      %v2944 = vunpack.c.l.b16 %v640
      %v2945 = vunpack.c.l.b16 %v641
      %v2946 = vunpack.c.l.b16 %v642
      %v2947 = vunpack.c.l.b16 %v643
      %v2948 = vunpack.c.l.b16 %v644
      %v2949 = vunpack.c.l.b16 %v645
      %v2950 = vunpack.c.l.b16 %v646
      %v2951 = vunpack.c.l.b16 %v647
      %v2952 = vunpack.c.l.b16 %v648
      %v2953 = vunpack.c.l.b16 %v649
      %v2954 = vunpack.c.l.b16 %v650
      %v2955 = vunpack.c.l.b16 %v651
      %v2956 = vunpack.c.l.b16 %v652
      %v2957 = vunpack.c.l.b16 %v653
      %v2958 = vunpack.c.l.b16 %v654
      %v2959 = vunpack.c.l.b16 %v655
      %v2960 = vunpack.c.l.b16 %v656
      %v2961 = vunpack.c.l.b16 %v657
      %v2962 = vunpack.c.l.b16 %v658
      %v2963 = vunpack.c.l.b16 %v659
      %v2964 = vunpack.c.l.b16 %v660
      %v2965 = vunpack.c.l.b16 %v661
      %v2966 = vunpack.c.l.b16 %v662
      %v2967 = vunpack.c.l.b16 %v663
      %v2968 = vunpack.c.l.b16 %v664
      %v2969 = vunpack.c.l.b16 %v665
      %v2970 = vunpack.c.l.b16 %v666
      %v2971 = vunpack.c.l.b16 %v667
      %v2972 = vunpack.c.l.b16 %v668
      %v2973 = vunpack.c.l.b16 %v669
      %v2974 = vunpack.c.l.b16 %v670
      %v2975 = vunpack.c.l.b16 %v671
      %v2976 = vunpack.c.l.b16 %v672
      %v2977 = vunpack.c.l.b16 %v673
      %v2978 = vunpack.c.l.b16 %v674
      %v2979 = vunpack.c.l.b16 %v675
      %v2980 = vunpack.c.l.b16 %v676
      %v2981 = vunpack.c.l.b16 %v677
      %v2982 = vunpack.c.l.b16 %v678
      %v2983 = vunpack.c.l.b16 %v679
      %v2984 = vunpack.c.l.b16 %v680
      %v2985 = vunpack.c.l.b16 %v681
      %v2986 = vunpack.c.l.b16 %v682
      %v2987 = vunpack.c.l.b16 %v683
      %v2988 = vunpack.c.l.b16 %v684
      %v2989 = vunpack.c.l.b16 %v685
      %v2990 = vunpack.c.l.b16 %v686
      %v2991 = vunpack.c.l.b16 %v687
      %v2992 = vunpack.c.l.b16 %v688
      %v2993 = vunpack.c.l.b16 %v689
      %v2994 = vunpack.c.l.b16 %v690
      %v2995 = vunpack.c.l.b16 %v691
      %v2996 = vunpack.c.l.b16 %v692
      %v2997 = vunpack.c.l.b16 %v693
      %v2998 = vunpack.c.l.b16 %v694
      %v2999 = vunpack.c.l.b16 %v695
      %v3000 = vunpack.c.l.b16 %v696
      %v3001 = vunpack.c.l.b16 %v697
      %v3002 = vunpack.c.l.b16 %v698
      %v3003 = vunpack.c.l.b16 %v699
      %v3004 = vunpack.c.l.b16 %v700
      %v3005 = vunpack.c.l.b16 %v701
      %v3006 = vunpack.c.l.b16 %v702
      %v3007 = vunpack.c.l.b16 %v703
      %v3008 = vunpack.c.l.b16 %v704
      %v3009 = vunpack.c.l.b16 %v705
      %v3010 = vunpack.c.l.b16 %v706
      %v3011 = vunpack.c.l.b16 %v707
      %v3012 = vunpack.c.l.b16 %v708
      %v3013 = vunpack.c.l.b16 %v709
      %v3014 = vunpack.c.l.b16 %v710
      %v3015 = vunpack.c.l.b16 %v711
      %v3016 = vunpack.c.l.b16 %v712
      %v3017 = vunpack.c.l.b16 %v713
      %v3018 = vunpack.c.l.b16 %v714
      %v3019 = vunpack.c.l.b16 %v715
      %v3020 = vunpack.c.l.b16 %v716
      %v3021 = vunpack.c.l.b16 %v717
      %v3022 = vunpack.c.l.b16 %v718
      %v3023 = vunpack.c.l.b16 %v719
      %v3024 = vunpack.c.l.b16 %v720
      %v3025 = vunpack.c.l.b16 %v721
      %v3026 = vunpack.c.l.b16 %v722
      %v3027 = vunpack.c.l.b16 %v723
      %v3028 = vunpack.c.l.b16 %v724
      %v3029 = vunpack.c.l.b16 %v725
      %v3030 = vunpack.c.l.b16 %v726
      %v3031 = vunpack.c.l.b16 %v727
      %v3032 = vunpack.c.l.b16 %v728
      %v3033 = vunpack.c.l.b16 %v729
      %v3034 = vunpack.c.l.b16 %v730
      %v3035 = vunpack.c.l.b16 %v731
      %v3036 = vunpack.c.l.b16 %v732
      %v3037 = vunpack.c.l.b16 %v733
      %v3038 = vunpack.c.l.b16 %v734
      %v3039 = vunpack.c.l.b16 %v735
      %v3040 = vunpack.c.l.b16 %v736
      %v3041 = vunpack.c.l.b16 %v737
      %v3042 = vunpack.c.l.b16 %v738
      %v3043 = vunpack.c.l.b16 %v739
      %v3044 = vunpack.c.l.b16 %v740
      %v3045 = vunpack.c.l.b16 %v741
      %v3046 = vunpack.c.l.b16 %v742
      %v3047 = vunpack.c.l.b16 %v743
      %v3048 = vunpack.c.l.b16 %v744
      %v3049 = vunpack.c.l.b16 %v745
      %v3050 = vunpack.c.l.b16 %v746
      %v3051 = vunpack.c.l.b16 %v747
      %v3052 = vunpack.c.l.b16 %v748
      %v3053 = vunpack.c.l.b16 %v749
      %v3054 = vunpack.c.l.b16 %v750
      %v3055 = vunpack.c.l.b16 %v751
      %v3056 = vunpack.c.l.b16 %v752
      %v3057 = vunpack.c.l.b16 %v753
      %v3058 = vunpack.c.l.b16 %v754
      %v3059 = vunpack.c.l.b16 %v755
      %v3060 = vunpack.c.l.b16 %v756
      %v3061 = vunpack.c.l.b16 %v757
      %v3062 = vunpack.c.l.b16 %v758
      %v3063 = vunpack.c.l.b16 %v759
      %v3064 = vunpack.c.l.b16 %v760
      %v3065 = vunpack.c.l.b16 %v761
      %v3066 = vunpack.c.l.b16 %v762
      %v3067 = vunpack.c.l.b16 %v763
      %v3068 = vunpack.c.l.b16 %v764
      %v3069 = vunpack.c.l.b16 %v765
      %v3070 = vunpack.c.l.b16 %v766
      %v3071 = vunpack.c.l.b16 %v767
      %v3072 = vunpack.c.l.b16 %v768
      %v3073 = vunpack.c.l.b16 %v769
      %v3074 = vunpack.c.l.b16 %v770
      %v3075 = vunpack.c.l.b16 %v771
      %v3076 = vunpack.c.l.b16 %v772
      %v3077 = vunpack.c.l.b16 %v773
      %v3078 = vunpack.c.l.b16 %v774
      %v3079 = vunpack.c.l.b16 %v775
      %v3080 = vunpack.c.l.b16 %v776
      %v3081 = vunpack.c.l.b16 %v777
      %v3082 = vunpack.c.l.b16 %v778
      %v3083 = vunpack.c.l.b16 %v779
      %v3084 = vunpack.c.l.b16 %v780
      %v3085 = vunpack.c.l.b16 %v781
      %v3086 = vunpack.c.l.b16 %v782
      %v3087 = vunpack.c.l.b16 %v783
      %v3088 = vunpack.c.l.b16 %v784
      %v3089 = vunpack.c.l.b16 %v785
      %v3090 = vunpack.c.l.b16 %v786
      %v3091 = vunpack.c.l.b16 %v787
      %v3092 = vunpack.c.l.b16 %v788
      %v3093 = vunpack.c.l.b16 %v789
      %v3094 = vunpack.c.l.b16 %v790
      %v3095 = vunpack.c.l.b16 %v791
      %v3096 = vunpack.c.l.b16 %v792
      %v3097 = vunpack.c.l.b16 %v793
      %v3098 = vunpack.c.l.b16 %v794
      %v3099 = vunpack.c.l.b16 %v795
      %v3100 = vunpack.c.l.b16 %v796
      %v3101 = vunpack.c.l.b16 %v797
      %v3102 = vunpack.c.l.b16 %v798
      %v3103 = vunpack.c.l.b16 %v799
      %v3104 = vunpack.c.l.b16 %v800
      %v3105 = vunpack.c.l.b16 %v801
      %v3106 = vunpack.c.l.b16 %v802
      %v3107 = vunpack.c.l.b16 %v803
      %v3108 = vunpack.c.l.b16 %v804
      %v3109 = vunpack.c.l.b16 %v805
      %v3110 = vunpack.c.l.b16 %v806
      %v3111 = vunpack.c.l.b16 %v807
      %v3112 = vunpack.c.l.b16 %v808
      %v3113 = vunpack.c.l.b16 %v809
      %v3114 = vunpack.c.l.b16 %v810
      %v3115 = vunpack.c.l.b16 %v811
      %v3116 = vunpack.c.l.b16 %v812
      %v3117 = vunpack.c.l.b16 %v813
      %v3118 = vunpack.c.l.b16 %v814
      %v3119 = vunpack.c.l.b16 %v815
      %v3120 = vunpack.c.l.b16 %v816
      %v3121 = vunpack.c.l.b16 %v817
      %v3122 = vunpack.c.l.b16 %v818
      %v3123 = vunpack.c.l.b16 %v819
      %v3124 = vunpack.c.l.b16 %v820
      %v3125 = vunpack.c.l.b16 %v821
      %v3126 = vunpack.c.l.b16 %v822
      %v3127 = vunpack.c.l.b16 %v823
      %v3128 = vunpack.c.l.b16 %v824
      %v3129 = vunpack.c.l.b16 %v825
      %v3130 = vunpack.c.l.b16 %v826
      %v3131 = vunpack.c.l.b16 %v827
      %v3132 = vunpack.c.l.b16 %v828
      %v3133 = vunpack.c.l.b16 %v829
      %v3134 = vunpack.c.l.b16 %v830
      %v3135 = vunpack.c.l.b16 %v831
      %v3136 = vunpack.c.l.b16 %v832
      %v3137 = vunpack.c.l.b16 %v833
      %v3138 = vunpack.c.l.b16 %v834
      %v3139 = vunpack.c.l.b16 %v835
      %v3140 = vunpack.c.l.b16 %v836
      %v3141 = vunpack.c.l.b16 %v837
      %v3142 = vunpack.c.l.b16 %v838
      %v3143 = vunpack.c.l.b16 %v839
      %v3144 = vunpack.c.l.b16 %v840
      %v3145 = vunpack.c.l.b16 %v841
      %v3146 = vunpack.c.l.b16 %v842
      %v3147 = vunpack.c.l.b16 %v843
      %v3148 = vunpack.c.l.b16 %v844
      %v3149 = vunpack.c.l.b16 %v845
      %v3150 = vunpack.c.l.b16 %v846
      %v3151 = vunpack.c.l.b16 %v847
      %v3152 = vunpack.c.l.b16 %v848
      %v3153 = vunpack.c.l.b16 %v849
      %v3154 = vunpack.c.l.b16 %v850
      %v3155 = vunpack.c.l.b16 %v851
      %v3156 = vunpack.c.l.b16 %v852
      %v3157 = vunpack.c.l.b16 %v853
      %v3158 = vunpack.c.l.b16 %v854
      %v3159 = vunpack.c.l.b16 %v855
      %v3160 = vunpack.c.l.b16 %v856
      %v3161 = vunpack.c.l.b16 %v857
      %v3162 = vunpack.c.l.b16 %v858
      %v3163 = vunpack.c.l.b16 %v859
      %v3164 = vunpack.c.l.b16 %v860
      %v3165 = vunpack.c.l.b16 %v861
      %v3166 = vunpack.c.l.b16 %v862
      %v3167 = vunpack.c.l.b16 %v863
      %v3168 = vunpack.c.l.b16 %v864
      %v3169 = vunpack.c.l.b16 %v865
      %v3170 = vunpack.c.l.b16 %v866
      %v3171 = vunpack.c.l.b16 %v867
      %v3172 = vunpack.c.l.b16 %v868
      %v3173 = vunpack.c.l.b16 %v869
      %v3174 = vunpack.c.l.b16 %v870
      %v3175 = vunpack.c.l.b16 %v871
      %v3176 = vunpack.c.l.b16 %v872
      %v3177 = vunpack.c.l.b16 %v873
      %v3178 = vunpack.c.l.b16 %v874
      %v3179 = vunpack.c.l.b16 %v875
      %v3180 = vunpack.c.l.b16 %v876
      %v3181 = vunpack.c.l.b16 %v877
      %v3182 = vunpack.c.l.b16 %v878
      %v3183 = vunpack.c.l.b16 %v879
      %v3184 = vunpack.c.l.b16 %v880
      %v3185 = vunpack.c.l.b16 %v881
      %v3186 = vunpack.c.l.b16 %v882
      %v3187 = vunpack.c.l.b16 %v883
      %v3188 = vunpack.c.l.b16 %v884
      %v3189 = vunpack.c.l.b16 %v885
      %v3190 = vunpack.c.l.b16 %v886
      %v3191 = vunpack.c.l.b16 %v887
      %v3192 = vunpack.c.l.b16 %v888
      %v3193 = vunpack.c.l.b16 %v889
      %v3194 = vunpack.c.l.b16 %v890
      %v3195 = vunpack.c.l.b16 %v891
      %v3196 = vunpack.c.l.b16 %v892
      %v3197 = vunpack.c.l.b16 %v893
      %v3198 = vunpack.c.l.b16 %v894
      %v3199 = vunpack.c.l.b16 %v895
      %v3200 = vunpack.c.l.b16 %v896
      %v3201 = vunpack.c.l.b16 %v897
      %v3202 = vunpack.c.l.b16 %v898
      %v3203 = vunpack.c.l.b16 %v899
      %v3204 = vunpack.c.l.b16 %v900
      %v3205 = vunpack.c.l.b16 %v901
      %v3206 = vunpack.c.l.b16 %v902
      %v3207 = vunpack.c.l.b16 %v903
      %v3208 = vunpack.c.l.b16 %v904
      %v3209 = vunpack.c.l.b16 %v905
      %v3210 = vunpack.c.l.b16 %v906
      %v3211 = vunpack.c.l.b16 %v907
      %v3212 = vunpack.c.l.b16 %v908
      %v3213 = vunpack.c.l.b16 %v909
      %v3214 = vunpack.c.l.b16 %v910
      %v3215 = vunpack.c.l.b16 %v911
      %v3216 = vunpack.c.l.b16 %v912
      %v3217 = vunpack.c.l.b16 %v913
      %v3218 = vunpack.c.l.b16 %v914
      %v3219 = vunpack.c.l.b16 %v915
      %v3220 = vunpack.c.l.b16 %v916
      %v3221 = vunpack.c.l.b16 %v917
      %v3222 = vunpack.c.l.b16 %v918
      %v3223 = vunpack.c.l.b16 %v919
      %v3224 = vunpack.c.l.b16 %v920
      %v3225 = vunpack.c.l.b16 %v921
      %v3226 = vunpack.c.l.b16 %v922
      %v3227 = vunpack.c.l.b16 %v923
      %v3228 = vunpack.c.l.b16 %v924
      %v3229 = vunpack.c.l.b16 %v925
      %v3230 = vunpack.c.l.b16 %v926
      %v3231 = vunpack.c.l.b16 %v927
      %v3232 = vunpack.c.l.b16 %v928
      %v3233 = vunpack.c.l.b16 %v929
      %v3234 = vunpack.c.l.b16 %v930
      %v3235 = vunpack.c.l.b16 %v931
      %v3236 = vunpack.c.l.b16 %v932
      %v3237 = vunpack.c.l.b16 %v933
      %v3238 = vunpack.c.l.b16 %v934
      %v3239 = vunpack.c.l.b16 %v935
      %v3240 = vunpack.c.l.b16 %v936
      %v3241 = vunpack.c.l.b16 %v937
      %v3242 = vunpack.c.l.b16 %v938
      %v3243 = vunpack.c.l.b16 %v939
      %v3244 = vunpack.c.l.b16 %v940
      %v3245 = vunpack.c.l.b16 %v941
      %v3246 = vunpack.c.l.b16 %v942
      %v3247 = vunpack.c.l.b16 %v943
      %v3248 = vunpack.c.l.b16 %v944
      %v3249 = vunpack.c.l.b16 %v945
      %v3250 = vunpack.c.l.b16 %v946
      %v3251 = vunpack.c.l.b16 %v947
      %v3252 = vunpack.c.l.b16 %v948
      %v3253 = vunpack.c.l.b16 %v949
      %v3254 = vunpack.c.l.b16 %v950
      %v3255 = vunpack.c.l.b16 %v951
      %v3256 = vunpack.c.l.b16 %v952
      %v3257 = vunpack.c.l.b16 %v953
      %v3258 = vunpack.c.l.b16 %v954
      %v3259 = vunpack.c.l.b16 %v955
      %v3260 = vunpack.c.l.b16 %v956
      %v3261 = vunpack.c.l.b16 %v957
      %v3262 = vunpack.c.l.b16 %v958
      %v3263 = vunpack.c.l.b16 %v959
      %v3264 = vunpack.c.l.b16 %v960
      %v3265 = vunpack.c.l.b16 %v961
      %v3266 = vunpack.c.l.b16 %v962
      %v3267 = vunpack.c.l.b16 %v963
      %v3268 = vunpack.c.l.b16 %v964
      %v3269 = vunpack.c.l.b16 %v965
      %v3270 = vunpack.c.l.b16 %v966
      %v3271 = vunpack.c.l.b16 %v967
      %v3272 = vunpack.c.l.b16 %v968
      %v3273 = vunpack.c.l.b16 %v969
      %v3274 = vunpack.c.l.b16 %v970
      %v3275 = vunpack.c.l.b16 %v971
      %v3276 = vpack.c.b16 %v2765, %v2764
      %v3277 = vpack.c.b16 %v2767, %v2766
      %v3278 = vpack.c.b16 %v2769, %v2768
      %v3279 = vpack.c.b16 %v2771, %v2770
      %v3280 = vpack.c.b16 %v2773, %v2772
      %v3281 = vpack.c.b16 %v2775, %v2774
      %v3282 = vpack.c.b16 %v2777, %v2776
      %v3283 = vpack.c.b16 %v2779, %v2778
      %v3284 = vpack.c.b16 %v2781, %v2780
      %v3285 = vpack.c.b16 %v2783, %v2782
      %v3286 = vpack.c.b16 %v2785, %v2784
      %v3287 = vpack.c.b16 %v2787, %v2786
      %v3288 = vpack.c.b16 %v2789, %v2788
      %v3289 = vpack.c.b16 %v2791, %v2790
      %v3290 = vpack.c.b16 %v2793, %v2792
      %v3291 = vpack.c.b16 %v2795, %v2794
      %v3292 = vpack.c.b16 %v2797, %v2796
      %v3293 = vpack.c.b16 %v2799, %v2798
      %v3294 = vpack.c.b16 %v2801, %v2800
      %v3295 = vpack.c.b16 %v2803, %v2802
      %v3296 = vpack.c.b16 %v2805, %v2804
      %v3297 = vpack.c.b16 %v2807, %v2806
      %v3298 = vpack.c.b16 %v2809, %v2808
      %v3299 = vpack.c.b16 %v2811, %v2810
      %v3300 = vpack.c.b16 %v2813, %v2812
      %v3301 = vpack.c.b16 %v2815, %v2814
      %v3302 = vpack.c.b16 %v2817, %v2816
      %v3303 = vpack.c.b16 %v2819, %v2818
      %v3304 = vpack.c.b16 %v2821, %v2820
      %v3305 = vpack.c.b16 %v2823, %v2822
      %v3306 = vpack.c.b16 %v2825, %v2824
      %v3307 = vpack.c.b16 %v2827, %v2826
      %v3308 = vpack.c.b16 %v2829, %v2828
      %v3309 = vpack.c.b16 %v2831, %v2830
      %v3310 = vpack.c.b16 %v2833, %v2832
      %v3311 = vpack.c.b16 %v2835, %v2834
      %v3312 = vpack.c.b16 %v2837, %v2836
      %v3313 = vpack.c.b16 %v2839, %v2838
      %v3314 = vpack.c.b16 %v2841, %v2840
      %v3315 = vpack.c.b16 %v2843, %v2842
      %v3316 = vpack.c.b16 %v2845, %v2844
      %v3317 = vpack.c.b16 %v2847, %v2846
      %v3318 = vpack.c.b16 %v2849, %v2848
      %v3319 = vpack.c.b16 %v2851, %v2850
      %v3320 = vpack.c.b16 %v2853, %v2852
      %v3321 = vpack.c.b16 %v2855, %v2854
      %v3322 = vpack.c.b16 %v2857, %v2856
      %v3323 = vpack.c.b16 %v2859, %v2858
      %v3324 = vpack.c.b16 %v2861, %v2860
      %v3325 = vpack.c.b16 %v2863, %v2862
      %v3326 = vpack.c.b16 %v2865, %v2864
      %v3327 = vpack.c.b16 %v2867, %v2866
      %v3328 = vpack.c.b16 %v2869, %v2868
      %v3329 = vpack.c.b16 %v2871, %v2870
      %v3330 = vpack.c.b16 %v2873, %v2872
      %v3331 = vpack.c.b16 %v2875, %v2874
      %v3332 = vpack.c.b16 %v2877, %v2876
      %v3333 = vpack.c.b16 %v2879, %v2878
      %v3334 = vpack.c.b16 %v2881, %v2880
      %v3335 = vpack.c.b16 %v2883, %v2882
      %v3336 = vpack.c.b16 %v2885, %v2884
      %v3337 = vpack.c.b16 %v2887, %v2886
      %v3338 = vpack.c.b16 %v2889, %v2888
      %v3339 = vpack.c.b16 %v2891, %v2890
      %v3340 = vpack.c.b16 %v2893, %v2892
      %v3341 = vpack.c.b16 %v2895, %v2894
      %v3342 = vpack.c.b16 %v2897, %v2896
      %v3343 = vpack.c.b16 %v2899, %v2898
      %v3344 = vpack.c.b16 %v2901, %v2900
      %v3345 = vpack.c.b16 %v2903, %v2902
      %v3346 = vpack.c.b16 %v2905, %v2904
      %v3347 = vpack.c.b16 %v2907, %v2906
      %v3348 = vpack.c.b16 %v2909, %v2908
      %v3349 = vpack.c.b16 %v2911, %v2910
      %v3350 = vpack.c.b16 %v2913, %v2912
      %v3351 = vpack.c.b16 %v2915, %v2914
      %v3352 = vpack.c.b16 %v2917, %v2916
      %v3353 = vpack.c.b16 %v2919, %v2918
      %v3354 = vpack.c.b16 %v2921, %v2920
      %v3355 = vpack.c.b16 %v2923, %v2922
      %v3356 = vpack.c.b16 %v2925, %v2924
      %v3357 = vpack.c.b16 %v2927, %v2926
      %v3358 = vpack.c.b16 %v2929, %v2928
      %v3359 = vpack.c.b16 %v2931, %v2930
      %v3360 = vpack.c.b16 %v2933, %v2932
      %v3361 = vpack.c.b16 %v2935, %v2934
      %v3362 = vpack.c.b16 %v2937, %v2936
      %v3363 = vpack.c.b16 %v2939, %v2938
      %v3364 = vpack.c.b16 %v2941, %v2940
      %v3365 = vpack.c.b16 %v2943, %v2942
      %v3366 = vpack.c.b16 %v2945, %v2944
      %v3367 = vpack.c.b16 %v2947, %v2946
      %v3368 = vpack.c.b16 %v2949, %v2948
      %v3369 = vpack.c.b16 %v2951, %v2950
      %v3370 = vpack.c.b16 %v2953, %v2952
      %v3371 = vpack.c.b16 %v2955, %v2954
      %v3372 = vpack.c.b16 %v2957, %v2956
      %v3373 = vpack.c.b16 %v2959, %v2958
      %v3374 = vpack.c.b16 %v2961, %v2960
      %v3375 = vpack.c.b16 %v2963, %v2962
      %v3376 = vpack.c.b16 %v2965, %v2964
      %v3377 = vpack.c.b16 %v2967, %v2966
      %v3378 = vpack.c.b16 %v2969, %v2968
      %v3379 = vpack.c.b16 %v2971, %v2970
      %v3380 = vpack.c.b16 %v2973, %v2972
      %v3381 = vpack.c.b16 %v2975, %v2974
      %v3382 = vpack.c.b16 %v2977, %v2976
      %v3383 = vpack.c.b16 %v2979, %v2978
      %v3384 = vpack.c.b16 %v2981, %v2980
      %v3385 = vpack.c.b16 %v2983, %v2982
      %v3386 = vpack.c.b16 %v2985, %v2984
      %v3387 = vpack.c.b16 %v2987, %v2986
      %v3388 = vpack.c.b16 %v2989, %v2988
      %v3389 = vpack.c.b16 %v2991, %v2990
      %v3390 = vpack.c.b16 %v2993, %v2992
      %v3391 = vpack.c.b16 %v2995, %v2994
      %v3392 = vpack.c.b16 %v2997, %v2996
      %v3393 = vpack.c.b16 %v2999, %v2998
      %v3394 = vpack.c.b16 %v3001, %v3000
      %v3395 = vpack.c.b16 %v3003, %v3002
      %v3396 = vpack.c.b16 %v3005, %v3004
      %v3397 = vpack.c.b16 %v3007, %v3006
      %v3398 = vpack.c.b16 %v3009, %v3008
      %v3399 = vpack.c.b16 %v3011, %v3010
      %v3400 = vpack.c.b16 %v3013, %v3012
      %v3401 = vpack.c.b16 %v3015, %v3014
      %v3402 = vpack.c.b16 %v3017, %v3016
      %v3403 = vpack.c.b16 %v3019, %v3018
      %v3404 = vpack.c.b16 %v3021, %v3020
      %v3405 = vpack.c.b16 %v3023, %v3022
      %v3406 = vpack.c.b16 %v3025, %v3024
      %v3407 = vpack.c.b16 %v3027, %v3026
      %v3408 = vpack.c.b16 %v3029, %v3028
      %v3409 = vpack.c.b16 %v3031, %v3030
      %v3410 = vpack.c.b16 %v3033, %v3032
      %v3411 = vpack.c.b16 %v3035, %v3034
      %v3412 = vpack.c.b16 %v3037, %v3036
      %v3413 = vpack.c.b16 %v3039, %v3038
      %v3414 = vpack.c.b16 %v3041, %v3040
      %v3415 = vpack.c.b16 %v3043, %v3042
      %v3416 = vpack.c.b16 %v3045, %v3044
      %v3417 = vpack.c.b16 %v3047, %v3046
      %v3418 = vpack.c.b16 %v3049, %v3048
      %v3419 = vpack.c.b16 %v3051, %v3050
      %v3420 = vpack.c.b16 %v3053, %v3052
      %v3421 = vpack.c.b16 %v3055, %v3054
      %v3422 = vpack.c.b16 %v3057, %v3056
      %v3423 = vpack.c.b16 %v3059, %v3058
      %v3424 = vpack.c.b16 %v3061, %v3060
      %v3425 = vpack.c.b16 %v3063, %v3062
      %v3426 = vpack.c.b16 %v3065, %v3064
      %v3427 = vpack.c.b16 %v3067, %v3066
      %v3428 = vpack.c.b16 %v3069, %v3068
      %v3429 = vpack.c.b16 %v3071, %v3070
      %v3430 = vpack.c.b16 %v3073, %v3072
      %v3431 = vpack.c.b16 %v3075, %v3074
      %v3432 = vpack.c.b16 %v3077, %v3076
      %v3433 = vpack.c.b16 %v3079, %v3078
      %v3434 = vpack.c.b16 %v3081, %v3080
      %v3435 = vpack.c.b16 %v3083, %v3082
      %v3436 = vpack.c.b16 %v3085, %v3084
      %v3437 = vpack.c.b16 %v3087, %v3086
      %v3438 = vpack.c.b16 %v3089, %v3088
      %v3439 = vpack.c.b16 %v3091, %v3090
      %v3440 = vpack.c.b16 %v3093, %v3092
      %v3441 = vpack.c.b16 %v3095, %v3094
      %v3442 = vpack.c.b16 %v3097, %v3096
      %v3443 = vpack.c.b16 %v3099, %v3098
      %v3444 = vpack.c.b16 %v3101, %v3100
      %v3445 = vpack.c.b16 %v3103, %v3102
      %v3446 = vpack.c.b16 %v3105, %v3104
      %v3447 = vpack.c.b16 %v3107, %v3106
      %v3448 = vpack.c.b16 %v3109, %v3108
      %v3449 = vpack.c.b16 %v3111, %v3110
      %v3450 = vpack.c.b16 %v3113, %v3112
      %v3451 = vpack.c.b16 %v3115, %v3114
      %v3452 = vpack.c.b16 %v3117, %v3116
      %v3453 = vpack.c.b16 %v3119, %v3118
      %v3454 = vpack.c.b16 %v3121, %v3120
      %v3455 = vpack.c.b16 %v3123, %v3122
      %v3456 = vpack.c.b16 %v3125, %v3124
      %v3457 = vpack.c.b16 %v3127, %v3126
      %v3458 = vpack.c.b16 %v3129, %v3128
      %v3459 = vpack.c.b16 %v3131, %v3130
      %v3460 = vpack.c.b16 %v3133, %v3132
      %v3461 = vpack.c.b16 %v3135, %v3134
      %v3462 = vpack.c.b16 %v3137, %v3136
      %v3463 = vpack.c.b16 %v3139, %v3138
      %v3464 = vpack.c.b16 %v3141, %v3140
      %v3465 = vpack.c.b16 %v3143, %v3142
      %v3466 = vpack.c.b16 %v3145, %v3144
      %v3467 = vpack.c.b16 %v3147, %v3146
      %v3468 = vpack.c.b16 %v3149, %v3148
      %v3469 = vpack.c.b16 %v3151, %v3150
      %v3470 = vpack.c.b16 %v3153, %v3152
      %v3471 = vpack.c.b16 %v3155, %v3154
      %v3472 = vpack.c.b16 %v3157, %v3156
      %v3473 = vpack.c.b16 %v3159, %v3158
      %v3474 = vpack.c.b16 %v3161, %v3160
      %v3475 = vpack.c.b16 %v3163, %v3162
      %v3476 = vpack.c.b16 %v3165, %v3164
      %v3477 = vpack.c.b16 %v3167, %v3166
      %v3478 = vpack.c.b16 %v3169, %v3168
      %v3479 = vpack.c.b16 %v3171, %v3170
      %v3480 = vpack.c.b16 %v3173, %v3172
      %v3481 = vpack.c.b16 %v3175, %v3174
      %v3482 = vpack.c.b16 %v3177, %v3176
      %v3483 = vpack.c.b16 %v3179, %v3178
      %v3484 = vpack.c.b16 %v3181, %v3180
      %v3485 = vpack.c.b16 %v3183, %v3182
      %v3486 = vpack.c.b16 %v3185, %v3184
      %v3487 = vpack.c.b16 %v3187, %v3186
      %v3488 = vpack.c.b16 %v3189, %v3188
      %v3489 = vpack.c.b16 %v3191, %v3190
      %v3490 = vpack.c.b16 %v3193, %v3192
      %v3491 = vpack.c.b16 %v3195, %v3194
      %v3492 = vpack.c.b16 %v3197, %v3196
      %v3493 = vpack.c.b16 %v3199, %v3198
      %v3494 = vpack.c.b16 %v3201, %v3200
      %v3495 = vpack.c.b16 %v3203, %v3202
      %v3496 = vpack.c.b16 %v3205, %v3204
      %v3497 = vpack.c.b16 %v3207, %v3206
      %v3498 = vpack.c.b16 %v3209, %v3208
      %v3499 = vpack.c.b16 %v3211, %v3210
      %v3500 = vpack.c.b16 %v3213, %v3212
      %v3501 = vpack.c.b16 %v3215, %v3214
      %v3502 = vpack.c.b16 %v3217, %v3216
      %v3503 = vpack.c.b16 %v3219, %v3218
      %v3504 = vpack.c.b16 %v3221, %v3220
      %v3505 = vpack.c.b16 %v3223, %v3222
      %v3506 = vpack.c.b16 %v3225, %v3224
      %v3507 = vpack.c.b16 %v3227, %v3226
      %v3508 = vpack.c.b16 %v3229, %v3228
      %v3509 = vpack.c.b16 %v3231, %v3230
      %v3510 = vpack.c.b16 %v3233, %v3232
      %v3511 = vpack.c.b16 %v3235, %v3234
      %v3512 = vpack.c.b16 %v3237, %v3236
      %v3513 = vpack.c.b16 %v3239, %v3238
      %v3514 = vpack.c.b16 %v3241, %v3240
      %v3515 = vpack.c.b16 %v3243, %v3242
      %v3516 = vpack.c.b16 %v3245, %v3244
      %v3517 = vpack.c.b16 %v3247, %v3246
      %v3518 = vpack.c.b16 %v3249, %v3248
      %v3519 = vpack.c.b16 %v3251, %v3250
      %v3520 = vpack.c.b16 %v3253, %v3252
      %v3521 = vpack.c.b16 %v3255, %v3254
      %v3522 = vpack.c.b16 %v3257, %v3256
      %v3523 = vpack.c.b16 %v3259, %v3258
      %v3524 = vpack.c.b16 %v3261, %v3260
      %v3525 = vpack.c.b16 %v3263, %v3262
      %v3526 = vpack.c.b16 %v3265, %v3264
      %v3527 = vpack.c.b16 %v3267, %v3266
      %v3528 = vpack.c.b16 %v3269, %v3268
      %v3529 = vpack.c.b16 %v3271, %v3270
      %v3530 = vpack.c.b16 %v3273, %v3272
      %v3531 = vpack.c.b16 %v3275, %v3274
      %3788 = vmatpush.bf16.msra.mxu0 %v3283
      %3789 = vmatpush.bf16.msra.mxu0 %v3282
      %3790 = vmatpush.bf16.msra.mxu0 %v3281
      %3791 = vmatpush.bf16.msra.mxu0 %v3280
      %3792 = vmatpush.bf16.msra.mxu0 %v3279
      %3793 = vmatpush.bf16.msra.mxu0 %v3278
      %3794 = vmatpush.bf16.msra.mxu0 %v3277
      %3795 = vmatpush.bf16.msra.mxu0 %v3276
      %3796 = vmatmul.bf16.gmra.mxu0 %v1740
      %v3797 = vpop.f32.mrf.mxu0
      %v3798 = vadd.f32 0.0, %v3797
      %v3799 = vpop.f32.mrf.mxu0
      %v3800 = vadd.f32 0.0, %v3799
      %3801 = vmatmul.bf16.gmra.mxu0 %v1772
      %v3802 = vpop.f32.mrf.mxu0
      %v3803 = vadd.f32 0.0, %v3802
      %v3804 = vpop.f32.mrf.mxu0
      %v3805 = vadd.f32 0.0, %v3804
      %3806 = vmatmul.bf16.gmra.mxu0 %v1804
      %v3807 = vpop.f32.mrf.mxu0
      %v3808 = vadd.f32 0.0, %v3807
      %v3809 = vpop.f32.mrf.mxu0
      %v3810 = vadd.f32 0.0, %v3809
      %3811 = vmatmul.bf16.gmra.mxu0 %v1836
      %v3812 = vpop.f32.mrf.mxu0
      %v3813 = vadd.f32 0.0, %v3812
      %v3814 = vpop.f32.mrf.mxu0
      %v3815 = vadd.f32 0.0, %v3814
      %3816 = vmatmul.bf16.gmra.mxu0 %v1868
      %v3817 = vpop.f32.mrf.mxu0
      %v3818 = vadd.f32 0.0, %v3817
      %v3819 = vpop.f32.mrf.mxu0
      %v3820 = vadd.f32 0.0, %v3819
      %3821 = vmatmul.bf16.gmra.mxu0 %v1900
      %v3822 = vpop.f32.mrf.mxu0
      %v3823 = vadd.f32 0.0, %v3822
      %v3824 = vpop.f32.mrf.mxu0
      %v3825 = vadd.f32 0.0, %v3824
      %3826 = vmatmul.bf16.gmra.mxu0 %v1932
      %v3827 = vpop.f32.mrf.mxu0
      %v3828 = vadd.f32 0.0, %v3827
      %v3829 = vpop.f32.mrf.mxu0
      %v3830 = vadd.f32 0.0, %v3829
      %3831 = vmatmul.bf16.gmra.mxu0 %v1964
      %v3832 = vpop.f32.mrf.mxu0
      %v3833 = vadd.f32 0.0, %v3832
      %v3834 = vpop.f32.mrf.mxu0
      %v3835 = vadd.f32 0.0, %v3834
      %3836 = vdwg.mxu0
      %3837 = vmatpush.bf16.msra.mxu0 %v3291
      %3838 = vmatpush.bf16.msra.mxu0 %v3290
      %3839 = vmatpush.bf16.msra.mxu0 %v3289
      %3840 = vmatpush.bf16.msra.mxu0 %v3288
      %3841 = vmatpush.bf16.msra.mxu0 %v3287
      %3842 = vmatpush.bf16.msra.mxu0 %v3286
      %3843 = vmatpush.bf16.msra.mxu0 %v3285
      %3844 = vmatpush.bf16.msra.mxu0 %v3284
      %3845 = vmatmul.bf16.gmra.mxu0 %v1741
      %v3846 = vpop.f32.mrf.mxu0
      %v3847 = vadd.f32 %v3798, %v3846
      %v3848 = vpop.f32.mrf.mxu0
      %v3849 = vadd.f32 %v3800, %v3848
      %3850 = vmatmul.bf16.gmra.mxu0 %v1773
      %v3851 = vpop.f32.mrf.mxu0
      %v3852 = vadd.f32 %v3803, %v3851
      %v3853 = vpop.f32.mrf.mxu0
      %v3854 = vadd.f32 %v3805, %v3853
      %3855 = vmatmul.bf16.gmra.mxu0 %v1805
      %v3856 = vpop.f32.mrf.mxu0
      %v3857 = vadd.f32 %v3808, %v3856
      %v3858 = vpop.f32.mrf.mxu0
      %v3859 = vadd.f32 %v3810, %v3858
      %3860 = vmatmul.bf16.gmra.mxu0 %v1837
      %v3861 = vpop.f32.mrf.mxu0
      %v3862 = vadd.f32 %v3813, %v3861
      %v3863 = vpop.f32.mrf.mxu0
      %v3864 = vadd.f32 %v3815, %v3863
      %3865 = vmatmul.bf16.gmra.mxu0 %v1869
      %v3866 = vpop.f32.mrf.mxu0
      %v3867 = vadd.f32 %v3818, %v3866
      %v3868 = vpop.f32.mrf.mxu0
      %v3869 = vadd.f32 %v3820, %v3868
      %3870 = vmatmul.bf16.gmra.mxu0 %v1901
      %v3871 = vpop.f32.mrf.mxu0
      %v3872 = vadd.f32 %v3823, %v3871
      %v3873 = vpop.f32.mrf.mxu0
      %v3874 = vadd.f32 %v3825, %v3873
      %3875 = vmatmul.bf16.gmra.mxu0 %v1933
      %v3876 = vpop.f32.mrf.mxu0
      %v3877 = vadd.f32 %v3828, %v3876
      %v3878 = vpop.f32.mrf.mxu0
      %v3879 = vadd.f32 %v3830, %v3878
      %3880 = vmatmul.bf16.gmra.mxu0 %v1965
      %v3881 = vpop.f32.mrf.mxu0
      %v3882 = vadd.f32 %v3833, %v3881
      %v3883 = vpop.f32.mrf.mxu0
      %v3884 = vadd.f32 %v3835, %v3883
      %3885 = vdwg.mxu0
      %3886 = vmatpush.bf16.msra.mxu0 %v3299
      %3887 = vmatpush.bf16.msra.mxu0 %v3298
      %3888 = vmatpush.bf16.msra.mxu0 %v3297
      %3889 = vmatpush.bf16.msra.mxu0 %v3296
      %3890 = vmatpush.bf16.msra.mxu0 %v3295
      %3891 = vmatpush.bf16.msra.mxu0 %v3294
      %3892 = vmatpush.bf16.msra.mxu0 %v3293
      %3893 = vmatpush.bf16.msra.mxu0 %v3292
      %3894 = vmatmul.bf16.gmra.mxu0 %v1742
      %v3895 = vpop.f32.mrf.mxu0
      %v3896 = vadd.f32 %v3847, %v3895
      %v3897 = vpop.f32.mrf.mxu0
      %v3898 = vadd.f32 %v3849, %v3897
      %3899 = vmatmul.bf16.gmra.mxu0 %v1774
      %v3900 = vpop.f32.mrf.mxu0
      %v3901 = vadd.f32 %v3852, %v3900
      %v3902 = vpop.f32.mrf.mxu0
      %v3903 = vadd.f32 %v3854, %v3902
      %3904 = vmatmul.bf16.gmra.mxu0 %v1806
      %v3905 = vpop.f32.mrf.mxu0
      %v3906 = vadd.f32 %v3857, %v3905
      %v3907 = vpop.f32.mrf.mxu0
      %v3908 = vadd.f32 %v3859, %v3907
      %3909 = vmatmul.bf16.gmra.mxu0 %v1838
      %v3910 = vpop.f32.mrf.mxu0
      %v3911 = vadd.f32 %v3862, %v3910
      %v3912 = vpop.f32.mrf.mxu0
      %v3913 = vadd.f32 %v3864, %v3912
      %3914 = vmatmul.bf16.gmra.mxu0 %v1870
      %v3915 = vpop.f32.mrf.mxu0
      %v3916 = vadd.f32 %v3867, %v3915
      %v3917 = vpop.f32.mrf.mxu0
      %v3918 = vadd.f32 %v3869, %v3917
      %3919 = vmatmul.bf16.gmra.mxu0 %v1902
      %v3920 = vpop.f32.mrf.mxu0
      %v3921 = vadd.f32 %v3872, %v3920
      %v3922 = vpop.f32.mrf.mxu0
      %v3923 = vadd.f32 %v3874, %v3922
      %3924 = vmatmul.bf16.gmra.mxu0 %v1934
      %v3925 = vpop.f32.mrf.mxu0
      %v3926 = vadd.f32 %v3877, %v3925
      %v3927 = vpop.f32.mrf.mxu0
      %v3928 = vadd.f32 %v3879, %v3927
      %3929 = vmatmul.bf16.gmra.mxu0 %v1966
      %v3930 = vpop.f32.mrf.mxu0
      %v3931 = vadd.f32 %v3882, %v3930
      %v3932 = vpop.f32.mrf.mxu0
      %v3933 = vadd.f32 %v3884, %v3932
      %3934 = vdwg.mxu0
      %3935 = vmatpush.bf16.msra.mxu0 %v3307
      %3936 = vmatpush.bf16.msra.mxu0 %v3306
      %3937 = vmatpush.bf16.msra.mxu0 %v3305
      %3938 = vmatpush.bf16.msra.mxu0 %v3304
      %3939 = vmatpush.bf16.msra.mxu0 %v3303
      %3940 = vmatpush.bf16.msra.mxu0 %v3302
      %3941 = vmatpush.bf16.msra.mxu0 %v3301
      %3942 = vmatpush.bf16.msra.mxu0 %v3300
      %3943 = vmatmul.bf16.gmra.mxu0 %v1743
      %v3944 = vpop.f32.mrf.mxu0
      %v3945 = vadd.f32 %v3896, %v3944
      %v3946 = vpop.f32.mrf.mxu0
      %v3947 = vadd.f32 %v3898, %v3946
      %3948 = vmatmul.bf16.gmra.mxu0 %v1775
      %v3949 = vpop.f32.mrf.mxu0
      %v3950 = vadd.f32 %v3901, %v3949
      %v3951 = vpop.f32.mrf.mxu0
      %v3952 = vadd.f32 %v3903, %v3951
      %3953 = vmatmul.bf16.gmra.mxu0 %v1807
      %v3954 = vpop.f32.mrf.mxu0
      %v3955 = vadd.f32 %v3906, %v3954
      %v3956 = vpop.f32.mrf.mxu0
      %v3957 = vadd.f32 %v3908, %v3956
      %3958 = vmatmul.bf16.gmra.mxu0 %v1839
      %v3959 = vpop.f32.mrf.mxu0
      %v3960 = vadd.f32 %v3911, %v3959
      %v3961 = vpop.f32.mrf.mxu0
      %v3962 = vadd.f32 %v3913, %v3961
      %3963 = vmatmul.bf16.gmra.mxu0 %v1871
      %v3964 = vpop.f32.mrf.mxu0
      %v3965 = vadd.f32 %v3916, %v3964
      %v3966 = vpop.f32.mrf.mxu0
      %v3967 = vadd.f32 %v3918, %v3966
      %3968 = vmatmul.bf16.gmra.mxu0 %v1903
      %v3969 = vpop.f32.mrf.mxu0
      %v3970 = vadd.f32 %v3921, %v3969
      %v3971 = vpop.f32.mrf.mxu0
      %v3972 = vadd.f32 %v3923, %v3971
      %3973 = vmatmul.bf16.gmra.mxu0 %v1935
      %v3974 = vpop.f32.mrf.mxu0
      %v3975 = vadd.f32 %v3926, %v3974
      %v3976 = vpop.f32.mrf.mxu0
      %v3977 = vadd.f32 %v3928, %v3976
      %3978 = vmatmul.bf16.gmra.mxu0 %v1967
      %v3979 = vpop.f32.mrf.mxu0
      %v3980 = vadd.f32 %v3931, %v3979
      %v3981 = vpop.f32.mrf.mxu0
      %v3982 = vadd.f32 %v3933, %v3981
      %3983 = vdwg.mxu0
      %3984 = vmatpush.bf16.msra.mxu0 %v3315
      %3985 = vmatpush.bf16.msra.mxu0 %v3314
      %3986 = vmatpush.bf16.msra.mxu0 %v3313
      %3987 = vmatpush.bf16.msra.mxu0 %v3312
      %3988 = vmatpush.bf16.msra.mxu0 %v3311
      %3989 = vmatpush.bf16.msra.mxu0 %v3310
      %3990 = vmatpush.bf16.msra.mxu0 %v3309
      %3991 = vmatpush.bf16.msra.mxu0 %v3308
      %3992 = vmatmul.bf16.gmra.mxu0 %v1744
      %v3993 = vpop.f32.mrf.mxu0
      %v3994 = vadd.f32 %v3945, %v3993
      %v3995 = vpop.f32.mrf.mxu0
      %v3996 = vadd.f32 %v3947, %v3995
      %3997 = vmatmul.bf16.gmra.mxu0 %v1776
      %v3998 = vpop.f32.mrf.mxu0
      %v3999 = vadd.f32 %v3950, %v3998
      %v4000 = vpop.f32.mrf.mxu0
      %v4001 = vadd.f32 %v3952, %v4000
      %4002 = vmatmul.bf16.gmra.mxu0 %v1808
      %v4003 = vpop.f32.mrf.mxu0
      %v4004 = vadd.f32 %v3955, %v4003
      %v4005 = vpop.f32.mrf.mxu0
      %v4006 = vadd.f32 %v3957, %v4005
      %4007 = vmatmul.bf16.gmra.mxu0 %v1840
      %v4008 = vpop.f32.mrf.mxu0
      %v4009 = vadd.f32 %v3960, %v4008
      %v4010 = vpop.f32.mrf.mxu0
      %v4011 = vadd.f32 %v3962, %v4010
      %4012 = vmatmul.bf16.gmra.mxu0 %v1872
      %v4013 = vpop.f32.mrf.mxu0
      %v4014 = vadd.f32 %v3965, %v4013
      %v4015 = vpop.f32.mrf.mxu0
      %v4016 = vadd.f32 %v3967, %v4015
      %4017 = vmatmul.bf16.gmra.mxu0 %v1904
      %v4018 = vpop.f32.mrf.mxu0
      %v4019 = vadd.f32 %v3970, %v4018
      %v4020 = vpop.f32.mrf.mxu0
      %v4021 = vadd.f32 %v3972, %v4020
      %4022 = vmatmul.bf16.gmra.mxu0 %v1936
      %v4023 = vpop.f32.mrf.mxu0
      %v4024 = vadd.f32 %v3975, %v4023
      %v4025 = vpop.f32.mrf.mxu0
      %v4026 = vadd.f32 %v3977, %v4025
      %4027 = vmatmul.bf16.gmra.mxu0 %v1968
      %v4028 = vpop.f32.mrf.mxu0
      %v4029 = vadd.f32 %v3980, %v4028
      %v4030 = vpop.f32.mrf.mxu0
      %v4031 = vadd.f32 %v3982, %v4030
      %4032 = vdwg.mxu0
      %4033 = vmatpush.bf16.msra.mxu0 %v3323
      %4034 = vmatpush.bf16.msra.mxu0 %v3322
      %4035 = vmatpush.bf16.msra.mxu0 %v3321
      %4036 = vmatpush.bf16.msra.mxu0 %v3320
      %4037 = vmatpush.bf16.msra.mxu0 %v3319
      %4038 = vmatpush.bf16.msra.mxu0 %v3318
      %4039 = vmatpush.bf16.msra.mxu0 %v3317
      %4040 = vmatpush.bf16.msra.mxu0 %v3316
      %4041 = vmatmul.bf16.gmra.mxu0 %v1745
      %v4042 = vpop.f32.mrf.mxu0
      %v4043 = vadd.f32 %v3994, %v4042
      %v4044 = vpop.f32.mrf.mxu0
      %v4045 = vadd.f32 %v3996, %v4044
      %4046 = vmatmul.bf16.gmra.mxu0 %v1777
      %v4047 = vpop.f32.mrf.mxu0
      %v4048 = vadd.f32 %v3999, %v4047
      %v4049 = vpop.f32.mrf.mxu0
      %v4050 = vadd.f32 %v4001, %v4049
      %4051 = vmatmul.bf16.gmra.mxu0 %v1809
      %v4052 = vpop.f32.mrf.mxu0
      %v4053 = vadd.f32 %v4004, %v4052
      %v4054 = vpop.f32.mrf.mxu0
      %v4055 = vadd.f32 %v4006, %v4054
      %4056 = vmatmul.bf16.gmra.mxu0 %v1841
      %v4057 = vpop.f32.mrf.mxu0
      %v4058 = vadd.f32 %v4009, %v4057
      %v4059 = vpop.f32.mrf.mxu0
      %v4060 = vadd.f32 %v4011, %v4059
      %4061 = vmatmul.bf16.gmra.mxu0 %v1873
      %v4062 = vpop.f32.mrf.mxu0
      %v4063 = vadd.f32 %v4014, %v4062
      %v4064 = vpop.f32.mrf.mxu0
      %v4065 = vadd.f32 %v4016, %v4064
      %4066 = vmatmul.bf16.gmra.mxu0 %v1905
      %v4067 = vpop.f32.mrf.mxu0
      %v4068 = vadd.f32 %v4019, %v4067
      %v4069 = vpop.f32.mrf.mxu0
      %v4070 = vadd.f32 %v4021, %v4069
      %4071 = vmatmul.bf16.gmra.mxu0 %v1937
      %v4072 = vpop.f32.mrf.mxu0
      %v4073 = vadd.f32 %v4024, %v4072
      %v4074 = vpop.f32.mrf.mxu0
      %v4075 = vadd.f32 %v4026, %v4074
      %4076 = vmatmul.bf16.gmra.mxu0 %v1969
      %v4077 = vpop.f32.mrf.mxu0
      %v4078 = vadd.f32 %v4029, %v4077
      %v4079 = vpop.f32.mrf.mxu0
      %v4080 = vadd.f32 %v4031, %v4079
      %4081 = vdwg.mxu0
      %4082 = vmatpush.bf16.msra.mxu0 %v3331
      %4083 = vmatpush.bf16.msra.mxu0 %v3330
      %4084 = vmatpush.bf16.msra.mxu0 %v3329
      %4085 = vmatpush.bf16.msra.mxu0 %v3328
      %4086 = vmatpush.bf16.msra.mxu0 %v3327
      %4087 = vmatpush.bf16.msra.mxu0 %v3326
      %4088 = vmatpush.bf16.msra.mxu0 %v3325
      %4089 = vmatpush.bf16.msra.mxu0 %v3324
      %4090 = vmatmul.bf16.gmra.mxu0 %v1746
      %v4091 = vpop.f32.mrf.mxu0
      %v4092 = vadd.f32 %v4043, %v4091
      %v4093 = vpop.f32.mrf.mxu0
      %v4094 = vadd.f32 %v4045, %v4093
      %4095 = vmatmul.bf16.gmra.mxu0 %v1778
      %v4096 = vpop.f32.mrf.mxu0
      %v4097 = vadd.f32 %v4048, %v4096
      %v4098 = vpop.f32.mrf.mxu0
      %v4099 = vadd.f32 %v4050, %v4098
      %4100 = vmatmul.bf16.gmra.mxu0 %v1810
      %v4101 = vpop.f32.mrf.mxu0
      %v4102 = vadd.f32 %v4053, %v4101
      %v4103 = vpop.f32.mrf.mxu0
      %v4104 = vadd.f32 %v4055, %v4103
      %4105 = vmatmul.bf16.gmra.mxu0 %v1842
      %v4106 = vpop.f32.mrf.mxu0
      %v4107 = vadd.f32 %v4058, %v4106
      %v4108 = vpop.f32.mrf.mxu0
      %v4109 = vadd.f32 %v4060, %v4108
      %4110 = vmatmul.bf16.gmra.mxu0 %v1874
      %v4111 = vpop.f32.mrf.mxu0
      %v4112 = vadd.f32 %v4063, %v4111
      %v4113 = vpop.f32.mrf.mxu0
      %v4114 = vadd.f32 %v4065, %v4113
      %4115 = vmatmul.bf16.gmra.mxu0 %v1906
      %v4116 = vpop.f32.mrf.mxu0
      %v4117 = vadd.f32 %v4068, %v4116
      %v4118 = vpop.f32.mrf.mxu0
      %v4119 = vadd.f32 %v4070, %v4118
      %4120 = vmatmul.bf16.gmra.mxu0 %v1938
      %v4121 = vpop.f32.mrf.mxu0
      %v4122 = vadd.f32 %v4073, %v4121
      %v4123 = vpop.f32.mrf.mxu0
      %v4124 = vadd.f32 %v4075, %v4123
      %4125 = vmatmul.bf16.gmra.mxu0 %v1970
      %v4126 = vpop.f32.mrf.mxu0
      %v4127 = vadd.f32 %v4078, %v4126
      %v4128 = vpop.f32.mrf.mxu0
      %v4129 = vadd.f32 %v4080, %v4128
      %4130 = vdwg.mxu0
      %4131 = vmatpush.bf16.msra.mxu0 %v3339
      %4132 = vmatpush.bf16.msra.mxu0 %v3338
      %4133 = vmatpush.bf16.msra.mxu0 %v3337
      %4134 = vmatpush.bf16.msra.mxu0 %v3336
      %4135 = vmatpush.bf16.msra.mxu0 %v3335
      %4136 = vmatpush.bf16.msra.mxu0 %v3334
      %4137 = vmatpush.bf16.msra.mxu0 %v3333
      %4138 = vmatpush.bf16.msra.mxu0 %v3332
      %4139 = vmatmul.bf16.gmra.mxu0 %v1747
      %v4140 = vpop.f32.mrf.mxu0
      %v4141 = vadd.f32 %v4092, %v4140
      %v4142 = vpop.f32.mrf.mxu0
      %v4143 = vadd.f32 %v4094, %v4142
      %4144 = vmatmul.bf16.gmra.mxu0 %v1779
      %v4145 = vpop.f32.mrf.mxu0
      %v4146 = vadd.f32 %v4097, %v4145
      %v4147 = vpop.f32.mrf.mxu0
      %v4148 = vadd.f32 %v4099, %v4147
      %4149 = vmatmul.bf16.gmra.mxu0 %v1811
      %v4150 = vpop.f32.mrf.mxu0
      %v4151 = vadd.f32 %v4102, %v4150
      %v4152 = vpop.f32.mrf.mxu0
      %v4153 = vadd.f32 %v4104, %v4152
      %4154 = vmatmul.bf16.gmra.mxu0 %v1843
      %v4155 = vpop.f32.mrf.mxu0
      %v4156 = vadd.f32 %v4107, %v4155
      %v4157 = vpop.f32.mrf.mxu0
      %v4158 = vadd.f32 %v4109, %v4157
      %4159 = vmatmul.bf16.gmra.mxu0 %v1875
      %v4160 = vpop.f32.mrf.mxu0
      %v4161 = vadd.f32 %v4112, %v4160
      %v4162 = vpop.f32.mrf.mxu0
      %v4163 = vadd.f32 %v4114, %v4162
      %4164 = vmatmul.bf16.gmra.mxu0 %v1907
      %v4165 = vpop.f32.mrf.mxu0
      %v4166 = vadd.f32 %v4117, %v4165
      %v4167 = vpop.f32.mrf.mxu0
      %v4168 = vadd.f32 %v4119, %v4167
      %4169 = vmatmul.bf16.gmra.mxu0 %v1939
      %v4170 = vpop.f32.mrf.mxu0
      %v4171 = vadd.f32 %v4122, %v4170
      %v4172 = vpop.f32.mrf.mxu0
      %v4173 = vadd.f32 %v4124, %v4172
      %4174 = vmatmul.bf16.gmra.mxu0 %v1971
      %v4175 = vpop.f32.mrf.mxu0
      %v4176 = vadd.f32 %v4127, %v4175
      %v4177 = vpop.f32.mrf.mxu0
      %v4178 = vadd.f32 %v4129, %v4177
      %4179 = vdwg.mxu0
      %4180 = vmatpush.bf16.msra.mxu0 %v3347
      %4181 = vmatpush.bf16.msra.mxu0 %v3346
      %4182 = vmatpush.bf16.msra.mxu0 %v3345
      %4183 = vmatpush.bf16.msra.mxu0 %v3344
      %4184 = vmatpush.bf16.msra.mxu0 %v3343
      %4185 = vmatpush.bf16.msra.mxu0 %v3342
      %4186 = vmatpush.bf16.msra.mxu0 %v3341
      %4187 = vmatpush.bf16.msra.mxu0 %v3340
      %4188 = vmatmul.bf16.gmra.mxu0 %v1748
      %v4189 = vpop.f32.mrf.mxu0
      %v4190 = vadd.f32 %v4141, %v4189
      %v4191 = vpop.f32.mrf.mxu0
      %v4192 = vadd.f32 %v4143, %v4191
      %4193 = vmatmul.bf16.gmra.mxu0 %v1780
      %v4194 = vpop.f32.mrf.mxu0
      %v4195 = vadd.f32 %v4146, %v4194
      %v4196 = vpop.f32.mrf.mxu0
      %v4197 = vadd.f32 %v4148, %v4196
      %4198 = vmatmul.bf16.gmra.mxu0 %v1812
      %v4199 = vpop.f32.mrf.mxu0
      %v4200 = vadd.f32 %v4151, %v4199
      %v4201 = vpop.f32.mrf.mxu0
      %v4202 = vadd.f32 %v4153, %v4201
      %4203 = vmatmul.bf16.gmra.mxu0 %v1844
      %v4204 = vpop.f32.mrf.mxu0
      %v4205 = vadd.f32 %v4156, %v4204
      %v4206 = vpop.f32.mrf.mxu0
      %v4207 = vadd.f32 %v4158, %v4206
      %4208 = vmatmul.bf16.gmra.mxu0 %v1876
      %v4209 = vpop.f32.mrf.mxu0
      %v4210 = vadd.f32 %v4161, %v4209
      %v4211 = vpop.f32.mrf.mxu0
      %v4212 = vadd.f32 %v4163, %v4211
      %4213 = vmatmul.bf16.gmra.mxu0 %v1908
      %v4214 = vpop.f32.mrf.mxu0
      %v4215 = vadd.f32 %v4166, %v4214
      %v4216 = vpop.f32.mrf.mxu0
      %v4217 = vadd.f32 %v4168, %v4216
      %4218 = vmatmul.bf16.gmra.mxu0 %v1940
      %v4219 = vpop.f32.mrf.mxu0
      %v4220 = vadd.f32 %v4171, %v4219
      %v4221 = vpop.f32.mrf.mxu0
      %v4222 = vadd.f32 %v4173, %v4221
      %4223 = vmatmul.bf16.gmra.mxu0 %v1972
      %v4224 = vpop.f32.mrf.mxu0
      %v4225 = vadd.f32 %v4176, %v4224
      %v4226 = vpop.f32.mrf.mxu0
      %v4227 = vadd.f32 %v4178, %v4226
      %4228 = vdwg.mxu0
      %4229 = vmatpush.bf16.msra.mxu0 %v3355
      %4230 = vmatpush.bf16.msra.mxu0 %v3354
      %4231 = vmatpush.bf16.msra.mxu0 %v3353
      %4232 = vmatpush.bf16.msra.mxu0 %v3352
      %4233 = vmatpush.bf16.msra.mxu0 %v3351
      %4234 = vmatpush.bf16.msra.mxu0 %v3350
      %4235 = vmatpush.bf16.msra.mxu0 %v3349
      %4236 = vmatpush.bf16.msra.mxu0 %v3348
      %4237 = vmatmul.bf16.gmra.mxu0 %v1749
      %v4238 = vpop.f32.mrf.mxu0
      %v4239 = vadd.f32 %v4190, %v4238
      %v4240 = vpop.f32.mrf.mxu0
      %v4241 = vadd.f32 %v4192, %v4240
      %4242 = vmatmul.bf16.gmra.mxu0 %v1781
      %v4243 = vpop.f32.mrf.mxu0
      %v4244 = vadd.f32 %v4195, %v4243
      %v4245 = vpop.f32.mrf.mxu0
      %v4246 = vadd.f32 %v4197, %v4245
      %4247 = vmatmul.bf16.gmra.mxu0 %v1813
      %v4248 = vpop.f32.mrf.mxu0
      %v4249 = vadd.f32 %v4200, %v4248
      %v4250 = vpop.f32.mrf.mxu0
      %v4251 = vadd.f32 %v4202, %v4250
      %4252 = vmatmul.bf16.gmra.mxu0 %v1845
      %v4253 = vpop.f32.mrf.mxu0
      %v4254 = vadd.f32 %v4205, %v4253
      %v4255 = vpop.f32.mrf.mxu0
      %v4256 = vadd.f32 %v4207, %v4255
      %4257 = vmatmul.bf16.gmra.mxu0 %v1877
      %v4258 = vpop.f32.mrf.mxu0
      %v4259 = vadd.f32 %v4210, %v4258
      %v4260 = vpop.f32.mrf.mxu0
      %v4261 = vadd.f32 %v4212, %v4260
      %4262 = vmatmul.bf16.gmra.mxu0 %v1909
      %v4263 = vpop.f32.mrf.mxu0
      %v4264 = vadd.f32 %v4215, %v4263
      %v4265 = vpop.f32.mrf.mxu0
      %v4266 = vadd.f32 %v4217, %v4265
      %4267 = vmatmul.bf16.gmra.mxu0 %v1941
      %v4268 = vpop.f32.mrf.mxu0
      %v4269 = vadd.f32 %v4220, %v4268
      %v4270 = vpop.f32.mrf.mxu0
      %v4271 = vadd.f32 %v4222, %v4270
      %4272 = vmatmul.bf16.gmra.mxu0 %v1973
      %v4273 = vpop.f32.mrf.mxu0
      %v4274 = vadd.f32 %v4225, %v4273
      %v4275 = vpop.f32.mrf.mxu0
      %v4276 = vadd.f32 %v4227, %v4275
      %4277 = vdwg.mxu0
      %4278 = vmatpush.bf16.msra.mxu0 %v3363
      %4279 = vmatpush.bf16.msra.mxu0 %v3362
      %4280 = vmatpush.bf16.msra.mxu0 %v3361
      %4281 = vmatpush.bf16.msra.mxu0 %v3360
      %4282 = vmatpush.bf16.msra.mxu0 %v3359
      %4283 = vmatpush.bf16.msra.mxu0 %v3358
      %4284 = vmatpush.bf16.msra.mxu0 %v3357
      %4285 = vmatpush.bf16.msra.mxu0 %v3356
      %4286 = vmatmul.bf16.gmra.mxu0 %v1750
      %v4287 = vpop.f32.mrf.mxu0
      %v4288 = vadd.f32 %v4239, %v4287
      %v4289 = vpop.f32.mrf.mxu0
      %v4290 = vadd.f32 %v4241, %v4289
      %4291 = vmatmul.bf16.gmra.mxu0 %v1782
      %v4292 = vpop.f32.mrf.mxu0
      %v4293 = vadd.f32 %v4244, %v4292
      %v4294 = vpop.f32.mrf.mxu0
      %v4295 = vadd.f32 %v4246, %v4294
      %4296 = vmatmul.bf16.gmra.mxu0 %v1814
      %v4297 = vpop.f32.mrf.mxu0
      %v4298 = vadd.f32 %v4249, %v4297
      %v4299 = vpop.f32.mrf.mxu0
      %v4300 = vadd.f32 %v4251, %v4299
      %4301 = vmatmul.bf16.gmra.mxu0 %v1846
      %v4302 = vpop.f32.mrf.mxu0
      %v4303 = vadd.f32 %v4254, %v4302
      %v4304 = vpop.f32.mrf.mxu0
      %v4305 = vadd.f32 %v4256, %v4304
      %4306 = vmatmul.bf16.gmra.mxu0 %v1878
      %v4307 = vpop.f32.mrf.mxu0
      %v4308 = vadd.f32 %v4259, %v4307
      %v4309 = vpop.f32.mrf.mxu0
      %v4310 = vadd.f32 %v4261, %v4309
      %4311 = vmatmul.bf16.gmra.mxu0 %v1910
      %v4312 = vpop.f32.mrf.mxu0
      %v4313 = vadd.f32 %v4264, %v4312
      %v4314 = vpop.f32.mrf.mxu0
      %v4315 = vadd.f32 %v4266, %v4314
      %4316 = vmatmul.bf16.gmra.mxu0 %v1942
      %v4317 = vpop.f32.mrf.mxu0
      %v4318 = vadd.f32 %v4269, %v4317
      %v4319 = vpop.f32.mrf.mxu0
      %v4320 = vadd.f32 %v4271, %v4319
      %4321 = vmatmul.bf16.gmra.mxu0 %v1974
      %v4322 = vpop.f32.mrf.mxu0
      %v4323 = vadd.f32 %v4274, %v4322
      %v4324 = vpop.f32.mrf.mxu0
      %v4325 = vadd.f32 %v4276, %v4324
      %4326 = vdwg.mxu0
      %4327 = vmatpush.bf16.msra.mxu0 %v3371
      %4328 = vmatpush.bf16.msra.mxu0 %v3370
      %4329 = vmatpush.bf16.msra.mxu0 %v3369
      %4330 = vmatpush.bf16.msra.mxu0 %v3368
      %4331 = vmatpush.bf16.msra.mxu0 %v3367
      %4332 = vmatpush.bf16.msra.mxu0 %v3366
      %4333 = vmatpush.bf16.msra.mxu0 %v3365
      %4334 = vmatpush.bf16.msra.mxu0 %v3364
      %4335 = vmatmul.bf16.gmra.mxu0 %v1751
      %v4336 = vpop.f32.mrf.mxu0
      %v4337 = vadd.f32 %v4288, %v4336
      %v4338 = vpop.f32.mrf.mxu0
      %v4339 = vadd.f32 %v4290, %v4338
      %4340 = vmatmul.bf16.gmra.mxu0 %v1783
      %v4341 = vpop.f32.mrf.mxu0
      %v4342 = vadd.f32 %v4293, %v4341
      %v4343 = vpop.f32.mrf.mxu0
      %v4344 = vadd.f32 %v4295, %v4343
      %4345 = vmatmul.bf16.gmra.mxu0 %v1815
      %v4346 = vpop.f32.mrf.mxu0
      %v4347 = vadd.f32 %v4298, %v4346
      %v4348 = vpop.f32.mrf.mxu0
      %v4349 = vadd.f32 %v4300, %v4348
      %4350 = vmatmul.bf16.gmra.mxu0 %v1847
      %v4351 = vpop.f32.mrf.mxu0
      %v4352 = vadd.f32 %v4303, %v4351
      %v4353 = vpop.f32.mrf.mxu0
      %v4354 = vadd.f32 %v4305, %v4353
      %4355 = vmatmul.bf16.gmra.mxu0 %v1879
      %v4356 = vpop.f32.mrf.mxu0
      %v4357 = vadd.f32 %v4308, %v4356
      %v4358 = vpop.f32.mrf.mxu0
      %v4359 = vadd.f32 %v4310, %v4358
      %4360 = vmatmul.bf16.gmra.mxu0 %v1911
      %v4361 = vpop.f32.mrf.mxu0
      %v4362 = vadd.f32 %v4313, %v4361
      %v4363 = vpop.f32.mrf.mxu0
      %v4364 = vadd.f32 %v4315, %v4363
      %4365 = vmatmul.bf16.gmra.mxu0 %v1943
      %v4366 = vpop.f32.mrf.mxu0
      %v4367 = vadd.f32 %v4318, %v4366
      %v4368 = vpop.f32.mrf.mxu0
      %v4369 = vadd.f32 %v4320, %v4368
      %4370 = vmatmul.bf16.gmra.mxu0 %v1975
      %v4371 = vpop.f32.mrf.mxu0
      %v4372 = vadd.f32 %v4323, %v4371
      %v4373 = vpop.f32.mrf.mxu0
      %v4374 = vadd.f32 %v4325, %v4373
      %4375 = vdwg.mxu0
      %4376 = vmatpush.bf16.msra.mxu0 %v3379
      %4377 = vmatpush.bf16.msra.mxu0 %v3378
      %4378 = vmatpush.bf16.msra.mxu0 %v3377
      %4379 = vmatpush.bf16.msra.mxu0 %v3376
      %4380 = vmatpush.bf16.msra.mxu0 %v3375
      %4381 = vmatpush.bf16.msra.mxu0 %v3374
      %4382 = vmatpush.bf16.msra.mxu0 %v3373
      %4383 = vmatpush.bf16.msra.mxu0 %v3372
      %4384 = vmatmul.bf16.gmra.mxu0 %v1752
      %v4385 = vpop.f32.mrf.mxu0
      %v4386 = vadd.f32 %v4337, %v4385
      %v4387 = vpop.f32.mrf.mxu0
      %v4388 = vadd.f32 %v4339, %v4387
      %4389 = vmatmul.bf16.gmra.mxu0 %v1784
      %v4390 = vpop.f32.mrf.mxu0
      %v4391 = vadd.f32 %v4342, %v4390
      %v4392 = vpop.f32.mrf.mxu0
      %v4393 = vadd.f32 %v4344, %v4392
      %4394 = vmatmul.bf16.gmra.mxu0 %v1816
      %v4395 = vpop.f32.mrf.mxu0
      %v4396 = vadd.f32 %v4347, %v4395
      %v4397 = vpop.f32.mrf.mxu0
      %v4398 = vadd.f32 %v4349, %v4397
      %4399 = vmatmul.bf16.gmra.mxu0 %v1848
      %v4400 = vpop.f32.mrf.mxu0
      %v4401 = vadd.f32 %v4352, %v4400
      %v4402 = vpop.f32.mrf.mxu0
      %v4403 = vadd.f32 %v4354, %v4402
      %4404 = vmatmul.bf16.gmra.mxu0 %v1880
      %v4405 = vpop.f32.mrf.mxu0
      %v4406 = vadd.f32 %v4357, %v4405
      %v4407 = vpop.f32.mrf.mxu0
      %v4408 = vadd.f32 %v4359, %v4407
      %4409 = vmatmul.bf16.gmra.mxu0 %v1912
      %v4410 = vpop.f32.mrf.mxu0
      %v4411 = vadd.f32 %v4362, %v4410
      %v4412 = vpop.f32.mrf.mxu0
      %v4413 = vadd.f32 %v4364, %v4412
      %4414 = vmatmul.bf16.gmra.mxu0 %v1944
      %v4415 = vpop.f32.mrf.mxu0
      %v4416 = vadd.f32 %v4367, %v4415
      %v4417 = vpop.f32.mrf.mxu0
      %v4418 = vadd.f32 %v4369, %v4417
      %4419 = vmatmul.bf16.gmra.mxu0 %v1976
      %v4420 = vpop.f32.mrf.mxu0
      %v4421 = vadd.f32 %v4372, %v4420
      %v4422 = vpop.f32.mrf.mxu0
      %v4423 = vadd.f32 %v4374, %v4422
      %4424 = vdwg.mxu0
      %4425 = vmatpush.bf16.msra.mxu0 %v3387
      %4426 = vmatpush.bf16.msra.mxu0 %v3386
      %4427 = vmatpush.bf16.msra.mxu0 %v3385
      %4428 = vmatpush.bf16.msra.mxu0 %v3384
      %4429 = vmatpush.bf16.msra.mxu0 %v3383
      %4430 = vmatpush.bf16.msra.mxu0 %v3382
      %4431 = vmatpush.bf16.msra.mxu0 %v3381
      %4432 = vmatpush.bf16.msra.mxu0 %v3380
      %4433 = vmatmul.bf16.gmra.mxu0 %v1753
      %v4434 = vpop.f32.mrf.mxu0
      %v4435 = vadd.f32 %v4386, %v4434
      %v4436 = vpop.f32.mrf.mxu0
      %v4437 = vadd.f32 %v4388, %v4436
      %4438 = vmatmul.bf16.gmra.mxu0 %v1785
      %v4439 = vpop.f32.mrf.mxu0
      %v4440 = vadd.f32 %v4391, %v4439
      %v4441 = vpop.f32.mrf.mxu0
      %v4442 = vadd.f32 %v4393, %v4441
      %4443 = vmatmul.bf16.gmra.mxu0 %v1817
      %v4444 = vpop.f32.mrf.mxu0
      %v4445 = vadd.f32 %v4396, %v4444
      %v4446 = vpop.f32.mrf.mxu0
      %v4447 = vadd.f32 %v4398, %v4446
      %4448 = vmatmul.bf16.gmra.mxu0 %v1849
      %v4449 = vpop.f32.mrf.mxu0
      %v4450 = vadd.f32 %v4401, %v4449
      %v4451 = vpop.f32.mrf.mxu0
      %v4452 = vadd.f32 %v4403, %v4451
      %4453 = vmatmul.bf16.gmra.mxu0 %v1881
      %v4454 = vpop.f32.mrf.mxu0
      %v4455 = vadd.f32 %v4406, %v4454
      %v4456 = vpop.f32.mrf.mxu0
      %v4457 = vadd.f32 %v4408, %v4456
      %4458 = vmatmul.bf16.gmra.mxu0 %v1913
      %v4459 = vpop.f32.mrf.mxu0
      %v4460 = vadd.f32 %v4411, %v4459
      %v4461 = vpop.f32.mrf.mxu0
      %v4462 = vadd.f32 %v4413, %v4461
      %4463 = vmatmul.bf16.gmra.mxu0 %v1945
      %v4464 = vpop.f32.mrf.mxu0
      %v4465 = vadd.f32 %v4416, %v4464
      %v4466 = vpop.f32.mrf.mxu0
      %v4467 = vadd.f32 %v4418, %v4466
      %4468 = vmatmul.bf16.gmra.mxu0 %v1977
      %v4469 = vpop.f32.mrf.mxu0
      %v4470 = vadd.f32 %v4421, %v4469
      %v4471 = vpop.f32.mrf.mxu0
      %v4472 = vadd.f32 %v4423, %v4471
      %4473 = vdwg.mxu0
      %4474 = vmatpush.bf16.msra.mxu0 %v3395
      %4475 = vmatpush.bf16.msra.mxu0 %v3394
      %4476 = vmatpush.bf16.msra.mxu0 %v3393
      %4477 = vmatpush.bf16.msra.mxu0 %v3392
      %4478 = vmatpush.bf16.msra.mxu0 %v3391
      %4479 = vmatpush.bf16.msra.mxu0 %v3390
      %4480 = vmatpush.bf16.msra.mxu0 %v3389
      %4481 = vmatpush.bf16.msra.mxu0 %v3388
      %4482 = vmatmul.bf16.gmra.mxu0 %v1754
      %v4483 = vpop.f32.mrf.mxu0
      %v4484 = vadd.f32 %v4435, %v4483
      %v4485 = vpop.f32.mrf.mxu0
      %v4486 = vadd.f32 %v4437, %v4485
      %4487 = vmatmul.bf16.gmra.mxu0 %v1786
      %v4488 = vpop.f32.mrf.mxu0
      %v4489 = vadd.f32 %v4440, %v4488
      %v4490 = vpop.f32.mrf.mxu0
      %v4491 = vadd.f32 %v4442, %v4490
      %4492 = vmatmul.bf16.gmra.mxu0 %v1818
      %v4493 = vpop.f32.mrf.mxu0
      %v4494 = vadd.f32 %v4445, %v4493
      %v4495 = vpop.f32.mrf.mxu0
      %v4496 = vadd.f32 %v4447, %v4495
      %4497 = vmatmul.bf16.gmra.mxu0 %v1850
      %v4498 = vpop.f32.mrf.mxu0
      %v4499 = vadd.f32 %v4450, %v4498
      %v4500 = vpop.f32.mrf.mxu0
      %v4501 = vadd.f32 %v4452, %v4500
      %4502 = vmatmul.bf16.gmra.mxu0 %v1882
      %v4503 = vpop.f32.mrf.mxu0
      %v4504 = vadd.f32 %v4455, %v4503
      %v4505 = vpop.f32.mrf.mxu0
      %v4506 = vadd.f32 %v4457, %v4505
      %4507 = vmatmul.bf16.gmra.mxu0 %v1914
      %v4508 = vpop.f32.mrf.mxu0
      %v4509 = vadd.f32 %v4460, %v4508
      %v4510 = vpop.f32.mrf.mxu0
      %v4511 = vadd.f32 %v4462, %v4510
      %4512 = vmatmul.bf16.gmra.mxu0 %v1946
      %v4513 = vpop.f32.mrf.mxu0
      %v4514 = vadd.f32 %v4465, %v4513
      %v4515 = vpop.f32.mrf.mxu0
      %v4516 = vadd.f32 %v4467, %v4515
      %4517 = vmatmul.bf16.gmra.mxu0 %v1978
      %v4518 = vpop.f32.mrf.mxu0
      %v4519 = vadd.f32 %v4470, %v4518
      %v4520 = vpop.f32.mrf.mxu0
      %v4521 = vadd.f32 %v4472, %v4520
      %4522 = vdwg.mxu0
      %4523 = vmatpush.bf16.msra.mxu0 %v3403
      %4524 = vmatpush.bf16.msra.mxu0 %v3402
      %4525 = vmatpush.bf16.msra.mxu0 %v3401
      %4526 = vmatpush.bf16.msra.mxu0 %v3400
      %4527 = vmatpush.bf16.msra.mxu0 %v3399
      %4528 = vmatpush.bf16.msra.mxu0 %v3398
      %4529 = vmatpush.bf16.msra.mxu0 %v3397
      %4530 = vmatpush.bf16.msra.mxu0 %v3396
      %4531 = vmatmul.bf16.gmra.mxu0 %v1755
      %v4532 = vpop.f32.mrf.mxu0
      %v4533 = vadd.f32 %v4484, %v4532
      %v4534 = vpop.f32.mrf.mxu0
      %v4535 = vadd.f32 %v4486, %v4534
      %4536 = vmatmul.bf16.gmra.mxu0 %v1787
      %v4537 = vpop.f32.mrf.mxu0
      %v4538 = vadd.f32 %v4489, %v4537
      %v4539 = vpop.f32.mrf.mxu0
      %v4540 = vadd.f32 %v4491, %v4539
      %4541 = vmatmul.bf16.gmra.mxu0 %v1819
      %v4542 = vpop.f32.mrf.mxu0
      %v4543 = vadd.f32 %v4494, %v4542
      %v4544 = vpop.f32.mrf.mxu0
      %v4545 = vadd.f32 %v4496, %v4544
      %4546 = vmatmul.bf16.gmra.mxu0 %v1851
      %v4547 = vpop.f32.mrf.mxu0
      %v4548 = vadd.f32 %v4499, %v4547
      %v4549 = vpop.f32.mrf.mxu0
      %v4550 = vadd.f32 %v4501, %v4549
      %4551 = vmatmul.bf16.gmra.mxu0 %v1883
      %v4552 = vpop.f32.mrf.mxu0
      %v4553 = vadd.f32 %v4504, %v4552
      %v4554 = vpop.f32.mrf.mxu0
      %v4555 = vadd.f32 %v4506, %v4554
      %4556 = vmatmul.bf16.gmra.mxu0 %v1915
      %v4557 = vpop.f32.mrf.mxu0
      %v4558 = vadd.f32 %v4509, %v4557
      %v4559 = vpop.f32.mrf.mxu0
      %v4560 = vadd.f32 %v4511, %v4559
      %4561 = vmatmul.bf16.gmra.mxu0 %v1947
      %v4562 = vpop.f32.mrf.mxu0
      %v4563 = vadd.f32 %v4514, %v4562
      %v4564 = vpop.f32.mrf.mxu0
      %v4565 = vadd.f32 %v4516, %v4564
      %4566 = vmatmul.bf16.gmra.mxu0 %v1979
      %v4567 = vpop.f32.mrf.mxu0
      %v4568 = vadd.f32 %v4519, %v4567
      %v4569 = vpop.f32.mrf.mxu0
      %v4570 = vadd.f32 %v4521, %v4569
      %4571 = vdwg.mxu0
      %4572 = vmatpush.bf16.msra.mxu0 %v3411
      %4573 = vmatpush.bf16.msra.mxu0 %v3410
      %4574 = vmatpush.bf16.msra.mxu0 %v3409
      %4575 = vmatpush.bf16.msra.mxu0 %v3408
      %4576 = vmatpush.bf16.msra.mxu0 %v3407
      %4577 = vmatpush.bf16.msra.mxu0 %v3406
      %4578 = vmatpush.bf16.msra.mxu0 %v3405
      %4579 = vmatpush.bf16.msra.mxu0 %v3404
      %4580 = vmatmul.bf16.gmra.mxu0 %v1756
      %v4581 = vpop.f32.mrf.mxu0
      %v4582 = vadd.f32 %v4533, %v4581
      %v4583 = vpop.f32.mrf.mxu0
      %v4584 = vadd.f32 %v4535, %v4583
      %4585 = vmatmul.bf16.gmra.mxu0 %v1788
      %v4586 = vpop.f32.mrf.mxu0
      %v4587 = vadd.f32 %v4538, %v4586
      %v4588 = vpop.f32.mrf.mxu0
      %v4589 = vadd.f32 %v4540, %v4588
      %4590 = vmatmul.bf16.gmra.mxu0 %v1820
      %v4591 = vpop.f32.mrf.mxu0
      %v4592 = vadd.f32 %v4543, %v4591
      %v4593 = vpop.f32.mrf.mxu0
      %v4594 = vadd.f32 %v4545, %v4593
      %4595 = vmatmul.bf16.gmra.mxu0 %v1852
      %v4596 = vpop.f32.mrf.mxu0
      %v4597 = vadd.f32 %v4548, %v4596
      %v4598 = vpop.f32.mrf.mxu0
      %v4599 = vadd.f32 %v4550, %v4598
      %4600 = vmatmul.bf16.gmra.mxu0 %v1884
      %v4601 = vpop.f32.mrf.mxu0
      %v4602 = vadd.f32 %v4553, %v4601
      %v4603 = vpop.f32.mrf.mxu0
      %v4604 = vadd.f32 %v4555, %v4603
      %4605 = vmatmul.bf16.gmra.mxu0 %v1916
      %v4606 = vpop.f32.mrf.mxu0
      %v4607 = vadd.f32 %v4558, %v4606
      %v4608 = vpop.f32.mrf.mxu0
      %v4609 = vadd.f32 %v4560, %v4608
      %4610 = vmatmul.bf16.gmra.mxu0 %v1948
      %v4611 = vpop.f32.mrf.mxu0
      %v4612 = vadd.f32 %v4563, %v4611
      %v4613 = vpop.f32.mrf.mxu0
      %v4614 = vadd.f32 %v4565, %v4613
      %4615 = vmatmul.bf16.gmra.mxu0 %v1980
      %v4616 = vpop.f32.mrf.mxu0
      %v4617 = vadd.f32 %v4568, %v4616
      %v4618 = vpop.f32.mrf.mxu0
      %v4619 = vadd.f32 %v4570, %v4618
      %4620 = vdwg.mxu0
      %4621 = vmatpush.bf16.msra.mxu0 %v3419
      %4622 = vmatpush.bf16.msra.mxu0 %v3418
      %4623 = vmatpush.bf16.msra.mxu0 %v3417
      %4624 = vmatpush.bf16.msra.mxu0 %v3416
      %4625 = vmatpush.bf16.msra.mxu0 %v3415
      %4626 = vmatpush.bf16.msra.mxu0 %v3414
      %4627 = vmatpush.bf16.msra.mxu0 %v3413
      %4628 = vmatpush.bf16.msra.mxu0 %v3412
      %4629 = vmatmul.bf16.gmra.mxu0 %v1757
      %v4630 = vpop.f32.mrf.mxu0
      %v4631 = vadd.f32 %v4582, %v4630
      %v4632 = vpop.f32.mrf.mxu0
      %v4633 = vadd.f32 %v4584, %v4632
      %4634 = vmatmul.bf16.gmra.mxu0 %v1789
      %v4635 = vpop.f32.mrf.mxu0
      %v4636 = vadd.f32 %v4587, %v4635
      %v4637 = vpop.f32.mrf.mxu0
      %v4638 = vadd.f32 %v4589, %v4637
      %4639 = vmatmul.bf16.gmra.mxu0 %v1821
      %v4640 = vpop.f32.mrf.mxu0
      %v4641 = vadd.f32 %v4592, %v4640
      %v4642 = vpop.f32.mrf.mxu0
      %v4643 = vadd.f32 %v4594, %v4642
      %4644 = vmatmul.bf16.gmra.mxu0 %v1853
      %v4645 = vpop.f32.mrf.mxu0
      %v4646 = vadd.f32 %v4597, %v4645
      %v4647 = vpop.f32.mrf.mxu0
      %v4648 = vadd.f32 %v4599, %v4647
      %4649 = vmatmul.bf16.gmra.mxu0 %v1885
      %v4650 = vpop.f32.mrf.mxu0
      %v4651 = vadd.f32 %v4602, %v4650
      %v4652 = vpop.f32.mrf.mxu0
      %v4653 = vadd.f32 %v4604, %v4652
      %4654 = vmatmul.bf16.gmra.mxu0 %v1917
      %v4655 = vpop.f32.mrf.mxu0
      %v4656 = vadd.f32 %v4607, %v4655
      %v4657 = vpop.f32.mrf.mxu0
      %v4658 = vadd.f32 %v4609, %v4657
      %4659 = vmatmul.bf16.gmra.mxu0 %v1949
      %v4660 = vpop.f32.mrf.mxu0
      %v4661 = vadd.f32 %v4612, %v4660
      %v4662 = vpop.f32.mrf.mxu0
      %v4663 = vadd.f32 %v4614, %v4662
      %4664 = vmatmul.bf16.gmra.mxu0 %v1981
      %v4665 = vpop.f32.mrf.mxu0
      %v4666 = vadd.f32 %v4617, %v4665
      %v4667 = vpop.f32.mrf.mxu0
      %v4668 = vadd.f32 %v4619, %v4667
      %4669 = vdwg.mxu0
      %4670 = vmatpush.bf16.msra.mxu0 %v3427
      %4671 = vmatpush.bf16.msra.mxu0 %v3426
      %4672 = vmatpush.bf16.msra.mxu0 %v3425
      %4673 = vmatpush.bf16.msra.mxu0 %v3424
      %4674 = vmatpush.bf16.msra.mxu0 %v3423
      %4675 = vmatpush.bf16.msra.mxu0 %v3422
      %4676 = vmatpush.bf16.msra.mxu0 %v3421
      %4677 = vmatpush.bf16.msra.mxu0 %v3420
      %4678 = vmatmul.bf16.gmra.mxu0 %v1758
      %v4679 = vpop.f32.mrf.mxu0
      %v4680 = vadd.f32 %v4631, %v4679
      %v4681 = vpop.f32.mrf.mxu0
      %v4682 = vadd.f32 %v4633, %v4681
      %4683 = vmatmul.bf16.gmra.mxu0 %v1790
      %v4684 = vpop.f32.mrf.mxu0
      %v4685 = vadd.f32 %v4636, %v4684
      %v4686 = vpop.f32.mrf.mxu0
      %v4687 = vadd.f32 %v4638, %v4686
      %4688 = vmatmul.bf16.gmra.mxu0 %v1822
      %v4689 = vpop.f32.mrf.mxu0
      %v4690 = vadd.f32 %v4641, %v4689
      %v4691 = vpop.f32.mrf.mxu0
      %v4692 = vadd.f32 %v4643, %v4691
      %4693 = vmatmul.bf16.gmra.mxu0 %v1854
      %v4694 = vpop.f32.mrf.mxu0
      %v4695 = vadd.f32 %v4646, %v4694
      %v4696 = vpop.f32.mrf.mxu0
      %v4697 = vadd.f32 %v4648, %v4696
      %4698 = vmatmul.bf16.gmra.mxu0 %v1886
      %v4699 = vpop.f32.mrf.mxu0
      %v4700 = vadd.f32 %v4651, %v4699
      %v4701 = vpop.f32.mrf.mxu0
      %v4702 = vadd.f32 %v4653, %v4701
      %4703 = vmatmul.bf16.gmra.mxu0 %v1918
      %v4704 = vpop.f32.mrf.mxu0
      %v4705 = vadd.f32 %v4656, %v4704
      %v4706 = vpop.f32.mrf.mxu0
      %v4707 = vadd.f32 %v4658, %v4706
      %4708 = vmatmul.bf16.gmra.mxu0 %v1950
      %v4709 = vpop.f32.mrf.mxu0
      %v4710 = vadd.f32 %v4661, %v4709
      %v4711 = vpop.f32.mrf.mxu0
      %v4712 = vadd.f32 %v4663, %v4711
      %4713 = vmatmul.bf16.gmra.mxu0 %v1982
      %v4714 = vpop.f32.mrf.mxu0
      %v4715 = vadd.f32 %v4666, %v4714
      %v4716 = vpop.f32.mrf.mxu0
      %v4717 = vadd.f32 %v4668, %v4716
      %4718 = vdwg.mxu0
      %4719 = vmatpush.bf16.msra.mxu0 %v3435
      %4720 = vmatpush.bf16.msra.mxu0 %v3434
      %4721 = vmatpush.bf16.msra.mxu0 %v3433
      %4722 = vmatpush.bf16.msra.mxu0 %v3432
      %4723 = vmatpush.bf16.msra.mxu0 %v3431
      %4724 = vmatpush.bf16.msra.mxu0 %v3430
      %4725 = vmatpush.bf16.msra.mxu0 %v3429
      %4726 = vmatpush.bf16.msra.mxu0 %v3428
      %4727 = vmatmul.bf16.gmra.mxu0 %v1759
      %v4728 = vpop.f32.mrf.mxu0
      %v4729 = vadd.f32 %v4680, %v4728
      %v4730 = vpop.f32.mrf.mxu0
      %v4731 = vadd.f32 %v4682, %v4730
      %4732 = vmatmul.bf16.gmra.mxu0 %v1791
      %v4733 = vpop.f32.mrf.mxu0
      %v4734 = vadd.f32 %v4685, %v4733
      %v4735 = vpop.f32.mrf.mxu0
      %v4736 = vadd.f32 %v4687, %v4735
      %4737 = vmatmul.bf16.gmra.mxu0 %v1823
      %v4738 = vpop.f32.mrf.mxu0
      %v4739 = vadd.f32 %v4690, %v4738
      %v4740 = vpop.f32.mrf.mxu0
      %v4741 = vadd.f32 %v4692, %v4740
      %4742 = vmatmul.bf16.gmra.mxu0 %v1855
      %v4743 = vpop.f32.mrf.mxu0
      %v4744 = vadd.f32 %v4695, %v4743
      %v4745 = vpop.f32.mrf.mxu0
      %v4746 = vadd.f32 %v4697, %v4745
      %4747 = vmatmul.bf16.gmra.mxu0 %v1887
      %v4748 = vpop.f32.mrf.mxu0
      %v4749 = vadd.f32 %v4700, %v4748
      %v4750 = vpop.f32.mrf.mxu0
      %v4751 = vadd.f32 %v4702, %v4750
      %4752 = vmatmul.bf16.gmra.mxu0 %v1919
      %v4753 = vpop.f32.mrf.mxu0
      %v4754 = vadd.f32 %v4705, %v4753
      %v4755 = vpop.f32.mrf.mxu0
      %v4756 = vadd.f32 %v4707, %v4755
      %4757 = vmatmul.bf16.gmra.mxu0 %v1951
      %v4758 = vpop.f32.mrf.mxu0
      %v4759 = vadd.f32 %v4710, %v4758
      %v4760 = vpop.f32.mrf.mxu0
      %v4761 = vadd.f32 %v4712, %v4760
      %4762 = vmatmul.bf16.gmra.mxu0 %v1983
      %v4763 = vpop.f32.mrf.mxu0
      %v4764 = vadd.f32 %v4715, %v4763
      %v4765 = vpop.f32.mrf.mxu0
      %v4766 = vadd.f32 %v4717, %v4765
      %4767 = vdwg.mxu0
      %4768 = vmatpush.bf16.msra.mxu0 %v3443
      %4769 = vmatpush.bf16.msra.mxu0 %v3442
      %4770 = vmatpush.bf16.msra.mxu0 %v3441
      %4771 = vmatpush.bf16.msra.mxu0 %v3440
      %4772 = vmatpush.bf16.msra.mxu0 %v3439
      %4773 = vmatpush.bf16.msra.mxu0 %v3438
      %4774 = vmatpush.bf16.msra.mxu0 %v3437
      %4775 = vmatpush.bf16.msra.mxu0 %v3436
      %4776 = vmatmul.bf16.gmra.mxu0 %v1760
      %v4777 = vpop.f32.mrf.mxu0
      %v4778 = vadd.f32 %v4729, %v4777
      %v4779 = vpop.f32.mrf.mxu0
      %v4780 = vadd.f32 %v4731, %v4779
      %4781 = vmatmul.bf16.gmra.mxu0 %v1792
      %v4782 = vpop.f32.mrf.mxu0
      %v4783 = vadd.f32 %v4734, %v4782
      %v4784 = vpop.f32.mrf.mxu0
      %v4785 = vadd.f32 %v4736, %v4784
      %4786 = vmatmul.bf16.gmra.mxu0 %v1824
      %v4787 = vpop.f32.mrf.mxu0
      %v4788 = vadd.f32 %v4739, %v4787
      %v4789 = vpop.f32.mrf.mxu0
      %v4790 = vadd.f32 %v4741, %v4789
      %4791 = vmatmul.bf16.gmra.mxu0 %v1856
      %v4792 = vpop.f32.mrf.mxu0
      %v4793 = vadd.f32 %v4744, %v4792
      %v4794 = vpop.f32.mrf.mxu0
      %v4795 = vadd.f32 %v4746, %v4794
      %4796 = vmatmul.bf16.gmra.mxu0 %v1888
      %v4797 = vpop.f32.mrf.mxu0
      %v4798 = vadd.f32 %v4749, %v4797
      %v4799 = vpop.f32.mrf.mxu0
      %v4800 = vadd.f32 %v4751, %v4799
      %4801 = vmatmul.bf16.gmra.mxu0 %v1920
      %v4802 = vpop.f32.mrf.mxu0
      %v4803 = vadd.f32 %v4754, %v4802
      %v4804 = vpop.f32.mrf.mxu0
      %v4805 = vadd.f32 %v4756, %v4804
      %4806 = vmatmul.bf16.gmra.mxu0 %v1952
      %v4807 = vpop.f32.mrf.mxu0
      %v4808 = vadd.f32 %v4759, %v4807
      %v4809 = vpop.f32.mrf.mxu0
      %v4810 = vadd.f32 %v4761, %v4809
      %4811 = vmatmul.bf16.gmra.mxu0 %v1984
      %v4812 = vpop.f32.mrf.mxu0
      %v4813 = vadd.f32 %v4764, %v4812
      %v4814 = vpop.f32.mrf.mxu0
      %v4815 = vadd.f32 %v4766, %v4814
      %4816 = vdwg.mxu0
      %4817 = vmatpush.bf16.msra.mxu0 %v3451
      %4818 = vmatpush.bf16.msra.mxu0 %v3450
      %4819 = vmatpush.bf16.msra.mxu0 %v3449
      %4820 = vmatpush.bf16.msra.mxu0 %v3448
      %4821 = vmatpush.bf16.msra.mxu0 %v3447
      %4822 = vmatpush.bf16.msra.mxu0 %v3446
      %4823 = vmatpush.bf16.msra.mxu0 %v3445
      %4824 = vmatpush.bf16.msra.mxu0 %v3444
      %4825 = vmatmul.bf16.gmra.mxu0 %v1761
      %v4826 = vpop.f32.mrf.mxu0
      %v4827 = vadd.f32 %v4778, %v4826
      %v4828 = vpop.f32.mrf.mxu0
      %v4829 = vadd.f32 %v4780, %v4828
      %4830 = vmatmul.bf16.gmra.mxu0 %v1793
      %v4831 = vpop.f32.mrf.mxu0
      %v4832 = vadd.f32 %v4783, %v4831
      %v4833 = vpop.f32.mrf.mxu0
      %v4834 = vadd.f32 %v4785, %v4833
      %4835 = vmatmul.bf16.gmra.mxu0 %v1825
      %v4836 = vpop.f32.mrf.mxu0
      %v4837 = vadd.f32 %v4788, %v4836
      %v4838 = vpop.f32.mrf.mxu0
      %v4839 = vadd.f32 %v4790, %v4838
      %4840 = vmatmul.bf16.gmra.mxu0 %v1857
      %v4841 = vpop.f32.mrf.mxu0
      %v4842 = vadd.f32 %v4793, %v4841
      %v4843 = vpop.f32.mrf.mxu0
      %v4844 = vadd.f32 %v4795, %v4843
      %4845 = vmatmul.bf16.gmra.mxu0 %v1889
      %v4846 = vpop.f32.mrf.mxu0
      %v4847 = vadd.f32 %v4798, %v4846
      %v4848 = vpop.f32.mrf.mxu0
      %v4849 = vadd.f32 %v4800, %v4848
      %4850 = vmatmul.bf16.gmra.mxu0 %v1921
      %v4851 = vpop.f32.mrf.mxu0
      %v4852 = vadd.f32 %v4803, %v4851
      %v4853 = vpop.f32.mrf.mxu0
      %v4854 = vadd.f32 %v4805, %v4853
      %4855 = vmatmul.bf16.gmra.mxu0 %v1953
      %v4856 = vpop.f32.mrf.mxu0
      %v4857 = vadd.f32 %v4808, %v4856
      %v4858 = vpop.f32.mrf.mxu0
      %v4859 = vadd.f32 %v4810, %v4858
      %4860 = vmatmul.bf16.gmra.mxu0 %v1985
      %v4861 = vpop.f32.mrf.mxu0
      %v4862 = vadd.f32 %v4813, %v4861
      %v4863 = vpop.f32.mrf.mxu0
      %v4864 = vadd.f32 %v4815, %v4863
      %4865 = vdwg.mxu0
      %4866 = vmatpush.bf16.msra.mxu0 %v3459
      %4867 = vmatpush.bf16.msra.mxu0 %v3458
      %4868 = vmatpush.bf16.msra.mxu0 %v3457
      %4869 = vmatpush.bf16.msra.mxu0 %v3456
      %4870 = vmatpush.bf16.msra.mxu0 %v3455
      %4871 = vmatpush.bf16.msra.mxu0 %v3454
      %4872 = vmatpush.bf16.msra.mxu0 %v3453
      %4873 = vmatpush.bf16.msra.mxu0 %v3452
      %4874 = vmatmul.bf16.gmra.mxu0 %v1762
      %v4875 = vpop.f32.mrf.mxu0
      %v4876 = vadd.f32 %v4827, %v4875
      %v4877 = vpop.f32.mrf.mxu0
      %v4878 = vadd.f32 %v4829, %v4877
      %4879 = vmatmul.bf16.gmra.mxu0 %v1794
      %v4880 = vpop.f32.mrf.mxu0
      %v4881 = vadd.f32 %v4832, %v4880
      %v4882 = vpop.f32.mrf.mxu0
      %v4883 = vadd.f32 %v4834, %v4882
      %4884 = vmatmul.bf16.gmra.mxu0 %v1826
      %v4885 = vpop.f32.mrf.mxu0
      %v4886 = vadd.f32 %v4837, %v4885
      %v4887 = vpop.f32.mrf.mxu0
      %v4888 = vadd.f32 %v4839, %v4887
      %4889 = vmatmul.bf16.gmra.mxu0 %v1858
      %v4890 = vpop.f32.mrf.mxu0
      %v4891 = vadd.f32 %v4842, %v4890
      %v4892 = vpop.f32.mrf.mxu0
      %v4893 = vadd.f32 %v4844, %v4892
      %4894 = vmatmul.bf16.gmra.mxu0 %v1890
      %v4895 = vpop.f32.mrf.mxu0
      %v4896 = vadd.f32 %v4847, %v4895
      %v4897 = vpop.f32.mrf.mxu0
      %v4898 = vadd.f32 %v4849, %v4897
      %4899 = vmatmul.bf16.gmra.mxu0 %v1922
      %v4900 = vpop.f32.mrf.mxu0
      %v4901 = vadd.f32 %v4852, %v4900
      %v4902 = vpop.f32.mrf.mxu0
      %v4903 = vadd.f32 %v4854, %v4902
      %4904 = vmatmul.bf16.gmra.mxu0 %v1954
      %v4905 = vpop.f32.mrf.mxu0
      %v4906 = vadd.f32 %v4857, %v4905
      %v4907 = vpop.f32.mrf.mxu0
      %v4908 = vadd.f32 %v4859, %v4907
      %4909 = vmatmul.bf16.gmra.mxu0 %v1986
      %v4910 = vpop.f32.mrf.mxu0
      %v4911 = vadd.f32 %v4862, %v4910
      %v4912 = vpop.f32.mrf.mxu0
      %v4913 = vadd.f32 %v4864, %v4912
      %4914 = vdwg.mxu0
      %4915 = vmatpush.bf16.msra.mxu0 %v3467
      %4916 = vmatpush.bf16.msra.mxu0 %v3466
      %4917 = vmatpush.bf16.msra.mxu0 %v3465
      %4918 = vmatpush.bf16.msra.mxu0 %v3464
      %4919 = vmatpush.bf16.msra.mxu0 %v3463
      %4920 = vmatpush.bf16.msra.mxu0 %v3462
      %4921 = vmatpush.bf16.msra.mxu0 %v3461
      %4922 = vmatpush.bf16.msra.mxu0 %v3460
      %4923 = vmatmul.bf16.gmra.mxu0 %v1763
      %v4924 = vpop.f32.mrf.mxu0
      %v4925 = vadd.f32 %v4876, %v4924
      %v4926 = vpop.f32.mrf.mxu0
      %v4927 = vadd.f32 %v4878, %v4926
      %4928 = vmatmul.bf16.gmra.mxu0 %v1795
      %v4929 = vpop.f32.mrf.mxu0
      %v4930 = vadd.f32 %v4881, %v4929
      %v4931 = vpop.f32.mrf.mxu0
      %v4932 = vadd.f32 %v4883, %v4931
      %4933 = vmatmul.bf16.gmra.mxu0 %v1827
      %v4934 = vpop.f32.mrf.mxu0
      %v4935 = vadd.f32 %v4886, %v4934
      %v4936 = vpop.f32.mrf.mxu0
      %v4937 = vadd.f32 %v4888, %v4936
      %4938 = vmatmul.bf16.gmra.mxu0 %v1859
      %v4939 = vpop.f32.mrf.mxu0
      %v4940 = vadd.f32 %v4891, %v4939
      %v4941 = vpop.f32.mrf.mxu0
      %v4942 = vadd.f32 %v4893, %v4941
      %4943 = vmatmul.bf16.gmra.mxu0 %v1891
      %v4944 = vpop.f32.mrf.mxu0
      %v4945 = vadd.f32 %v4896, %v4944
      %v4946 = vpop.f32.mrf.mxu0
      %v4947 = vadd.f32 %v4898, %v4946
      %4948 = vmatmul.bf16.gmra.mxu0 %v1923
      %v4949 = vpop.f32.mrf.mxu0
      %v4950 = vadd.f32 %v4901, %v4949
      %v4951 = vpop.f32.mrf.mxu0
      %v4952 = vadd.f32 %v4903, %v4951
      %4953 = vmatmul.bf16.gmra.mxu0 %v1955
      %v4954 = vpop.f32.mrf.mxu0
      %v4955 = vadd.f32 %v4906, %v4954
      %v4956 = vpop.f32.mrf.mxu0
      %v4957 = vadd.f32 %v4908, %v4956
      %4958 = vmatmul.bf16.gmra.mxu0 %v1987
      %v4959 = vpop.f32.mrf.mxu0
      %v4960 = vadd.f32 %v4911, %v4959
      %v4961 = vpop.f32.mrf.mxu0
      %v4962 = vadd.f32 %v4913, %v4961
      %4963 = vdwg.mxu0
      %4964 = vmatpush.bf16.msra.mxu0 %v3475
      %4965 = vmatpush.bf16.msra.mxu0 %v3474
      %4966 = vmatpush.bf16.msra.mxu0 %v3473
      %4967 = vmatpush.bf16.msra.mxu0 %v3472
      %4968 = vmatpush.bf16.msra.mxu0 %v3471
      %4969 = vmatpush.bf16.msra.mxu0 %v3470
      %4970 = vmatpush.bf16.msra.mxu0 %v3469
      %4971 = vmatpush.bf16.msra.mxu0 %v3468
      %4972 = vmatmul.bf16.gmra.mxu0 %v1764
      %v4973 = vpop.f32.mrf.mxu0
      %v4974 = vadd.f32 %v4925, %v4973
      %v4975 = vpop.f32.mrf.mxu0
      %v4976 = vadd.f32 %v4927, %v4975
      %4977 = vmatmul.bf16.gmra.mxu0 %v1796
      %v4978 = vpop.f32.mrf.mxu0
      %v4979 = vadd.f32 %v4930, %v4978
      %v4980 = vpop.f32.mrf.mxu0
      %v4981 = vadd.f32 %v4932, %v4980
      %4982 = vmatmul.bf16.gmra.mxu0 %v1828
      %v4983 = vpop.f32.mrf.mxu0
      %v4984 = vadd.f32 %v4935, %v4983
      %v4985 = vpop.f32.mrf.mxu0
      %v4986 = vadd.f32 %v4937, %v4985
      %4987 = vmatmul.bf16.gmra.mxu0 %v1860
      %v4988 = vpop.f32.mrf.mxu0
      %v4989 = vadd.f32 %v4940, %v4988
      %v4990 = vpop.f32.mrf.mxu0
      %v4991 = vadd.f32 %v4942, %v4990
      %4992 = vmatmul.bf16.gmra.mxu0 %v1892
      %v4993 = vpop.f32.mrf.mxu0
      %v4994 = vadd.f32 %v4945, %v4993
      %v4995 = vpop.f32.mrf.mxu0
      %v4996 = vadd.f32 %v4947, %v4995
      %4997 = vmatmul.bf16.gmra.mxu0 %v1924
      %v4998 = vpop.f32.mrf.mxu0
      %v4999 = vadd.f32 %v4950, %v4998
      %v5000 = vpop.f32.mrf.mxu0
      %v5001 = vadd.f32 %v4952, %v5000
      %5002 = vmatmul.bf16.gmra.mxu0 %v1956
      %v5003 = vpop.f32.mrf.mxu0
      %v5004 = vadd.f32 %v4955, %v5003
      %v5005 = vpop.f32.mrf.mxu0
      %v5006 = vadd.f32 %v4957, %v5005
      %5007 = vmatmul.bf16.gmra.mxu0 %v1988
      %v5008 = vpop.f32.mrf.mxu0
      %v5009 = vadd.f32 %v4960, %v5008
      %v5010 = vpop.f32.mrf.mxu0
      %v5011 = vadd.f32 %v4962, %v5010
      %5012 = vdwg.mxu0
      %5013 = vmatpush.bf16.msra.mxu0 %v3483
      %5014 = vmatpush.bf16.msra.mxu0 %v3482
      %5015 = vmatpush.bf16.msra.mxu0 %v3481
      %5016 = vmatpush.bf16.msra.mxu0 %v3480
      %5017 = vmatpush.bf16.msra.mxu0 %v3479
      %5018 = vmatpush.bf16.msra.mxu0 %v3478
      %5019 = vmatpush.bf16.msra.mxu0 %v3477
      %5020 = vmatpush.bf16.msra.mxu0 %v3476
      %5021 = vmatmul.bf16.gmra.mxu0 %v1765
      %v5022 = vpop.f32.mrf.mxu0
      %v5023 = vadd.f32 %v4974, %v5022
      %v5024 = vpop.f32.mrf.mxu0
      %v5025 = vadd.f32 %v4976, %v5024
      %5026 = vmatmul.bf16.gmra.mxu0 %v1797
      %v5027 = vpop.f32.mrf.mxu0
      %v5028 = vadd.f32 %v4979, %v5027
      %v5029 = vpop.f32.mrf.mxu0
      %v5030 = vadd.f32 %v4981, %v5029
      %5031 = vmatmul.bf16.gmra.mxu0 %v1829
      %v5032 = vpop.f32.mrf.mxu0
      %v5033 = vadd.f32 %v4984, %v5032
      %v5034 = vpop.f32.mrf.mxu0
      %v5035 = vadd.f32 %v4986, %v5034
      %5036 = vmatmul.bf16.gmra.mxu0 %v1861
      %v5037 = vpop.f32.mrf.mxu0
      %v5038 = vadd.f32 %v4989, %v5037
      %v5039 = vpop.f32.mrf.mxu0
      %v5040 = vadd.f32 %v4991, %v5039
      %5041 = vmatmul.bf16.gmra.mxu0 %v1893
      %v5042 = vpop.f32.mrf.mxu0
      %v5043 = vadd.f32 %v4994, %v5042
      %v5044 = vpop.f32.mrf.mxu0
      %v5045 = vadd.f32 %v4996, %v5044
      %5046 = vmatmul.bf16.gmra.mxu0 %v1925
      %v5047 = vpop.f32.mrf.mxu0
      %v5048 = vadd.f32 %v4999, %v5047
      %v5049 = vpop.f32.mrf.mxu0
      %v5050 = vadd.f32 %v5001, %v5049
      %5051 = vmatmul.bf16.gmra.mxu0 %v1957
      %v5052 = vpop.f32.mrf.mxu0
      %v5053 = vadd.f32 %v5004, %v5052
      %v5054 = vpop.f32.mrf.mxu0
      %v5055 = vadd.f32 %v5006, %v5054
      %5056 = vmatmul.bf16.gmra.mxu0 %v1989
      %v5057 = vpop.f32.mrf.mxu0
      %v5058 = vadd.f32 %v5009, %v5057
      %v5059 = vpop.f32.mrf.mxu0
      %v5060 = vadd.f32 %v5011, %v5059
      %5061 = vdwg.mxu0
      %5062 = vmatpush.bf16.msra.mxu0 %v3491
      %5063 = vmatpush.bf16.msra.mxu0 %v3490
      %5064 = vmatpush.bf16.msra.mxu0 %v3489
      %5065 = vmatpush.bf16.msra.mxu0 %v3488
      %5066 = vmatpush.bf16.msra.mxu0 %v3487
      %5067 = vmatpush.bf16.msra.mxu0 %v3486
      %5068 = vmatpush.bf16.msra.mxu0 %v3485
      %5069 = vmatpush.bf16.msra.mxu0 %v3484
      %5070 = vmatmul.bf16.gmra.mxu0 %v1766
      %v5071 = vpop.f32.mrf.mxu0
      %v5072 = vadd.f32 %v5023, %v5071
      %v5073 = vpop.f32.mrf.mxu0
      %v5074 = vadd.f32 %v5025, %v5073
      %5075 = vmatmul.bf16.gmra.mxu0 %v1798
      %v5076 = vpop.f32.mrf.mxu0
      %v5077 = vadd.f32 %v5028, %v5076
      %v5078 = vpop.f32.mrf.mxu0
      %v5079 = vadd.f32 %v5030, %v5078
      %5080 = vmatmul.bf16.gmra.mxu0 %v1830
      %v5081 = vpop.f32.mrf.mxu0
      %v5082 = vadd.f32 %v5033, %v5081
      %v5083 = vpop.f32.mrf.mxu0
      %v5084 = vadd.f32 %v5035, %v5083
      %5085 = vmatmul.bf16.gmra.mxu0 %v1862
      %v5086 = vpop.f32.mrf.mxu0
      %v5087 = vadd.f32 %v5038, %v5086
      %v5088 = vpop.f32.mrf.mxu0
      %v5089 = vadd.f32 %v5040, %v5088
      %5090 = vmatmul.bf16.gmra.mxu0 %v1894
      %v5091 = vpop.f32.mrf.mxu0
      %v5092 = vadd.f32 %v5043, %v5091
      %v5093 = vpop.f32.mrf.mxu0
      %v5094 = vadd.f32 %v5045, %v5093
      %5095 = vmatmul.bf16.gmra.mxu0 %v1926
      %v5096 = vpop.f32.mrf.mxu0
      %v5097 = vadd.f32 %v5048, %v5096
      %v5098 = vpop.f32.mrf.mxu0
      %v5099 = vadd.f32 %v5050, %v5098
      %5100 = vmatmul.bf16.gmra.mxu0 %v1958
      %v5101 = vpop.f32.mrf.mxu0
      %v5102 = vadd.f32 %v5053, %v5101
      %v5103 = vpop.f32.mrf.mxu0
      %v5104 = vadd.f32 %v5055, %v5103
      %5105 = vmatmul.bf16.gmra.mxu0 %v1990
      %v5106 = vpop.f32.mrf.mxu0
      %v5107 = vadd.f32 %v5058, %v5106
      %v5108 = vpop.f32.mrf.mxu0
      %v5109 = vadd.f32 %v5060, %v5108
      %5110 = vdwg.mxu0
      %5111 = vmatpush.bf16.msra.mxu0 %v3499
      %5112 = vmatpush.bf16.msra.mxu0 %v3498
      %5113 = vmatpush.bf16.msra.mxu0 %v3497
      %5114 = vmatpush.bf16.msra.mxu0 %v3496
      %5115 = vmatpush.bf16.msra.mxu0 %v3495
      %5116 = vmatpush.bf16.msra.mxu0 %v3494
      %5117 = vmatpush.bf16.msra.mxu0 %v3493
      %5118 = vmatpush.bf16.msra.mxu0 %v3492
      %5119 = vmatmul.bf16.gmra.mxu0 %v1767
      %v5120 = vpop.f32.mrf.mxu0
      %v5121 = vadd.f32 %v5072, %v5120
      %v5122 = vpop.f32.mrf.mxu0
      %v5123 = vadd.f32 %v5074, %v5122
      %5124 = vmatmul.bf16.gmra.mxu0 %v1799
      %v5125 = vpop.f32.mrf.mxu0
      %v5126 = vadd.f32 %v5077, %v5125
      %v5127 = vpop.f32.mrf.mxu0
      %v5128 = vadd.f32 %v5079, %v5127
      %5129 = vmatmul.bf16.gmra.mxu0 %v1831
      %v5130 = vpop.f32.mrf.mxu0
      %v5131 = vadd.f32 %v5082, %v5130
      %v5132 = vpop.f32.mrf.mxu0
      %v5133 = vadd.f32 %v5084, %v5132
      %5134 = vmatmul.bf16.gmra.mxu0 %v1863
      %v5135 = vpop.f32.mrf.mxu0
      %v5136 = vadd.f32 %v5087, %v5135
      %v5137 = vpop.f32.mrf.mxu0
      %v5138 = vadd.f32 %v5089, %v5137
      %5139 = vmatmul.bf16.gmra.mxu0 %v1895
      %v5140 = vpop.f32.mrf.mxu0
      %v5141 = vadd.f32 %v5092, %v5140
      %v5142 = vpop.f32.mrf.mxu0
      %v5143 = vadd.f32 %v5094, %v5142
      %5144 = vmatmul.bf16.gmra.mxu0 %v1927
      %v5145 = vpop.f32.mrf.mxu0
      %v5146 = vadd.f32 %v5097, %v5145
      %v5147 = vpop.f32.mrf.mxu0
      %v5148 = vadd.f32 %v5099, %v5147
      %5149 = vmatmul.bf16.gmra.mxu0 %v1959
      %v5150 = vpop.f32.mrf.mxu0
      %v5151 = vadd.f32 %v5102, %v5150
      %v5152 = vpop.f32.mrf.mxu0
      %v5153 = vadd.f32 %v5104, %v5152
      %5154 = vmatmul.bf16.gmra.mxu0 %v1991
      %v5155 = vpop.f32.mrf.mxu0
      %v5156 = vadd.f32 %v5107, %v5155
      %v5157 = vpop.f32.mrf.mxu0
      %v5158 = vadd.f32 %v5109, %v5157
      %5159 = vdwg.mxu0
      %5160 = vmatpush.bf16.msra.mxu0 %v3507
      %5161 = vmatpush.bf16.msra.mxu0 %v3506
      %5162 = vmatpush.bf16.msra.mxu0 %v3505
      %5163 = vmatpush.bf16.msra.mxu0 %v3504
      %5164 = vmatpush.bf16.msra.mxu0 %v3503
      %5165 = vmatpush.bf16.msra.mxu0 %v3502
      %5166 = vmatpush.bf16.msra.mxu0 %v3501
      %5167 = vmatpush.bf16.msra.mxu0 %v3500
      %5168 = vmatmul.bf16.gmra.mxu0 %v1768
      %v5169 = vpop.f32.mrf.mxu0
      %v5170 = vadd.f32 %v5121, %v5169
      %v5171 = vpop.f32.mrf.mxu0
      %v5172 = vadd.f32 %v5123, %v5171
      %5173 = vmatmul.bf16.gmra.mxu0 %v1800
      %v5174 = vpop.f32.mrf.mxu0
      %v5175 = vadd.f32 %v5126, %v5174
      %v5176 = vpop.f32.mrf.mxu0
      %v5177 = vadd.f32 %v5128, %v5176
      %5178 = vmatmul.bf16.gmra.mxu0 %v1832
      %v5179 = vpop.f32.mrf.mxu0
      %v5180 = vadd.f32 %v5131, %v5179
      %v5181 = vpop.f32.mrf.mxu0
      %v5182 = vadd.f32 %v5133, %v5181
      %5183 = vmatmul.bf16.gmra.mxu0 %v1864
      %v5184 = vpop.f32.mrf.mxu0
      %v5185 = vadd.f32 %v5136, %v5184
      %v5186 = vpop.f32.mrf.mxu0
      %v5187 = vadd.f32 %v5138, %v5186
      %5188 = vmatmul.bf16.gmra.mxu0 %v1896
      %v5189 = vpop.f32.mrf.mxu0
      %v5190 = vadd.f32 %v5141, %v5189
      %v5191 = vpop.f32.mrf.mxu0
      %v5192 = vadd.f32 %v5143, %v5191
      %5193 = vmatmul.bf16.gmra.mxu0 %v1928
      %v5194 = vpop.f32.mrf.mxu0
      %v5195 = vadd.f32 %v5146, %v5194
      %v5196 = vpop.f32.mrf.mxu0
      %v5197 = vadd.f32 %v5148, %v5196
      %5198 = vmatmul.bf16.gmra.mxu0 %v1960
      %v5199 = vpop.f32.mrf.mxu0
      %v5200 = vadd.f32 %v5151, %v5199
      %v5201 = vpop.f32.mrf.mxu0
      %v5202 = vadd.f32 %v5153, %v5201
      %5203 = vmatmul.bf16.gmra.mxu0 %v1992
      %v5204 = vpop.f32.mrf.mxu0
      %v5205 = vadd.f32 %v5156, %v5204
      %v5206 = vpop.f32.mrf.mxu0
      %v5207 = vadd.f32 %v5158, %v5206
      %5208 = vdwg.mxu0
      %5209 = vmatpush.bf16.msra.mxu0 %v3515
      %5210 = vmatpush.bf16.msra.mxu0 %v3514
      %5211 = vmatpush.bf16.msra.mxu0 %v3513
      %5212 = vmatpush.bf16.msra.mxu0 %v3512
      %5213 = vmatpush.bf16.msra.mxu0 %v3511
      %5214 = vmatpush.bf16.msra.mxu0 %v3510
      %5215 = vmatpush.bf16.msra.mxu0 %v3509
      %5216 = vmatpush.bf16.msra.mxu0 %v3508
      %5217 = vmatmul.bf16.gmra.mxu0 %v1769
      %v5218 = vpop.f32.mrf.mxu0
      %v5219 = vadd.f32 %v5170, %v5218
      %v5220 = vpop.f32.mrf.mxu0
      %v5221 = vadd.f32 %v5172, %v5220
      %5222 = vmatmul.bf16.gmra.mxu0 %v1801
      %v5223 = vpop.f32.mrf.mxu0
      %v5224 = vadd.f32 %v5175, %v5223
      %v5225 = vpop.f32.mrf.mxu0
      %v5226 = vadd.f32 %v5177, %v5225
      %5227 = vmatmul.bf16.gmra.mxu0 %v1833
      %v5228 = vpop.f32.mrf.mxu0
      %v5229 = vadd.f32 %v5180, %v5228
      %v5230 = vpop.f32.mrf.mxu0
      %v5231 = vadd.f32 %v5182, %v5230
      %5232 = vmatmul.bf16.gmra.mxu0 %v1865
      %v5233 = vpop.f32.mrf.mxu0
      %v5234 = vadd.f32 %v5185, %v5233
      %v5235 = vpop.f32.mrf.mxu0
      %v5236 = vadd.f32 %v5187, %v5235
      %5237 = vmatmul.bf16.gmra.mxu0 %v1897
      %v5238 = vpop.f32.mrf.mxu0
      %v5239 = vadd.f32 %v5190, %v5238
      %v5240 = vpop.f32.mrf.mxu0
      %v5241 = vadd.f32 %v5192, %v5240
      %5242 = vmatmul.bf16.gmra.mxu0 %v1929
      %v5243 = vpop.f32.mrf.mxu0
      %v5244 = vadd.f32 %v5195, %v5243
      %v5245 = vpop.f32.mrf.mxu0
      %v5246 = vadd.f32 %v5197, %v5245
      %5247 = vmatmul.bf16.gmra.mxu0 %v1961
      %v5248 = vpop.f32.mrf.mxu0
      %v5249 = vadd.f32 %v5200, %v5248
      %v5250 = vpop.f32.mrf.mxu0
      %v5251 = vadd.f32 %v5202, %v5250
      %5252 = vmatmul.bf16.gmra.mxu0 %v1993
      %v5253 = vpop.f32.mrf.mxu0
      %v5254 = vadd.f32 %v5205, %v5253
      %v5255 = vpop.f32.mrf.mxu0
      %v5256 = vadd.f32 %v5207, %v5255
      %5257 = vdwg.mxu0
      %5258 = vmatpush.bf16.msra.mxu0 %v3523
      %5259 = vmatpush.bf16.msra.mxu0 %v3522
      %5260 = vmatpush.bf16.msra.mxu0 %v3521
      %5261 = vmatpush.bf16.msra.mxu0 %v3520
      %5262 = vmatpush.bf16.msra.mxu0 %v3519
      %5263 = vmatpush.bf16.msra.mxu0 %v3518
      %5264 = vmatpush.bf16.msra.mxu0 %v3517
      %5265 = vmatpush.bf16.msra.mxu0 %v3516
      %5266 = vmatmul.bf16.gmra.mxu0 %v1770
      %v5267 = vpop.f32.mrf.mxu0
      %v5268 = vadd.f32 %v5219, %v5267
      %v5269 = vpop.f32.mrf.mxu0
      %v5270 = vadd.f32 %v5221, %v5269
      %5271 = vmatmul.bf16.gmra.mxu0 %v1802
      %v5272 = vpop.f32.mrf.mxu0
      %v5273 = vadd.f32 %v5224, %v5272
      %v5274 = vpop.f32.mrf.mxu0
      %v5275 = vadd.f32 %v5226, %v5274
      %5276 = vmatmul.bf16.gmra.mxu0 %v1834
      %v5277 = vpop.f32.mrf.mxu0
      %v5278 = vadd.f32 %v5229, %v5277
      %v5279 = vpop.f32.mrf.mxu0
      %v5280 = vadd.f32 %v5231, %v5279
      %5281 = vmatmul.bf16.gmra.mxu0 %v1866
      %v5282 = vpop.f32.mrf.mxu0
      %v5283 = vadd.f32 %v5234, %v5282
      %v5284 = vpop.f32.mrf.mxu0
      %v5285 = vadd.f32 %v5236, %v5284
      %5286 = vmatmul.bf16.gmra.mxu0 %v1898
      %v5287 = vpop.f32.mrf.mxu0
      %v5288 = vadd.f32 %v5239, %v5287
      %v5289 = vpop.f32.mrf.mxu0
      %v5290 = vadd.f32 %v5241, %v5289
      %5291 = vmatmul.bf16.gmra.mxu0 %v1930
      %v5292 = vpop.f32.mrf.mxu0
      %v5293 = vadd.f32 %v5244, %v5292
      %v5294 = vpop.f32.mrf.mxu0
      %v5295 = vadd.f32 %v5246, %v5294
      %5296 = vmatmul.bf16.gmra.mxu0 %v1962
      %v5297 = vpop.f32.mrf.mxu0
      %v5298 = vadd.f32 %v5249, %v5297
      %v5299 = vpop.f32.mrf.mxu0
      %v5300 = vadd.f32 %v5251, %v5299
      %5301 = vmatmul.bf16.gmra.mxu0 %v1994
      %v5302 = vpop.f32.mrf.mxu0
      %v5303 = vadd.f32 %v5254, %v5302
      %v5304 = vpop.f32.mrf.mxu0
      %v5305 = vadd.f32 %v5256, %v5304
      %5306 = vdwg.mxu0
      %5307 = vmatpush.bf16.msra.mxu0 %v3531
      %5308 = vmatpush.bf16.msra.mxu0 %v3530
      %5309 = vmatpush.bf16.msra.mxu0 %v3529
      %5310 = vmatpush.bf16.msra.mxu0 %v3528
      %5311 = vmatpush.bf16.msra.mxu0 %v3527
      %5312 = vmatpush.bf16.msra.mxu0 %v3526
      %5313 = vmatpush.bf16.msra.mxu0 %v3525
      %5314 = vmatpush.bf16.msra.mxu0 %v3524
      %5315 = vmatmul.bf16.gmra.mxu0 %v1771
      %v5316 = vpop.f32.mrf.mxu0
      %v5317 = vadd.f32 %v5268, %v5316
      %v5318 = vpop.f32.mrf.mxu0
      %v5319 = vadd.f32 %v5270, %v5318
      %5320 = vmatmul.bf16.gmra.mxu0 %v1803
      %v5321 = vpop.f32.mrf.mxu0
      %v5322 = vadd.f32 %v5273, %v5321
      %v5323 = vpop.f32.mrf.mxu0
      %v5324 = vadd.f32 %v5275, %v5323
      %5325 = vmatmul.bf16.gmra.mxu0 %v1835
      %v5326 = vpop.f32.mrf.mxu0
      %v5327 = vadd.f32 %v5278, %v5326
      %v5328 = vpop.f32.mrf.mxu0
      %v5329 = vadd.f32 %v5280, %v5328
      %5330 = vmatmul.bf16.gmra.mxu0 %v1867
      %v5331 = vpop.f32.mrf.mxu0
      %v5332 = vadd.f32 %v5283, %v5331
      %v5333 = vpop.f32.mrf.mxu0
      %v5334 = vadd.f32 %v5285, %v5333
      %5335 = vmatmul.bf16.gmra.mxu0 %v1899
      %v5336 = vpop.f32.mrf.mxu0
      %v5337 = vadd.f32 %v5288, %v5336
      %v5338 = vpop.f32.mrf.mxu0
      %v5339 = vadd.f32 %v5290, %v5338
      %5340 = vmatmul.bf16.gmra.mxu0 %v1931
      %v5341 = vpop.f32.mrf.mxu0
      %v5342 = vadd.f32 %v5293, %v5341
      %v5343 = vpop.f32.mrf.mxu0
      %v5344 = vadd.f32 %v5295, %v5343
      %5345 = vmatmul.bf16.gmra.mxu0 %v1963
      %v5346 = vpop.f32.mrf.mxu0
      %v5347 = vadd.f32 %v5298, %v5346
      %v5348 = vpop.f32.mrf.mxu0
      %v5349 = vadd.f32 %v5300, %v5348
      %5350 = vmatmul.bf16.gmra.mxu0 %v1995
      %v5351 = vpop.f32.mrf.mxu0
      %v5352 = vadd.f32 %v5303, %v5351
      %v5353 = vpop.f32.mrf.mxu0
      %v5354 = vadd.f32 %v5305, %v5353
      %5355 = vdwg.mxu0
      %v5356 = vld [vmem:[%s2] sm:$0x1]
      %v5358 = vperm.slane %v5356, 0
      %v5360 = vmul.f32 %v5317, %v5358
      %v5361 = vmul.f32 %v5319, %v5358
      %v5362 = vmul.f32 %v5322, %v5358
      %v5363 = vmul.f32 %v5324, %v5358
      %v5364 = vmul.f32 %v5327, %v5358
      %v5365 = vmul.f32 %v5329, %v5358
      %v5366 = vmul.f32 %v5332, %v5358
      %v5367 = vmul.f32 %v5334, %v5358
      %v5368 = vmul.f32 %v5337, %v5358
      %v5369 = vmul.f32 %v5339, %v5358
      %v5370 = vmul.f32 %v5342, %v5358
      %v5371 = vmul.f32 %v5344, %v5358
      %v5372 = vmul.f32 %v5347, %v5358
      %v5373 = vmul.f32 %v5349, %v5358
      %v5374 = vmul.f32 %v5352, %v5358
      %v5375 = vmul.f32 %v5354, %v5358
      %v5376 = vld [vmem:[%s3] sm:$0x1]
      %v5378 = vperm.slane %v5376, 0
      %v5380 = vadd.f32 %v5360, %v5378
      %v5381 = vadd.f32 %v5361, %v5378
      %v5382 = vadd.f32 %v5362, %v5378
      %v5383 = vadd.f32 %v5363, %v5378
      %v5384 = vadd.f32 %v5364, %v5378
      %v5385 = vadd.f32 %v5365, %v5378
      %v5386 = vadd.f32 %v5366, %v5378
      %v5387 = vadd.f32 %v5367, %v5378
      %v5388 = vadd.f32 %v5368, %v5378
      %v5389 = vadd.f32 %v5369, %v5378
      %v5390 = vadd.f32 %v5370, %v5378
      %v5391 = vadd.f32 %v5371, %v5378
      %v5392 = vadd.f32 %v5372, %v5378
      %v5393 = vadd.f32 %v5373, %v5378
      %v5394 = vadd.f32 %v5374, %v5378
      %v5395 = vadd.f32 %v5375, %v5378
      %vm5396 = vcmp.gt.f32.partialorder %v5380, 0.0
      %vm5397 = vcmp.gt.f32.partialorder %v5381, 0.0
      %vm5398 = vcmp.gt.f32.partialorder %v5382, 0.0
      %vm5399 = vcmp.gt.f32.partialorder %v5383, 0.0
      %vm5400 = vcmp.gt.f32.partialorder %v5384, 0.0
      %vm5401 = vcmp.gt.f32.partialorder %v5385, 0.0
      %vm5402 = vcmp.gt.f32.partialorder %v5386, 0.0
      %vm5403 = vcmp.gt.f32.partialorder %v5387, 0.0
      %vm5404 = vcmp.gt.f32.partialorder %v5388, 0.0
      %vm5405 = vcmp.gt.f32.partialorder %v5389, 0.0
      %vm5406 = vcmp.gt.f32.partialorder %v5390, 0.0
      %vm5407 = vcmp.gt.f32.partialorder %v5391, 0.0
      %vm5408 = vcmp.gt.f32.partialorder %v5392, 0.0
      %vm5409 = vcmp.gt.f32.partialorder %v5393, 0.0
      %vm5410 = vcmp.gt.f32.partialorder %v5394, 0.0
      %vm5411 = vcmp.gt.f32.partialorder %v5395, 0.0
      %v5412 = vmin.f32 %v5380, 0.0
      %v5413 = vmin.f32 %v5381, 0.0
      %v5414 = vmin.f32 %v5382, 0.0
      %v5415 = vmin.f32 %v5383, 0.0
      %v5416 = vmin.f32 %v5384, 0.0
      %v5417 = vmin.f32 %v5385, 0.0
      %v5418 = vmin.f32 %v5386, 0.0
      %v5419 = vmin.f32 %v5387, 0.0
      %v5420 = vmin.f32 %v5388, 0.0
      %v5421 = vmin.f32 %v5389, 0.0
      %v5422 = vmin.f32 %v5390, 0.0
      %v5423 = vmin.f32 %v5391, 0.0
      %v5424 = vmin.f32 %v5392, 0.0
      %v5425 = vmin.f32 %v5393, 0.0
      %v5426 = vmin.f32 %v5394, 0.0
      %v5427 = vmin.f32 %v5395, 0.0
      %v5428 = vmul.f32 %v5412, 1.442695
      %v5429 = vpow.pop %v5428
      %v5430 = vmul.f32 %v5413, 1.442695
      %v5431 = vpow.pop %v5430
      %v5432 = vmul.f32 %v5414, 1.442695
      %v5433 = vpow.pop %v5432
      %v5434 = vmul.f32 %v5415, 1.442695
      %v5435 = vpow.pop %v5434
      %v5436 = vmul.f32 %v5416, 1.442695
      %v5437 = vpow.pop %v5436
      %v5438 = vmul.f32 %v5417, 1.442695
      %v5439 = vpow.pop %v5438
      %v5440 = vmul.f32 %v5418, 1.442695
      %v5441 = vpow.pop %v5440
      %v5442 = vmul.f32 %v5419, 1.442695
      %v5443 = vpow.pop %v5442
      %v5444 = vmul.f32 %v5420, 1.442695
      %v5445 = vpow.pop %v5444
      %v5446 = vmul.f32 %v5421, 1.442695
      %v5447 = vpow.pop %v5446
      %v5448 = vmul.f32 %v5422, 1.442695
      %v5449 = vpow.pop %v5448
      %v5450 = vmul.f32 %v5423, 1.442695
      %v5451 = vpow.pop %v5450
      %v5452 = vmul.f32 %v5424, 1.442695
      %v5453 = vpow.pop %v5452
      %v5454 = vmul.f32 %v5425, 1.442695
      %v5455 = vpow.pop %v5454
      %v5456 = vmul.f32 %v5426, 1.442695
      %v5457 = vpow.pop %v5456
      %v5458 = vmul.f32 %v5427, 1.442695
      %v5459 = vpow.pop %v5458
      %v5460 = vsub.f32 %v5429, 1.0
      %v5461 = vsub.f32 %v5431, 1.0
      %v5462 = vsub.f32 %v5433, 1.0
      %v5463 = vsub.f32 %v5435, 1.0
      %v5464 = vsub.f32 %v5437, 1.0
      %v5465 = vsub.f32 %v5439, 1.0
      %v5466 = vsub.f32 %v5441, 1.0
      %v5467 = vsub.f32 %v5443, 1.0
      %v5468 = vsub.f32 %v5445, 1.0
      %v5469 = vsub.f32 %v5447, 1.0
      %v5470 = vsub.f32 %v5449, 1.0
      %v5471 = vsub.f32 %v5451, 1.0
      %v5472 = vsub.f32 %v5453, 1.0
      %v5473 = vsub.f32 %v5455, 1.0
      %v5474 = vsub.f32 %v5457, 1.0
      %v5475 = vsub.f32 %v5459, 1.0
      %v5476 = vsel %vm5396, %v5380, %v5460
      %v5477 = vsel %vm5397, %v5381, %v5461
      %v5478 = vsel %vm5398, %v5382, %v5462
      %v5479 = vsel %vm5399, %v5383, %v5463
      %v5480 = vsel %vm5400, %v5384, %v5464
      %v5481 = vsel %vm5401, %v5385, %v5465
      %v5482 = vsel %vm5402, %v5386, %v5466
      %v5483 = vsel %vm5403, %v5387, %v5467
      %v5484 = vsel %vm5404, %v5388, %v5468
      %v5485 = vsel %vm5405, %v5389, %v5469
      %v5486 = vsel %vm5406, %v5390, %v5470
      %v5487 = vsel %vm5407, %v5391, %v5471
      %v5488 = vsel %vm5408, %v5392, %v5472
      %v5489 = vsel %vm5409, %v5393, %v5473
      %v5490 = vsel %vm5410, %v5394, %v5474
      %v5491 = vsel %vm5411, %v5395, %v5475
      %v5492 = vlaneseq
      %v5493 = vshrl.u32 %v5492, 7
      %v5494 = vadd.s32 %v5493, 8
      %v5495 = vadd.s32 %v5493, 16
      %v5496 = vadd.s32 %v5493, 24
      %v5497 = vlaneseq
      %v5498 = vand.u32 %v5497, 127
      %v5499 = vmul.u32 %v5493, 4
      %v5500 = vmul.u32 %v5494, 4
      %v5501 = vmul.u32 %v5495, 4
      %v5502 = vmul.u32 %v5496, 4
      %vm5503 = vcmp.ge.s32.totalorder %v5498, %v5499
      %vm5504 = vcmp.ge.s32.totalorder %v5498, %v5500
      %vm5505 = vcmp.ge.s32.totalorder %v5498, %v5501
      %vm5506 = vcmp.ge.s32.totalorder %v5498, %v5502
      %v5507 = vadd.s32 %v5493, 1
      %v5508 = vadd.s32 %v5494, 1
      %v5509 = vadd.s32 %v5495, 1
      %v5510 = vadd.s32 %v5496, 1
      %v5511 = vmul.u32 %v5507, 4
      %v5512 = vmul.u32 %v5508, 4
      %v5513 = vmul.u32 %v5509, 4
      %v5514 = vmul.u32 %v5510, 4
      %vm5515 = vcmp.lt.s32.totalorder %v5498, %v5511
      %vm5516 = vcmp.lt.s32.totalorder %v5498, %v5512
      %vm5517 = vcmp.lt.s32.totalorder %v5498, %v5513
      %vm5518 = vcmp.lt.s32.totalorder %v5498, %v5514
      %vm5519 = vmand %vm5503, %vm5515
      %vm5520 = vmand %vm5504, %vm5516
      %vm5521 = vmand %vm5505, %vm5517
      %vm5522 = vmand %vm5506, %vm5518
      %v5523 = vsel %vm5519, 0.25, 0.0
      %v5524 = vsel %vm5520, 0.25, 0.0
      %v5525 = vsel %vm5521, 0.25, 0.0
      %v5526 = vsel %vm5522, 0.25, 0.0
      %5527 = vmatpush.msra.mxu0 %v5491
      %5528 = vmatpush.msra.mxu0 %v5490
      %5529 = vmatpush.msra.mxu0 %v5489
      %5530 = vmatpush.msra.mxu0 %v5488
      %5531 = vmatpush.msra.mxu0 %v5487
      %5532 = vmatpush.msra.mxu0 %v5486
      %5533 = vmatpush.msra.mxu0 %v5485
      %5534 = vmatpush.msra.mxu0 %v5484
      %5535 = vmatpush.msra.mxu0 %v5483
      %5536 = vmatpush.msra.mxu0 %v5482
      %5537 = vmatpush.msra.mxu0 %v5481
      %5538 = vmatpush.msra.mxu0 %v5480
      %5539 = vmatpush.msra.mxu0 %v5479
      %5540 = vmatpush.msra.mxu0 %v5478
      %5541 = vmatpush.msra.mxu0 %v5477
      %5542 = vmatpush.msra.mxu0 %v5476
      %5543 = vmatmul.f32.gmra.mxu0 %v5523
      %v5544 = vpop.f32.mrf.mxu0
      %v5545 = vadd.f32 0.0, %v5544
      %5546 = vmatmul.f32.gmra.mxu0 %v5524
      %v5547 = vpop.f32.mrf.mxu0
      %v5548 = vadd.f32 0.0, %v5547
      %5549 = vmatmul.f32.gmra.mxu0 %v5525
      %v5550 = vpop.f32.mrf.mxu0
      %v5551 = vadd.f32 0.0, %v5550
      %5552 = vmatmul.f32.gmra.mxu0 %v5526
      %v5553 = vpop.f32.mrf.mxu0
      %v5554 = vadd.f32 0.0, %v5553
      %5555 = vdwg.mxu0
      %vm5556 = vcmask 130048
      %5557 = vst.msk [vmem:[%s202] sm:$0xff] %vm5556, %v5545
      %5558 = vst.msk [vmem:[%s202 + $0x8] sm:$0xff] %vm5556, %v5548
      %5559 = vst.msk [vmem:[%s202 + $0x10] sm:$0xff] %vm5556, %v5551
      %5560 = vst.msk [vmem:[%s202 + $0x18] sm:$0xff] %vm5556, %v5554
      %s5561 = smul.u32 4, %s15
      %p5562 = scmp.lt.s32.totalorder %s5561, 7
      %s5563 = scalar_select %p5562, %s5561, 7
      %s5564 = smul.addr %s5563, 8
      %s5565 = scalar_lea.vmem %s4, %s5564
      // Predicated region
      $region37: #{p5_forward.2} parent=35 // pred_check
        %p5566 = pneg %p122
      $region38: #{p5_forward.2} parent=35 // pred_check_branch
        %5568 = sbr.rel (%p5566) target = $region40
      $region39: #{p5_forward.2} parent=35 // pred_region
        %s5569 = smul.u32 4, %s15
      $region40: #{p5_forward.2} parent=35 // pred_fallthru
        _
    $region36: #{p5_forward.2} parent=5 // pred_fallthru
      _
    %p5570 = scmp.le.s32.totalorder 2, %s10
    // Predicated region
    $region41: #{p5_forward.2} parent=5 // pred_check
      %p5571 = pneg %p5570
    $region42: #{p5_forward.2} parent=5 // pred_check_branch
      %5573 = sbr.rel (%p5571) target = $region44
    $region43: #{p5_forward.2} parent=5 // pred_region
      %s5574 = ssub.s32 %s10, 2
      // Predicated region
      $region45: #{p5_forward.2} parent=43 // pred_check
        %p5575 = pneg %p128
      $region46: #{p5_forward.2} parent=43 // pred_check_branch
        %5577 = sbr.rel (%p5575) target = $region48
      $region47: #{p5_forward.2} parent=43 // pred_region
        %s5578 = smul.u32 4, %s16
        %p5579 = scmp.lt.s32.totalorder %s5578, 7
        %s5580 = scalar_select %p5579, %s5578, 7
        %s5581 = smul.addr %s5580, 8
        %s5582 = scalar_lea.vmem %s4, %s5581
      $region48: #{p5_forward.2} parent=43 // pred_fallthru
        _
    $region44: #{p5_forward.2} parent=5 // pred_fallthru
      _
  $region6: #{p5_forward.2} parent=0 // loop_footer
    %s14 = sadd.s32 1, %s10
  $region7: #{p5_forward.2} parent=0 // loop_footer_branch
    %9 = sbr.rel target = $region3
  $region8: #{p5_forward.2} parent=0 // loop_exit
    _

// kernel: p5_forward.3
$region0: #{p5_forward.3}
  #allocation0 [shape = 'u32[]', space=smem, size = 0x4, offset = 0x4, fixed_abs, tag = 'smem constant byte address 0x4 - core index']
  #allocation1 [shape = 'u32[72,128]{1,0:T(1,128)}', space=vmem, size = 0x9000, scoped, tag = 'internal scratch']
  %s0 = inlined_call_operand.vmem [shape: bf16[64,256], index: 0, kind: input, shape index: {}]
  %s1 = inlined_call_operand.vmem [shape: bf16[256,16], index: 1, kind: input, shape index: {}]
  %s2 = inlined_call_operand.vmem [shape: f32[1,16], index: 2, kind: input, shape index: {}]
  %s3 = inlined_call_operand.vmem [shape: f32[1,16], index: 3, kind: input, shape index: {}]
  %s4 = inlined_call_operand.vmem [shape: f32[8,16], index: 4, kind: output, shape index: {}]
  %s5 = sld [smem:[#allocation0]]
  $region26: #{p5_forward.3} parent=0
    _
  %s7 = ssub.s32 1, %s5
  %s8 = scalar_select 0, %s7, %s5
  // Predicated region
  $region2: #{p5_forward.3} parent=0 // pred_check
    _
  $region3: #{p5_forward.3} parent=0 // pred_check_branch
    %10 = sbr.rel (0) target = $region5
  $region4: #{p5_forward.3} parent=0 // pred_region
    _
  $region5: #{p5_forward.3} parent=0 // pred_fallthru
    _
  // Predicated region
  $region6: #{p5_forward.3} parent=0 // pred_check
    _
  $region7: #{p5_forward.3} parent=0 // pred_check_branch
    %12 = sbr.rel (0) target = $region9
  $region8: #{p5_forward.3} parent=0 // pred_region
    _
  $region9: #{p5_forward.3} parent=0 // pred_fallthru
    _
  // Predicated region
  $region10: #{p5_forward.3} parent=0 // pred_check
    _
  $region11: #{p5_forward.3} parent=0 // pred_check_branch
    %14 = sbr.rel (0) target = $region13
  $region12: #{p5_forward.3} parent=0 // pred_region
    _
  $region13: #{p5_forward.3} parent=0 // pred_fallthru
    _
  // Predicated region
  $region14: #{p5_forward.3} parent=0 // pred_check
    _
  $region15: #{p5_forward.3} parent=0 // pred_check_branch
    %16 = sbr.rel (0) target = $region17
  $region16: #{p5_forward.3} parent=0 // pred_region
    _
  $region17: #{p5_forward.3} parent=0 // pred_fallthru
    _
  %v17 = vld [vmem:[%s0] sm:$0xff]
  %v18 = vld [vmem:[%s0 + $0x8] sm:$0xff]
  %v19 = vld [vmem:[%s0 + $0x10] sm:$0xff]
  %v20 = vld [vmem:[%s0 + $0x18] sm:$0xff]
  %v21 = vld [vmem:[%s0 + $0x20] sm:$0xff]
  %v22 = vld [vmem:[%s0 + $0x28] sm:$0xff]
  %v23 = vld [vmem:[%s0 + $0x30] sm:$0xff]
  %v24 = vld [vmem:[%s0 + $0x38] sm:$0xff]
  %v25 = vld [vmem:[%s1] sm:$0xf]
  %v26 = vld [vmem:[%s1 + $0x4] sm:$0xf]
  %v27 = vld [vmem:[%s1 + $0x8] sm:$0xf]
  %v28 = vld [vmem:[%s1 + $0xc] sm:$0xf]
  %v29 = vld [vmem:[%s1 + $0x10] sm:$0xf]
  %v30 = vld [vmem:[%s1 + $0x14] sm:$0xf]
  %v31 = vld [vmem:[%s1 + $0x18] sm:$0xf]
  %v32 = vld [vmem:[%s1 + $0x1c] sm:$0xf]
  %v33 = vld [vmem:[%s1 + $0x20] sm:$0xf]
  %v34 = vld [vmem:[%s1 + $0x24] sm:$0xf]
  %v35 = vld [vmem:[%s1 + $0x28] sm:$0xf]
  %v36 = vld [vmem:[%s1 + $0x2c] sm:$0xf]
  %v37 = vld [vmem:[%s1 + $0x30] sm:$0xf]
  %v38 = vld [vmem:[%s1 + $0x34] sm:$0xf]
  %v39 = vld [vmem:[%s1 + $0x38] sm:$0xf]
  %v40 = vld [vmem:[%s1 + $0x3c] sm:$0xf]
  %v41 = vld [vmem:[%s1 + $0x40] sm:$0xf]
  %v42 = vld [vmem:[%s1 + $0x44] sm:$0xf]
  %v43 = vld [vmem:[%s1 + $0x48] sm:$0xf]
  %v44 = vld [vmem:[%s1 + $0x4c] sm:$0xf]
  %v45 = vld [vmem:[%s1 + $0x50] sm:$0xf]
  %v46 = vld [vmem:[%s1 + $0x54] sm:$0xf]
  %v47 = vld [vmem:[%s1 + $0x58] sm:$0xf]
  %v48 = vld [vmem:[%s1 + $0x5c] sm:$0xf]
  %v49 = vld [vmem:[%s1 + $0x60] sm:$0xf]
  %v50 = vld [vmem:[%s1 + $0x64] sm:$0xf]
  %v51 = vld [vmem:[%s1 + $0x68] sm:$0xf]
  %v52 = vld [vmem:[%s1 + $0x6c] sm:$0xf]
  %v53 = vld [vmem:[%s1 + $0x70] sm:$0xf]
  %v54 = vld [vmem:[%s1 + $0x74] sm:$0xf]
  %v55 = vld [vmem:[%s1 + $0x78] sm:$0xf]
  %v56 = vld [vmem:[%s1 + $0x7c] sm:$0xf]
  %v65 = vunpack.c.l.b16 %v17
  %v66 = vunpack.c.h.b16 %v17
  %v67 = vunpack.c.l.b16 %v18
  %v68 = vunpack.c.h.b16 %v18
  %v69 = vunpack.c.l.b16 %v19
  %v70 = vunpack.c.h.b16 %v19
  %v71 = vunpack.c.l.b16 %v20
  %v72 = vunpack.c.h.b16 %v20
  %v73 = vunpack.c.l.b16 %v21
  %v74 = vunpack.c.h.b16 %v21
  %v75 = vunpack.c.l.b16 %v22
  %v76 = vunpack.c.h.b16 %v22
  %v77 = vunpack.c.l.b16 %v23
  %v78 = vunpack.c.h.b16 %v23
  %v79 = vunpack.c.l.b16 %v24
  %v80 = vunpack.c.h.b16 %v24
  %v81 = vpack.c.b16 %v67, %v65
  %v82 = vpack.c.b16 %v68, %v66
  %v83 = vpack.c.b16 %v71, %v69
  %v84 = vpack.c.b16 %v72, %v70
  %v85 = vpack.c.b16 %v75, %v73
  %v86 = vpack.c.b16 %v76, %v74
  %v87 = vpack.c.b16 %v79, %v77
  %v88 = vpack.c.b16 %v80, %v78
  %v129 = vunpack.c.l.b16 %v25
  %v130 = vunpack.c.l.b16 %v26
  %v131 = vunpack.c.l.b16 %v27
  %v132 = vunpack.c.l.b16 %v28
  %v133 = vunpack.c.l.b16 %v29
  %v134 = vunpack.c.l.b16 %v30
  %v135 = vunpack.c.l.b16 %v31
  %v136 = vunpack.c.l.b16 %v32
  %v137 = vunpack.c.l.b16 %v33
  %v138 = vunpack.c.l.b16 %v34
  %v139 = vunpack.c.l.b16 %v35
  %v140 = vunpack.c.l.b16 %v36
  %v141 = vunpack.c.l.b16 %v37
  %v142 = vunpack.c.l.b16 %v38
  %v143 = vunpack.c.l.b16 %v39
  %v144 = vunpack.c.l.b16 %v40
  %v145 = vunpack.c.l.b16 %v41
  %v146 = vunpack.c.l.b16 %v42
  %v147 = vunpack.c.l.b16 %v43
  %v148 = vunpack.c.l.b16 %v44
  %v149 = vunpack.c.l.b16 %v45
  %v150 = vunpack.c.l.b16 %v46
  %v151 = vunpack.c.l.b16 %v47
  %v152 = vunpack.c.l.b16 %v48
  %v153 = vunpack.c.l.b16 %v49
  %v154 = vunpack.c.l.b16 %v50
  %v155 = vunpack.c.l.b16 %v51
  %v156 = vunpack.c.l.b16 %v52
  %v157 = vunpack.c.l.b16 %v53
  %v158 = vunpack.c.l.b16 %v54
  %v159 = vunpack.c.l.b16 %v55
  %v160 = vunpack.c.l.b16 %v56
  %v161 = vpack.c.b16 %v130, %v129
  %v162 = vpack.c.b16 %v132, %v131
  %v163 = vpack.c.b16 %v134, %v133
  %v164 = vpack.c.b16 %v136, %v135
  %v165 = vpack.c.b16 %v138, %v137
  %v166 = vpack.c.b16 %v140, %v139
  %v167 = vpack.c.b16 %v142, %v141
  %v168 = vpack.c.b16 %v144, %v143
  %v169 = vpack.c.b16 %v146, %v145
  %v170 = vpack.c.b16 %v148, %v147
  %v171 = vpack.c.b16 %v150, %v149
  %v172 = vpack.c.b16 %v152, %v151
  %v173 = vpack.c.b16 %v154, %v153
  %v174 = vpack.c.b16 %v156, %v155
  %v175 = vpack.c.b16 %v158, %v157
  %v176 = vpack.c.b16 %v160, %v159
  %193 = vmatpush.bf16.msra.mxu0 %v168
  %194 = vmatpush.bf16.msra.mxu0 %v167
  %195 = vmatpush.bf16.msra.mxu0 %v166
  %196 = vmatpush.bf16.msra.mxu0 %v165
  %197 = vmatpush.bf16.msra.mxu0 %v164
  %198 = vmatpush.bf16.msra.mxu0 %v163
  %199 = vmatpush.bf16.msra.mxu0 %v162
  %200 = vmatpush.bf16.msra.mxu0 %v161
  %201 = vmatmul.bf16.gmra.mxu0 %v81
  %v202 = vpop.f32.mrf.mxu0
  %v203 = vadd.f32 0.0, %v202
  %v204 = vpop.f32.mrf.mxu0
  %v205 = vadd.f32 0.0, %v204
  %206 = vmatmul.bf16.gmra.mxu0 %v83
  %v207 = vpop.f32.mrf.mxu0
  %v208 = vadd.f32 0.0, %v207
  %v209 = vpop.f32.mrf.mxu0
  %v210 = vadd.f32 0.0, %v209
  %211 = vmatmul.bf16.gmra.mxu0 %v85
  %v212 = vpop.f32.mrf.mxu0
  %v213 = vadd.f32 0.0, %v212
  %v214 = vpop.f32.mrf.mxu0
  %v215 = vadd.f32 0.0, %v214
  %216 = vmatmul.bf16.gmra.mxu0 %v87
  %v217 = vpop.f32.mrf.mxu0
  %v218 = vadd.f32 0.0, %v217
  %v219 = vpop.f32.mrf.mxu0
  %v220 = vadd.f32 0.0, %v219
  %221 = vdwg.mxu0
  %222 = vmatpush.bf16.msra.mxu0 %v176
  %223 = vmatpush.bf16.msra.mxu0 %v175
  %224 = vmatpush.bf16.msra.mxu0 %v174
  %225 = vmatpush.bf16.msra.mxu0 %v173
  %226 = vmatpush.bf16.msra.mxu0 %v172
  %227 = vmatpush.bf16.msra.mxu0 %v171
  %228 = vmatpush.bf16.msra.mxu0 %v170
  %229 = vmatpush.bf16.msra.mxu0 %v169
  %230 = vmatmul.bf16.gmra.mxu0 %v82
  %v231 = vpop.f32.mrf.mxu0
  %v232 = vadd.f32 %v203, %v231
  %v233 = vpop.f32.mrf.mxu0
  %v234 = vadd.f32 %v205, %v233
  %235 = vmatmul.bf16.gmra.mxu0 %v84
  %v236 = vpop.f32.mrf.mxu0
  %v237 = vadd.f32 %v208, %v236
  %v238 = vpop.f32.mrf.mxu0
  %v239 = vadd.f32 %v210, %v238
  %240 = vmatmul.bf16.gmra.mxu0 %v86
  %v241 = vpop.f32.mrf.mxu0
  %v242 = vadd.f32 %v213, %v241
  %v243 = vpop.f32.mrf.mxu0
  %v244 = vadd.f32 %v215, %v243
  %245 = vmatmul.bf16.gmra.mxu0 %v88
  %v246 = vpop.f32.mrf.mxu0
  %v247 = vadd.f32 %v218, %v246
  %v248 = vpop.f32.mrf.mxu0
  %v249 = vadd.f32 %v220, %v248
  %250 = vdwg.mxu0
  %v251 = vld [vmem:[%s2] sm:$0x1]
  %v253 = vperm.slane %v251, 0
  %v255 = vmul.f32 %v232, %v253
  %v256 = vmul.f32 %v234, %v253
  %v257 = vmul.f32 %v237, %v253
  %v258 = vmul.f32 %v239, %v253
  %v259 = vmul.f32 %v242, %v253
  %v260 = vmul.f32 %v244, %v253
  %v261 = vmul.f32 %v247, %v253
  %v262 = vmul.f32 %v249, %v253
  %v263 = vld [vmem:[%s3] sm:$0x1]
  %v265 = vperm.slane %v263, 0
  %v267 = vadd.f32 %v255, %v265
  %v268 = vadd.f32 %v256, %v265
  %v269 = vadd.f32 %v257, %v265
  %v270 = vadd.f32 %v258, %v265
  %v271 = vadd.f32 %v259, %v265
  %v272 = vadd.f32 %v260, %v265
  %v273 = vadd.f32 %v261, %v265
  %v274 = vadd.f32 %v262, %v265
  %vm275 = vcmp.gt.f32.partialorder %v267, 0.0
  %vm276 = vcmp.gt.f32.partialorder %v268, 0.0
  %vm277 = vcmp.gt.f32.partialorder %v269, 0.0
  %vm278 = vcmp.gt.f32.partialorder %v270, 0.0
  %vm279 = vcmp.gt.f32.partialorder %v271, 0.0
  %vm280 = vcmp.gt.f32.partialorder %v272, 0.0
  %vm281 = vcmp.gt.f32.partialorder %v273, 0.0
  %vm282 = vcmp.gt.f32.partialorder %v274, 0.0
  %v283 = vmin.f32 %v267, 0.0
  %v284 = vmin.f32 %v268, 0.0
  %v285 = vmin.f32 %v269, 0.0
  %v286 = vmin.f32 %v270, 0.0
  %v287 = vmin.f32 %v271, 0.0
  %v288 = vmin.f32 %v272, 0.0
  %v289 = vmin.f32 %v273, 0.0
  %v290 = vmin.f32 %v274, 0.0
  %v291 = vmul.f32 %v283, 1.442695
  %v292 = vpow.pop %v291
  %v293 = vmul.f32 %v284, 1.442695
  %v294 = vpow.pop %v293
  %v295 = vmul.f32 %v285, 1.442695
  %v296 = vpow.pop %v295
  %v297 = vmul.f32 %v286, 1.442695
  %v298 = vpow.pop %v297
  %v299 = vmul.f32 %v287, 1.442695
  %v300 = vpow.pop %v299
  %v301 = vmul.f32 %v288, 1.442695
  %v302 = vpow.pop %v301
  %v303 = vmul.f32 %v289, 1.442695
  %v304 = vpow.pop %v303
  %v305 = vmul.f32 %v290, 1.442695
  %v306 = vpow.pop %v305
  %v307 = vsub.f32 %v292, 1.0
  %v308 = vsub.f32 %v294, 1.0
  %v309 = vsub.f32 %v296, 1.0
  %v310 = vsub.f32 %v298, 1.0
  %v311 = vsub.f32 %v300, 1.0
  %v312 = vsub.f32 %v302, 1.0
  %v313 = vsub.f32 %v304, 1.0
  %v314 = vsub.f32 %v306, 1.0
  %v315 = vsel %vm275, %v267, %v307
  %v316 = vsel %vm276, %v268, %v308
  %v317 = vsel %vm277, %v269, %v309
  %v318 = vsel %vm278, %v270, %v310
  %v319 = vsel %vm279, %v271, %v311
  %v320 = vsel %vm280, %v272, %v312
  %v321 = vsel %vm281, %v273, %v313
  %v322 = vsel %vm282, %v274, %v314
  %v323 = vlaneseq
  %v324 = vshrl.u32 %v323, 7
  %v325 = vlaneseq
  %v326 = vand.u32 %v325, 127
  %v327 = vmul.u32 %v324, 8
  %vm328 = vcmp.ge.s32.totalorder %v326, %v327
  %v329 = vadd.s32 %v324, 1
  %v330 = vmul.u32 %v329, 8
  %vm331 = vcmp.lt.s32.totalorder %v326, %v330
  %vm332 = vmand %vm328, %vm331
  %v333 = vsel %vm332, 0.125, 0.0
  %vm334 = vcmask 523264
  %v336 = vsel %vm334, %v333, 0
  %338 = vmatpush.msra.mxu0 0.0
  %339 = vmatpush.msra.mxu0 0.0
  %340 = vmatpush.msra.mxu0 0.0
  %341 = vmatpush.msra.mxu0 0.0
  %342 = vmatpush.msra.mxu0 0.0
  %343 = vmatpush.msra.mxu0 0.0
  %344 = vmatpush.msra.mxu0 0.0
  %345 = vmatpush.msra.mxu0 0.0
  %346 = vmatpush.msra.mxu0 %v322
  %347 = vmatpush.msra.mxu0 %v321
  %348 = vmatpush.msra.mxu0 %v320
  %349 = vmatpush.msra.mxu0 %v319
  %350 = vmatpush.msra.mxu0 %v318
  %351 = vmatpush.msra.mxu0 %v317
  %352 = vmatpush.msra.mxu0 %v316
  %353 = vmatpush.msra.mxu0 %v315
  %354 = vmatmul.f32.gmra.mxu0 %v336
  %v355 = vpop.f32.mrf.mxu0
  %v356 = vadd.f32 0.0, %v355
  %357 = vdwg.mxu0
  %vm358 = vcmask 130048
  %359 = vst.msk [vmem:[%s4] sm:$0xff] %vm358, %v356
  // Predicated region
  $region18: #{p5_forward.3} parent=0 // pred_check
    _
  $region19: #{p5_forward.3} parent=0 // pred_check_branch
    %361 = sbr.rel (0) target = $region21
  $region20: #{p5_forward.3} parent=0 // pred_region
    _
  $region21: #{p5_forward.3} parent=0 // pred_fallthru
    _
  // Predicated region
  $region22: #{p5_forward.3} parent=0 // pred_check
    _
  $region23: #{p5_forward.3} parent=0 // pred_check_branch
    %363 = sbr.rel (0) target = $region25
  $region24: #{p5_forward.3} parent=0 // pred_region
    _
  $region25: #{p5_forward.3} parent=0 // pred_fallthru
    _

</llo_original>
